<compile_context>
chip_gen: v5e
topology: v5e:2x2
jax: 0.10.0
libtpu: 0.0.40
codegen_flags: <defaults>
</compile_context>

<pallas_src>
import jax
import jax.numpy as jnp
from jax import lax
from jax.experimental import pallas as pl
from jax.experimental.pallas import tpu as pltpu

BN_EPS = 1e-5
LANE = 128


def _round_up(v, k):
    return ((v + k - 1) // k) * k


def _vmem_limit_bytes():
    """Generation-aware scoped-VMEM limit with headroom (96 MiB on 128-MiB
    chips, 48 MiB on v7x's 64 MiB)."""
    cap = 128 * 1024 * 1024
    try:
        info = pltpu.get_tpu_info()
        cap = int(getattr(info, "vmem_capacity_bytes", cap))
    except Exception:
        pass
    return int(min(cap * 3 // 4, 100 * 1024 * 1024))


def _pick_row_tile(h, w, wp, cpad, budget):
    """Largest divisor th of h (with th*w a multiple of 8 for non-full tiles)
    whose kernel-1 working set fits `budget`; smallest valid divisor otherwise."""
    divs = sorted({t for t in range(1, h) if h % t == 0 and (t * w) % 8 == 0} | {h})
    for th in sorted(divs, reverse=True):
        x_win = 2 * (th + 2) * wp * cpad * 2      # bf16 window, double-buffered
        conv_b = 2 * th * w * cpad * 4            # f32 conv block, double-buffered
        slab = (th + 2) * w * 3 * cpad * 2        # bf16 dx-packed slab (temp)
        wts = 2 * 9 * cpad * cpad * 2             # bf16 weights
        if x_win + conv_b + slab + wts <= budget:
            return th
    return divs[0]


# ---------------------------------------------------------------------------
# Kernel 1: 3x3 conv on one (sample, row-tile) block as three K=3*Cpad bf16
# MXU matmuls accumulated directly into the output tile, plus per-block
# per-channel sum and centered sum-of-squares for BatchNorm.
# Grid: (N, H//th), both "parallel".
# ---------------------------------------------------------------------------
def conv_stats_kernel(xp_ref, w3_ref, conv_ref, sum_ref, m2_ref):
    _, hwin, wp, cpad = xp_ref.shape
    th = hwin - 2
    w = wp - 2
    k3 = 3 * cpad
    rows = th * w

    # Pack the three dx-shifted views along lanes once (one packed relayout),
    # reused across the three dy values below.
    slab = jnp.concatenate(
        [xp_ref[0, :, 0:w, :], xp_ref[0, :, 1:1 + w, :], xp_ref[0, :, 2:2 + w, :]],
        axis=-1)                                             # (th+2, w, 3*cpad) bf16

    # dy = 0 writes the output tile directly (no zero-init, no acc scratch);
    # dy = 1, 2 accumulate into it.  bf16 x bf16 -> f32 on the MXU.
    conv_ref[0] = jnp.dot(slab[0:th].reshape(rows, k3), w3_ref[0],
                          preferred_element_type=jnp.float32)
    conv_ref[0] += jnp.dot(slab[1:1 + th].reshape(rows, k3), w3_ref[1],
                           preferred_element_type=jnp.float32)
    conv_ref[0] += jnp.dot(slab[2:2 + th].reshape(rows, k3), w3_ref[2],
                           preferred_element_type=jnp.float32)

    # Per-block centered statistics (combined across blocks in the wrapper
    # with Chan's parallel-variance formula -> no catastrophic cancellation).
    conv = conv_ref[0]                                       # (rows, cpad) f32
    s = jnp.sum(conv, axis=0, keepdims=True)                 # (1, cpad)
    mu = s * (1.0 / rows)
    d = conv - mu
    sum_ref[0, 0] = s
    m2_ref[0, 0] = jnp.sum(d * d, axis=0, keepdims=True)


# ---------------------------------------------------------------------------
# Kernel 2: fused BN affine + residual add + ReLU, row-tiled over M = N*H*W.
# Lane-dense (last dim = Cpad), pure HBM-bandwidth-bound epilogue.
# ---------------------------------------------------------------------------
def bn_residual_relu_kernel(conv_ref, res_ref, scale_ref, shift_ref, out_ref):
    out_ref[...] = jnp.maximum(
        conv_ref[...] * scale_ref[...] + shift_ref[...] + res_ref[...], 0.0)


def resblock_forward(x, conv2_w, gamma, beta):
    """x: (N, C, H, W) f32.  conv2_w: (C, C, 3, 3).  gamma/beta: (C,)."""
    n, c, h, w = x.shape
    m = n * h * w
    cpad = _round_up(c, LANE)
    hp, wp = h + 2, w + 2

    vmem_limit = _vmem_limit_bytes()

    # ---- layout glue (module boundary only) ---------------------------------
    x_nhwc = jnp.transpose(x, (0, 2, 3, 1))                          # (N,H,W,C)
    # one pad: 1-pixel spatial halo + channel pad to 128 lanes, cast to bf16
    x_sp = jnp.pad(x_nhwc, ((0, 0), (1, 1), (1, 1), (0, cpad - c))
                   ).astype(jnp.bfloat16)                            # (N,Hp,Wp,Cpad)
    # residual stays f32 (exact residual add), channel-padded, flattened
    resid = jnp.pad(x_nhwc, ((0, 0), (0, 0), (0, 0), (0, cpad - c))
                    ).reshape(m, cpad)

    # conv2 weights -> (3, 3*Cpad, Cpad) bf16 with layout [ky, kx*Cpad + ci, co]
    w3 = jnp.transpose(conv2_w, (2, 3, 1, 0))                        # (ky,kx,ci,co)
    w3 = jnp.pad(w3, ((0, 0), (0, 0), (0, cpad - c), (0, cpad - c)))
    w3 = w3.reshape(3, 3 * cpad, cpad).astype(jnp.bfloat16)

    # ---- pass 1: conv + per-block BN partials (row-tiled over H) ------------
    th = _pick_row_tile(h, w, wp, cpad, int(vmem_limit * 0.6))
    n_h_tiles = h // th
    rows = th * w

    if n_h_tiles == 1:
        x_spec = pl.BlockSpec((1, hp, wp, cpad), lambda ni, hi: (ni, 0, 0, 0))
    else:
        # overlapping (th+2)-row windows (2-row halo) via element indexing
        x_spec = pl.BlockSpec((1, pl.Element(th + 2), wp, cpad),
                              lambda ni, hi: (ni, hi * th, 0, 0))

    conv_out, psum, pm2 = pl.pallas_call(
        conv_stats_kernel,
        out_shape=(jax.ShapeDtypeStruct((n, h * w, cpad), jnp.float32),
                   jax.ShapeDtypeStruct((n, n_h_tiles, 1, cpad), jnp.float32),
                   jax.ShapeDtypeStruct((n, n_h_tiles, 1, cpad), jnp.float32)),
        grid=(n, n_h_tiles),
        in_specs=[x_spec,
                  pl.BlockSpec((3, 3 * cpad, cpad), lambda ni, hi: (0, 0, 0))],
        out_specs=(pl.BlockSpec((1, rows, cpad), lambda ni, hi: (ni, hi, 0)),
                   pl.BlockSpec((1, 1, 1, cpad), lambda ni, hi: (ni, hi, 0, 0)),
                   pl.BlockSpec((1, 1, 1, cpad), lambda ni, hi: (ni, hi, 0, 0))),
        compiler_params=pltpu.CompilerParams(
            dimension_semantics=("parallel", "parallel"),
            vmem_limit_bytes=vmem_limit),
    )(x_sp, w3)

    # ---- tiny O(blocks*C) per-channel math: Chan combine -> scale/shift -----
    nb = float(rows)
    psum2 = psum.reshape(n * n_h_tiles, cpad)
    pm22 = pm2.reshape(n * n_h_tiles, cpad)
    mean = jnp.sum(psum2, axis=0) / m                                 # (cpad,)
    mu_b = psum2 / nb
    m2 = jnp.sum(pm22, axis=0) + nb * jnp.sum((mu_b - mean[None, :]) ** 2, axis=0)
    var = jnp.maximum(m2 / m, 0.0)

    gamma_p = jnp.pad(gamma, (0, cpad - c))
    beta_p = jnp.pad(beta, (0, cpad - c))
    inv = lax.rsqrt(var + BN_EPS)
    scale = (gamma_p * inv).reshape(1, cpad)
    shift = (beta_p - mean * gamma_p * inv).reshape(1, cpad)

    # ---- pass 2: BN affine + residual + ReLU, tiled over M -------------------
    conv_flat = conv_out.reshape(m, cpad)
    tm_cap = max(256, min(2048, _round_up((1 << 20) // (cpad * 4), 8)))  # ~1 MiB blocks
    tm = tm_cap if m >= tm_cap else _round_up(m, 8)
    m_pad = _round_up(m, tm)
    if m_pad != m:
        conv_flat = jnp.pad(conv_flat, ((0, m_pad - m), (0, 0)))
        resid = jnp.pad(resid, ((0, m_pad - m), (0, 0)))

    out_flat = pl.pallas_call(
        bn_residual_relu_kernel,
        out_shape=jax.ShapeDtypeStruct((m_pad, cpad), jnp.float32),
        grid=(m_pad // tm,),
        in_specs=[pl.BlockSpec((tm, cpad), lambda i: (i, 0)),
                  pl.BlockSpec((tm, cpad), lambda i: (i, 0)),
                  pl.BlockSpec((1, cpad), lambda i: (0, 0)),
                  pl.BlockSpec((1, cpad), lambda i: (0, 0))],
        out_specs=pl.BlockSpec((tm, cpad), lambda i: (i, 0)),
        compiler_params=pltpu.CompilerParams(
            dimension_semantics=("parallel",),
            vmem_limit_bytes=vmem_limit),
    )(conv_flat, resid, scale, shift)

    out = out_flat[:m].reshape(n, h, w, cpad)[..., :c]
    return jnp.transpose(out, (0, 3, 1, 2))                          # back to NCHW


# ---------------------------------------------------------------------------
# Pure-JAX reference of the PyTorch forward (used path).  conv_dtype controls
# input quantization of the conv operands (f32 or bf16) for tolerance checks.
# ---------------------------------------------------------------------------
def resblock_reference(x, conv2_w, gamma, beta, conv_dtype=jnp.float32):
    xq = x.astype(conv_dtype).astype(jnp.float32)
    wq = conv2_w.astype(conv_dtype).astype(jnp.float32)
    conv = lax.conv_general_dilated(
        xq, wq, window_strides=(1, 1), padding=((1, 1), (1, 1)),
        dimension_numbers=("NCHW", "OIHW", "NCHW"),
        precision=lax.Precision.HIGHEST)
    mean = jnp.mean(conv, axis=(0, 2, 3), keepdims=True)
    var = jnp.mean((conv - mean) ** 2, axis=(0, 2, 3), keepdims=True)
    bn = (conv - mean) * (gamma.reshape(1, -1, 1, 1) * lax.rsqrt(var + BN_EPS)) \
        + beta.reshape(1, -1, 1, 1)
    return jnp.maximum(bn + x, 0.0)


if __name__ == "__main__":
    key = jax.random.PRNGKey(0)
    n_chans = 4
    N, H, W = 2, 16, 16

    k_x, k_w1, k_w2 = jax.random.split(key, 3)

    # Parameter init mirroring the PyTorch module:
    # kaiming_normal_(nonlinearity='relu') -> std = sqrt(2 / fan_in)
    fan_in = n_chans * 3 * 3
    std = (2.0 / fan_in) ** 0.5
    conv1_w = jax.random.normal(k_w1, (n_chans, n_chans, 3, 3), jnp.float32) * std
    conv2_w = jax.random.normal(k_w2, (n_chans, n_chans, 3, 3), jnp.float32) * std
    gamma = jnp.full((n_chans,), 0.5, jnp.float32)   # batch_norm2.weight
    beta = jnp.zeros((n_chans,), jnp.float32)        # batch_norm2.bias
    # conv1_w / batch_norm(1) params are dead in the module's forward.

    x = jax.random.normal(k_x, (N, n_chans, H, W), jnp.float32)

    fwd = jax.jit(resblock_forward)
    out = jax.block_until_ready(fwd(x, conv2_w, gamma, beta))
    assert out.shape == (N, n_chans, H, W)

    # Tight check: reference with the same bf16 quantization of the MXU operands.
    ref_bf16 = resblock_reference(x, conv2_w, gamma, beta, conv_dtype=jnp.bfloat16)
    err_tight = float(jnp.max(jnp.abs(out - ref_bf16)))
    assert err_tight < 2e-3, f"mismatch vs bf16-operand reference: {err_tight}"

    # Loose check: full-f32 reference (bf16 MXU operands add a small error).
    ref_f32 = resblock_reference(x, conv2_w, gamma, beta)
    err_loose = float(jnp.max(jnp.abs(out - ref_f32)))
    assert err_loose < 2e-2, f"mismatch vs f32 reference: {err_loose}"

    print("KERNEL_OK")
</pallas_src>

<mosaic_0001>
module attributes {stable_mosaic.version = 11 : i64} {
  func.func @conv_stats_kernel(%arg0: i32, %arg1: i32, %arg2: memref<1x18x18x128xbf16, #tpu.memory_space<vmem>>, %arg3: memref<3x384x128xbf16, #tpu.memory_space<vmem>>, %arg4: memref<1x256x128xf32, #tpu.memory_space<vmem>>, %arg5: memref<1x1x1x128xf32, #tpu.memory_space<vmem>>, %arg6: memref<1x1x1x128xf32, #tpu.memory_space<vmem>>) attributes {dimension_semantics = [#tpu.dimension_semantics<parallel>, #tpu.dimension_semantics<parallel>], iteration_bounds = array<i64: 2, 1>, scalar_prefetch = 0 : i64, scratch_operands = 0 : i64, tpu.core_type = #tpu.core_type<tc>, window_params = [{transform_indices = @transform_0, window_bounds = array<i64: 1, 18, 18, 128>}, {pipeline_mode = #tpu.pipeline_mode<synchronous>, transform_indices = @transform_1, window_bounds = array<i64: 3, 384, 128>}, {transform_indices = @transform_2, window_bounds = array<i64: 1, 256, 128>}, {transform_indices = @transform_3, window_bounds = array<i64: 1, 1, 1, 128>}, {transform_indices = @transform_4, window_bounds = array<i64: 1, 1, 1, 128>}]} {
    %c0 = arith.constant 0 : index
    %c0_0 = arith.constant 0 : index
    %c0_1 = arith.constant 0 : index
    %c0_2 = arith.constant 0 : index
    %0 = vector.load %arg2[%c0, %c0_0, %c0_1, %c0_2] : memref<1x18x18x128xbf16, #tpu.memory_space<vmem>>, vector<1x18x16x128xbf16>
    %1 = vector.shape_cast %0 : vector<1x18x16x128xbf16> to vector<18x16x128xbf16>
    %c0_3 = arith.constant 0 : index
    %c0_4 = arith.constant 0 : index
    %c1 = arith.constant 1 : index
    %c0_5 = arith.constant 0 : index
    %2 = vector.load %arg2[%c0_3, %c0_4, %c1, %c0_5] : memref<1x18x18x128xbf16, #tpu.memory_space<vmem>>, vector<1x18x16x128xbf16>
    %3 = vector.shape_cast %2 : vector<1x18x16x128xbf16> to vector<18x16x128xbf16>
    %c0_6 = arith.constant 0 : index
    %c0_7 = arith.constant 0 : index
    %c2 = arith.constant 2 : index
    %c0_8 = arith.constant 0 : index
    %4 = vector.load %arg2[%c0_6, %c0_7, %c2, %c0_8] : memref<1x18x18x128xbf16, #tpu.memory_space<vmem>>, vector<1x18x16x128xbf16>
    %5 = vector.shape_cast %4 : vector<1x18x16x128xbf16> to vector<18x16x128xbf16>
    %6 = tpu.concatenate %1, %3, %5 in 2 : vector<18x16x128xbf16>, vector<18x16x128xbf16>, vector<18x16x128xbf16> -> vector<18x16x384xbf16>
    %7 = vector.extract_strided_slice %6 {offsets = [0, 0, 0], sizes = [16, 16, 384], strides = [1, 1, 1]} : vector<18x16x384xbf16> to vector<16x16x384xbf16>
    %8 = vector.shape_cast %7 : vector<16x16x384xbf16> to vector<256x384xbf16>
    %c0_9 = arith.constant 0 : index
    %c0_10 = arith.constant 0 : index
    %c0_11 = arith.constant 0 : index
    %9 = vector.load %arg3[%c0_9, %c0_10, %c0_11] : memref<3x384x128xbf16, #tpu.memory_space<vmem>>, vector<1x384x128xbf16>
    %10 = vector.shape_cast %9 : vector<1x384x128xbf16> to vector<384x128xbf16>
    %cst = arith.constant dense<0.000000e+00> : vector<256x128xf32>
    %11 = tpu.matmul %8, %10, %cst {dimension_numbers = #tpu.dot_dimension_numbers<[1], [0], [0], [1], [0, 0, 1, 1], [], []>} : vector<256x384xbf16>, vector<384x128xbf16>, vector<256x128xf32> -> vector<256x128xf32>
    %c0_12 = arith.constant 0 : index
    %c0_13 = arith.constant 0 : index
    %c0_14 = arith.constant 0 : index
    %12 = vector.load %arg4[%c0_12, %c0_13, %c0_14] : memref<1x256x128xf32, #tpu.memory_space<vmem>>, vector<1x256x128xf32>
    %13 = vector.shape_cast %12 : vector<1x256x128xf32> to vector<256x128xf32>
    %14 = vector.shape_cast %11 : vector<256x128xf32> to vector<1x256x128xf32>
    tpu.vector_store %arg4[%c0_12, %c0_13, %c0_14], %14 {strides = array<i32>} : memref<1x256x128xf32, #tpu.memory_space<vmem>>, vector<1x256x128xf32>,
    %c0_15 = arith.constant 0 : index
    %c0_16 = arith.constant 0 : index
    %c0_17 = arith.constant 0 : index
    %15 = vector.load %arg4[%c0_15, %c0_16, %c0_17] : memref<1x256x128xf32, #tpu.memory_space<vmem>>, vector<1x256x128xf32>
    %16 = vector.shape_cast %15 : vector<1x256x128xf32> to vector<256x128xf32>
    %17 = vector.extract_strided_slice %6 {offsets = [1, 0, 0], sizes = [16, 16, 384], strides = [1, 1, 1]} : vector<18x16x384xbf16> to vector<16x16x384xbf16>
    %18 = vector.shape_cast %17 : vector<16x16x384xbf16> to vector<256x384xbf16>
    %c1_18 = arith.constant 1 : index
    %c0_19 = arith.constant 0 : index
    %c0_20 = arith.constant 0 : index
    %19 = vector.load %arg3[%c1_18, %c0_19, %c0_20] : memref<3x384x128xbf16, #tpu.memory_space<vmem>>, vector<1x384x128xbf16>
    %20 = vector.shape_cast %19 : vector<1x384x128xbf16> to vector<384x128xbf16>
    %cst_21 = arith.constant dense<0.000000e+00> : vector<256x128xf32>
    %21 = tpu.matmul %18, %20, %cst_21 {dimension_numbers = #tpu.dot_dimension_numbers<[1], [0], [0], [1], [0, 0, 1, 1], [], []>} : vector<256x384xbf16>, vector<384x128xbf16>, vector<256x128xf32> -> vector<256x128xf32>
    %22 = arith.addf %16, %21 : vector<256x128xf32>
    %c0_22 = arith.constant 0 : index
    %c0_23 = arith.constant 0 : index
    %c0_24 = arith.constant 0 : index
    %23 = vector.load %arg4[%c0_22, %c0_23, %c0_24] : memref<1x256x128xf32, #tpu.memory_space<vmem>>, vector<1x256x128xf32>
    %24 = vector.shape_cast %23 : vector<1x256x128xf32> to vector<256x128xf32>
    %25 = vector.shape_cast %22 : vector<256x128xf32> to vector<1x256x128xf32>
    tpu.vector_store %arg4[%c0_22, %c0_23, %c0_24], %25 {strides = array<i32>} : memref<1x256x128xf32, #tpu.memory_space<vmem>>, vector<1x256x128xf32>,
    %c0_25 = arith.constant 0 : index
    %c0_26 = arith.constant 0 : index
    %c0_27 = arith.constant 0 : index
    %26 = vector.load %arg4[%c0_25, %c0_26, %c0_27] : memref<1x256x128xf32, #tpu.memory_space<vmem>>, vector<1x256x128xf32>
    %27 = vector.shape_cast %26 : vector<1x256x128xf32> to vector<256x128xf32>
    %28 = vector.extract_strided_slice %6 {offsets = [2, 0, 0], sizes = [16, 16, 384], strides = [1, 1, 1]} : vector<18x16x384xbf16> to vector<16x16x384xbf16>
    %29 = vector.shape_cast %28 : vector<16x16x384xbf16> to vector<256x384xbf16>
    %c2_28 = arith.constant 2 : index
    %c0_29 = arith.constant 0 : index
    %c0_30 = arith.constant 0 : index
    %30 = vector.load %arg3[%c2_28, %c0_29, %c0_30] : memref<3x384x128xbf16, #tpu.memory_space<vmem>>, vector<1x384x128xbf16>
    %31 = vector.shape_cast %30 : vector<1x384x128xbf16> to vector<384x128xbf16>
    %cst_31 = arith.constant dense<0.000000e+00> : vector<256x128xf32>
    %32 = tpu.matmul %29, %31, %cst_31 {dimension_numbers = #tpu.dot_dimension_numbers<[1], [0], [0], [1], [0, 0, 1, 1], [], []>} : vector<256x384xbf16>, vector<384x128xbf16>, vector<256x128xf32> -> vector<256x128xf32>
    %33 = arith.addf %27, %32 : vector<256x128xf32>
    %c0_32 = arith.constant 0 : index
    %c0_33 = arith.constant 0 : index
    %c0_34 = arith.constant 0 : index
    %34 = vector.load %arg4[%c0_32, %c0_33, %c0_34] : memref<1x256x128xf32, #tpu.memory_space<vmem>>, vector<1x256x128xf32>
    %35 = vector.shape_cast %34 : vector<1x256x128xf32> to vector<256x128xf32>
    %36 = vector.shape_cast %33 : vector<256x128xf32> to vector<1x256x128xf32>
    tpu.vector_store %arg4[%c0_32, %c0_33, %c0_34], %36 {strides = array<i32>} : memref<1x256x128xf32, #tpu.memory_space<vmem>>, vector<1x256x128xf32>,
    %c0_35 = arith.constant 0 : index
    %c0_36 = arith.constant 0 : index
    %c0_37 = arith.constant 0 : index
    %37 = vector.load %arg4[%c0_35, %c0_36, %c0_37] : memref<1x256x128xf32, #tpu.memory_space<vmem>>, vector<1x256x128xf32>
    %38 = vector.shape_cast %37 : vector<1x256x128xf32> to vector<256x128xf32>
    %cst_38 = arith.constant dense<0.000000e+00> : vector<128xf32>
    %39 = vector.multi_reduction <add>, %38, %cst_38 [0] : vector<256x128xf32> to vector<128xf32>
    %40 = vector.shape_cast %39 : vector<128xf32> to vector<1x128xf32>
    %cst_39 = arith.constant 3.906250e-03 : f32
    %41 = vector.broadcast %cst_39 : f32 to vector<1x128xf32>
    %42 = arith.mulf %40, %41 : vector<1x128xf32>
    %43 = vector.broadcast %42 : vector<1x128xf32> to vector<256x128xf32>
    %44 = arith.subf %38, %43 : vector<256x128xf32>
    %c0_40 = arith.constant 0 : index
    %c0_41 = arith.constant 0 : index
    %c0_42 = arith.constant 0 : index
    %c0_43 = arith.constant 0 : index
    %45 = vector.load %arg5[%c0_40, %c0_41, %c0_42, %c0_43] : memref<1x1x1x128xf32, #tpu.memory_space<vmem>>, vector<1x1x1x128xf32>
    %46 = vector.shape_cast %45 : vector<1x1x1x128xf32> to vector<1x128xf32>
    %47 = vector.shape_cast %40 : vector<1x128xf32> to vector<1x1x1x128xf32>
    tpu.vector_store %arg5[%c0_40, %c0_41, %c0_42, %c0_43], %47 {strides = array<i32>} : memref<1x1x1x128xf32, #tpu.memory_space<vmem>>, vector<1x1x1x128xf32>,
    %48 = arith.mulf %44, %44 : vector<256x128xf32>
    %cst_44 = arith.constant dense<0.000000e+00> : vector<128xf32>
    %49 = vector.multi_reduction <add>, %48, %cst_44 [0] : vector<256x128xf32> to vector<128xf32>
    %50 = vector.shape_cast %49 : vector<128xf32> to vector<1x128xf32>
    %c0_45 = arith.constant 0 : index
    %c0_46 = arith.constant 0 : index
    %c0_47 = arith.constant 0 : index
    %c0_48 = arith.constant 0 : index
    %51 = vector.load %arg6[%c0_45, %c0_46, %c0_47, %c0_48] : memref<1x1x1x128xf32, #tpu.memory_space<vmem>>, vector<1x1x1x128xf32>
    %52 = vector.shape_cast %51 : vector<1x1x1x128xf32> to vector<1x128xf32>
    %53 = vector.shape_cast %50 : vector<1x128xf32> to vector<1x1x1x128xf32>
    tpu.vector_store %arg6[%c0_45, %c0_46, %c0_47, %c0_48], %53 {strides = array<i32>} : memref<1x1x1x128xf32, #tpu.memory_space<vmem>>, vector<1x1x1x128xf32>,
    return
  }
  func.func @transform_0(%arg0: i32, %arg1: i32) -> (i32, i32, i32, i32) {
    %c0_i32 = arith.constant 0 : i32
    %c0_i32_0 = arith.constant 0 : i32
    %c0_i32_1 = arith.constant 0 : i32
    %c0_i32_2 = arith.constant 0 : i32
    return %arg0, %c0_i32, %c0_i32_0, %c0_i32_1 : i32, i32, i32, i32
  }
  func.func @transform_1(%arg0: i32, %arg1: i32) -> (i32, i32, i32) {
    %c0_i32 = arith.constant 0 : i32
    %c0_i32_0 = arith.constant 0 : i32
    %c0_i32_1 = arith.constant 0 : i32
    %c0_i32_2 = arith.constant 0 : i32
    return %c0_i32, %c0_i32_0, %c0_i32_1 : i32, i32, i32
  }
  func.func @transform_2(%arg0: i32, %arg1: i32) -> (i32, i32, i32) {
    %c0_i32 = arith.constant 0 : i32
    %c0_i32_0 = arith.constant 0 : i32
    return %arg0, %arg1, %c0_i32 : i32, i32, i32
  }
  func.func @transform_3(%arg0: i32, %arg1: i32) -> (i32, i32, i32, i32) {
    %c0_i32 = arith.constant 0 : i32
    %c0_i32_0 = arith.constant 0 : i32
    %c0_i32_1 = arith.constant 0 : i32
    return %arg0, %arg1, %c0_i32, %c0_i32_0 : i32, i32, i32, i32
  }
  func.func @transform_4(%arg0: i32, %arg1: i32) -> (i32, i32, i32, i32) {
    %c0_i32 = arith.constant 0 : i32
    %c0_i32_0 = arith.constant 0 : i32
    %c0_i32_1 = arith.constant 0 : i32
    return %arg0, %arg1, %c0_i32, %c0_i32_0 : i32, i32, i32, i32
  }
}

module attributes {stable_mosaic.version = 11 : i64} {
  func.func @bn_residual_relu_kernel(%arg0: i32, %arg1: memref<512x128xf32, #tpu.memory_space<vmem>>, %arg2: memref<512x128xf32, #tpu.memory_space<vmem>>, %arg3: memref<1x128xf32, #tpu.memory_space<vmem>>, %arg4: memref<1x128xf32, #tpu.memory_space<vmem>>, %arg5: memref<512x128xf32, #tpu.memory_space<vmem>>) attributes {dimension_semantics = [#tpu.dimension_semantics<parallel>], iteration_bounds = array<i64: 1>, scalar_prefetch = 0 : i64, scratch_operands = 0 : i64, tpu.core_type = #tpu.core_type<tc>, window_params = [{transform_indices = @transform_0, window_bounds = array<i64: 512, 128>}, {transform_indices = @transform_1, window_bounds = array<i64: 512, 128>}, {pipeline_mode = #tpu.pipeline_mode<synchronous>, transform_indices = @transform_2, window_bounds = array<i64: 1, 128>}, {pipeline_mode = #tpu.pipeline_mode<synchronous>, transform_indices = @transform_3, window_bounds = array<i64: 1, 128>}, {transform_indices = @transform_4, window_bounds = array<i64: 512, 128>}]} {
    %c0 = arith.constant 0 : index
    %c0_0 = arith.constant 0 : index
    %0 = vector.load %arg1[%c0, %c0_0] : memref<512x128xf32, #tpu.memory_space<vmem>>, vector<512x128xf32>
    %c0_1 = arith.constant 0 : index
    %c0_2 = arith.constant 0 : index
    %1 = vector.load %arg3[%c0_1, %c0_2] : memref<1x128xf32, #tpu.memory_space<vmem>>, vector<1x128xf32>
    %2 = vector.broadcast %1 : vector<1x128xf32> to vector<512x128xf32>
    %3 = arith.mulf %0, %2 : vector<512x128xf32>
    %c0_3 = arith.constant 0 : index
    %c0_4 = arith.constant 0 : index
    %4 = vector.load %arg4[%c0_3, %c0_4] : memref<1x128xf32, #tpu.memory_space<vmem>>, vector<1x128xf32>
    %5 = vector.broadcast %4 : vector<1x128xf32> to vector<512x128xf32>
    %6 = arith.addf %3, %5 : vector<512x128xf32>
    %c0_5 = arith.constant 0 : index
    %c0_6 = arith.constant 0 : index
    %7 = vector.load %arg2[%c0_5, %c0_6] : memref<512x128xf32, #tpu.memory_space<vmem>>, vector<512x128xf32>
    %8 = arith.addf %6, %7 : vector<512x128xf32>
    %cst = arith.constant 0.000000e+00 : f32
    %9 = vector.broadcast %cst : f32 to vector<512x128xf32>
    %10 = arith.maximumf %8, %9 : vector<512x128xf32>
    %c0_7 = arith.constant 0 : index
    %c0_8 = arith.constant 0 : index
    %11 = vector.load %arg5[%c0_7, %c0_8] : memref<512x128xf32, #tpu.memory_space<vmem>>, vector<512x128xf32>
    tpu.vector_store %arg5[%c0_7, %c0_8], %10 {strides = array<i32>} : memref<512x128xf32, #tpu.memory_space<vmem>>, vector<512x128xf32>,
    return
  }
  func.func @transform_0(%arg0: i32) -> (i32, i32) {
    %c0_i32 = arith.constant 0 : i32
    %c0_i32_0 = arith.constant 0 : i32
    return %arg0, %c0_i32 : i32, i32
  }
  func.func @transform_1(%arg0: i32) -> (i32, i32) {
    %c0_i32 = arith.constant 0 : i32
    %c0_i32_0 = arith.constant 0 : i32
    return %arg0, %c0_i32 : i32, i32
  }
  func.func @transform_2(%arg0: i32) -> (i32, i32) {
    %c0_i32 = arith.constant 0 : i32
    %c0_i32_0 = arith.constant 0 : i32
    %c0_i32_1 = arith.constant 0 : i32
    return %c0_i32, %c0_i32_0 : i32, i32
  }
  func.func @transform_3(%arg0: i32) -> (i32, i32) {
    %c0_i32 = arith.constant 0 : i32
    %c0_i32_0 = arith.constant 0 : i32
    %c0_i32_1 = arith.constant 0 : i32
    return %c0_i32, %c0_i32_0 : i32, i32
  }
  func.func @transform_4(%arg0: i32) -> (i32, i32) {
    %c0_i32 = arith.constant 0 : i32
    %c0_i32_0 = arith.constant 0 : i32
    return %arg0, %c0_i32 : i32, i32
  }
}

</mosaic_0001>

<llo_original>
// kernel: resblock_forward.3
$region0: #{resblock_forward.3}
  #allocation0 [shape = 'u32[]', space=smem, size = 0x4, offset = 0x4, fixed_abs, tag = 'smem constant byte address 0x4 - core index']
  #allocation1 [shape = 'u32[72,128]{1,0:T(1,128)}', space=vmem, size = 0x9000, scoped, tag = 'internal scratch']
  %s0 = inlined_call_operand.vmem [shape: f32[512,128], index: 0, kind: input, shape index: {}]
  %s1 = inlined_call_operand.vmem [shape: f32[512,128], index: 1, kind: input, shape index: {}]
  %s2 = inlined_call_operand.vmem [shape: f32[1,128], index: 2, kind: input, shape index: {}]
  %s3 = inlined_call_operand.vmem [shape: f32[1,128], index: 3, kind: input, shape index: {}]
  %s4 = inlined_call_operand.vmem [shape: f32[512,128], index: 4, kind: output, shape index: {}]
  %s5 = sld [smem:[#allocation0]]
  $region26: #{resblock_forward.3} parent=0
    _
  %s7 = ssub.s32 1, %s5
  %s8 = scalar_select 0, %s7, %s5
  // Predicated region
  $region2: #{resblock_forward.3} parent=0 // pred_check
    _
  $region3: #{resblock_forward.3} parent=0 // pred_check_branch
    %10 = sbr.rel (0) target = $region5
  $region4: #{resblock_forward.3} parent=0 // pred_region
    _
  $region5: #{resblock_forward.3} parent=0 // pred_fallthru
    _
  // Predicated region
  $region6: #{resblock_forward.3} parent=0 // pred_check
    _
  $region7: #{resblock_forward.3} parent=0 // pred_check_branch
    %12 = sbr.rel (0) target = $region9
  $region8: #{resblock_forward.3} parent=0 // pred_region
    _
  $region9: #{resblock_forward.3} parent=0 // pred_fallthru
    _
  // Predicated region
  $region10: #{resblock_forward.3} parent=0 // pred_check
    _
  $region11: #{resblock_forward.3} parent=0 // pred_check_branch
    %14 = sbr.rel (0) target = $region13
  $region12: #{resblock_forward.3} parent=0 // pred_region
    _
  $region13: #{resblock_forward.3} parent=0 // pred_fallthru
    _
  // Predicated region
  $region14: #{resblock_forward.3} parent=0 // pred_check
    _
  $region15: #{resblock_forward.3} parent=0 // pred_check_branch
    %16 = sbr.rel (0) target = $region17
  $region16: #{resblock_forward.3} parent=0 // pred_region
    _
  $region17: #{resblock_forward.3} parent=0 // pred_fallthru
    _
  %v17 = vld [vmem:[%s0] sm:$0xff]
  %v18 = vld [vmem:[%s0 + $0x8] sm:$0xff]
  %v19 = vld [vmem:[%s0 + $0x10] sm:$0xff]
  %v20 = vld [vmem:[%s0 + $0x18] sm:$0xff]
  %v21 = vld [vmem:[%s0 + $0x20] sm:$0xff]
  %v22 = vld [vmem:[%s0 + $0x28] sm:$0xff]
  %v23 = vld [vmem:[%s0 + $0x30] sm:$0xff]
  %v24 = vld [vmem:[%s0 + $0x38] sm:$0xff]
  %v25 = vld [vmem:[%s0 + $0x40] sm:$0xff]
  %v26 = vld [vmem:[%s0 + $0x48] sm:$0xff]
  %v27 = vld [vmem:[%s0 + $0x50] sm:$0xff]
  %v28 = vld [vmem:[%s0 + $0x58] sm:$0xff]
  %v29 = vld [vmem:[%s0 + $0x60] sm:$0xff]
  %v30 = vld [vmem:[%s0 + $0x68] sm:$0xff]
  %v31 = vld [vmem:[%s0 + $0x70] sm:$0xff]
  %v32 = vld [vmem:[%s0 + $0x78] sm:$0xff]
  %v33 = vld [vmem:[%s0 + $0x80] sm:$0xff]
  %v34 = vld [vmem:[%s0 + $0x88] sm:$0xff]
  %v35 = vld [vmem:[%s0 + $0x90] sm:$0xff]
  %v36 = vld [vmem:[%s0 + $0x98] sm:$0xff]
  %v37 = vld [vmem:[%s0 + $0xa0] sm:$0xff]
  %v38 = vld [vmem:[%s0 + $0xa8] sm:$0xff]
  %v39 = vld [vmem:[%s0 + $0xb0] sm:$0xff]
  %v40 = vld [vmem:[%s0 + $0xb8] sm:$0xff]
  %v41 = vld [vmem:[%s0 + $0xc0] sm:$0xff]
  %v42 = vld [vmem:[%s0 + $0xc8] sm:$0xff]
  %v43 = vld [vmem:[%s0 + $0xd0] sm:$0xff]
  %v44 = vld [vmem:[%s0 + $0xd8] sm:$0xff]
  %v45 = vld [vmem:[%s0 + $0xe0] sm:$0xff]
  %v46 = vld [vmem:[%s0 + $0xe8] sm:$0xff]
  %v47 = vld [vmem:[%s0 + $0xf0] sm:$0xff]
  %v48 = vld [vmem:[%s0 + $0xf8] sm:$0xff]
  %v49 = vld [vmem:[%s0 + $0x100] sm:$0xff]
  %v50 = vld [vmem:[%s0 + $0x108] sm:$0xff]
  %v51 = vld [vmem:[%s0 + $0x110] sm:$0xff]
  %v52 = vld [vmem:[%s0 + $0x118] sm:$0xff]
  %v53 = vld [vmem:[%s0 + $0x120] sm:$0xff]
  %v54 = vld [vmem:[%s0 + $0x128] sm:$0xff]
  %v55 = vld [vmem:[%s0 + $0x130] sm:$0xff]
  %v56 = vld [vmem:[%s0 + $0x138] sm:$0xff]
  %v57 = vld [vmem:[%s0 + $0x140] sm:$0xff]
  %v58 = vld [vmem:[%s0 + $0x148] sm:$0xff]
  %v59 = vld [vmem:[%s0 + $0x150] sm:$0xff]
  %v60 = vld [vmem:[%s0 + $0x158] sm:$0xff]
  %v61 = vld [vmem:[%s0 + $0x160] sm:$0xff]
  %v62 = vld [vmem:[%s0 + $0x168] sm:$0xff]
  %v63 = vld [vmem:[%s0 + $0x170] sm:$0xff]
  %v64 = vld [vmem:[%s0 + $0x178] sm:$0xff]
  %v65 = vld [vmem:[%s0 + $0x180] sm:$0xff]
  %v66 = vld [vmem:[%s0 + $0x188] sm:$0xff]
  %v67 = vld [vmem:[%s0 + $0x190] sm:$0xff]
  %v68 = vld [vmem:[%s0 + $0x198] sm:$0xff]
  %v69 = vld [vmem:[%s0 + $0x1a0] sm:$0xff]
  %v70 = vld [vmem:[%s0 + $0x1a8] sm:$0xff]
  %v71 = vld [vmem:[%s0 + $0x1b0] sm:$0xff]
  %v72 = vld [vmem:[%s0 + $0x1b8] sm:$0xff]
  %v73 = vld [vmem:[%s0 + $0x1c0] sm:$0xff]
  %v74 = vld [vmem:[%s0 + $0x1c8] sm:$0xff]
  %v75 = vld [vmem:[%s0 + $0x1d0] sm:$0xff]
  %v76 = vld [vmem:[%s0 + $0x1d8] sm:$0xff]
  %v77 = vld [vmem:[%s0 + $0x1e0] sm:$0xff]
  %v78 = vld [vmem:[%s0 + $0x1e8] sm:$0xff]
  %v79 = vld [vmem:[%s0 + $0x1f0] sm:$0xff]
  %v80 = vld [vmem:[%s0 + $0x1f8] sm:$0xff]
  %v81 = vld [vmem:[%s2] sm:$0x1]
  %v83 = vperm.slane %v81, 0
  %v85 = vmul.f32 %v17, %v83
  %v86 = vmul.f32 %v18, %v83
  %v87 = vmul.f32 %v19, %v83
  %v88 = vmul.f32 %v20, %v83
  %v89 = vmul.f32 %v21, %v83
  %v90 = vmul.f32 %v22, %v83
  %v91 = vmul.f32 %v23, %v83
  %v92 = vmul.f32 %v24, %v83
  %v93 = vmul.f32 %v25, %v83
  %v94 = vmul.f32 %v26, %v83
  %v95 = vmul.f32 %v27, %v83
  %v96 = vmul.f32 %v28, %v83
  %v97 = vmul.f32 %v29, %v83
  %v98 = vmul.f32 %v30, %v83
  %v99 = vmul.f32 %v31, %v83
  %v100 = vmul.f32 %v32, %v83
  %v101 = vmul.f32 %v33, %v83
  %v102 = vmul.f32 %v34, %v83
  %v103 = vmul.f32 %v35, %v83
  %v104 = vmul.f32 %v36, %v83
  %v105 = vmul.f32 %v37, %v83
  %v106 = vmul.f32 %v38, %v83
  %v107 = vmul.f32 %v39, %v83
  %v108 = vmul.f32 %v40, %v83
  %v109 = vmul.f32 %v41, %v83
  %v110 = vmul.f32 %v42, %v83
  %v111 = vmul.f32 %v43, %v83
  %v112 = vmul.f32 %v44, %v83
  %v113 = vmul.f32 %v45, %v83
  %v114 = vmul.f32 %v46, %v83
  %v115 = vmul.f32 %v47, %v83
  %v116 = vmul.f32 %v48, %v83
  %v117 = vmul.f32 %v49, %v83
  %v118 = vmul.f32 %v50, %v83
  %v119 = vmul.f32 %v51, %v83
  %v120 = vmul.f32 %v52, %v83
  %v121 = vmul.f32 %v53, %v83
  %v122 = vmul.f32 %v54, %v83
  %v123 = vmul.f32 %v55, %v83
  %v124 = vmul.f32 %v56, %v83
  %v125 = vmul.f32 %v57, %v83
  %v126 = vmul.f32 %v58, %v83
  %v127 = vmul.f32 %v59, %v83
  %v128 = vmul.f32 %v60, %v83
  %v129 = vmul.f32 %v61, %v83
  %v130 = vmul.f32 %v62, %v83
  %v131 = vmul.f32 %v63, %v83
  %v132 = vmul.f32 %v64, %v83
  %v133 = vmul.f32 %v65, %v83
  %v134 = vmul.f32 %v66, %v83
  %v135 = vmul.f32 %v67, %v83
  %v136 = vmul.f32 %v68, %v83
  %v137 = vmul.f32 %v69, %v83
  %v138 = vmul.f32 %v70, %v83
  %v139 = vmul.f32 %v71, %v83
  %v140 = vmul.f32 %v72, %v83
  %v141 = vmul.f32 %v73, %v83
  %v142 = vmul.f32 %v74, %v83
  %v143 = vmul.f32 %v75, %v83
  %v144 = vmul.f32 %v76, %v83
  %v145 = vmul.f32 %v77, %v83
  %v146 = vmul.f32 %v78, %v83
  %v147 = vmul.f32 %v79, %v83
  %v148 = vmul.f32 %v80, %v83
  %v149 = vld [vmem:[%s3] sm:$0x1]
  %v151 = vperm.slane %v149, 0
  %v153 = vadd.f32 %v85, %v151
  %v154 = vadd.f32 %v86, %v151
  %v155 = vadd.f32 %v87, %v151
  %v156 = vadd.f32 %v88, %v151
  %v157 = vadd.f32 %v89, %v151
  %v158 = vadd.f32 %v90, %v151
  %v159 = vadd.f32 %v91, %v151
  %v160 = vadd.f32 %v92, %v151
  %v161 = vadd.f32 %v93, %v151
  %v162 = vadd.f32 %v94, %v151
  %v163 = vadd.f32 %v95, %v151
  %v164 = vadd.f32 %v96, %v151
  %v165 = vadd.f32 %v97, %v151
  %v166 = vadd.f32 %v98, %v151
  %v167 = vadd.f32 %v99, %v151
  %v168 = vadd.f32 %v100, %v151
  %v169 = vadd.f32 %v101, %v151
  %v170 = vadd.f32 %v102, %v151
  %v171 = vadd.f32 %v103, %v151
  %v172 = vadd.f32 %v104, %v151
  %v173 = vadd.f32 %v105, %v151
  %v174 = vadd.f32 %v106, %v151
  %v175 = vadd.f32 %v107, %v151
  %v176 = vadd.f32 %v108, %v151
  %v177 = vadd.f32 %v109, %v151
  %v178 = vadd.f32 %v110, %v151
  %v179 = vadd.f32 %v111, %v151
  %v180 = vadd.f32 %v112, %v151
  %v181 = vadd.f32 %v113, %v151
  %v182 = vadd.f32 %v114, %v151
  %v183 = vadd.f32 %v115, %v151
  %v184 = vadd.f32 %v116, %v151
  %v185 = vadd.f32 %v117, %v151
  %v186 = vadd.f32 %v118, %v151
  %v187 = vadd.f32 %v119, %v151
  %v188 = vadd.f32 %v120, %v151
  %v189 = vadd.f32 %v121, %v151
  %v190 = vadd.f32 %v122, %v151
  %v191 = vadd.f32 %v123, %v151
  %v192 = vadd.f32 %v124, %v151
  %v193 = vadd.f32 %v125, %v151
  %v194 = vadd.f32 %v126, %v151
  %v195 = vadd.f32 %v127, %v151
  %v196 = vadd.f32 %v128, %v151
  %v197 = vadd.f32 %v129, %v151
  %v198 = vadd.f32 %v130, %v151
  %v199 = vadd.f32 %v131, %v151
  %v200 = vadd.f32 %v132, %v151
  %v201 = vadd.f32 %v133, %v151
  %v202 = vadd.f32 %v134, %v151
  %v203 = vadd.f32 %v135, %v151
  %v204 = vadd.f32 %v136, %v151
  %v205 = vadd.f32 %v137, %v151
  %v206 = vadd.f32 %v138, %v151
  %v207 = vadd.f32 %v139, %v151
  %v208 = vadd.f32 %v140, %v151
  %v209 = vadd.f32 %v141, %v151
  %v210 = vadd.f32 %v142, %v151
  %v211 = vadd.f32 %v143, %v151
  %v212 = vadd.f32 %v144, %v151
  %v213 = vadd.f32 %v145, %v151
  %v214 = vadd.f32 %v146, %v151
  %v215 = vadd.f32 %v147, %v151
  %v216 = vadd.f32 %v148, %v151
  %v217 = vld [vmem:[%s1] sm:$0xff]
  %v218 = vld [vmem:[%s1 + $0x8] sm:$0xff]
  %v219 = vld [vmem:[%s1 + $0x10] sm:$0xff]
  %v220 = vld [vmem:[%s1 + $0x18] sm:$0xff]
  %v221 = vld [vmem:[%s1 + $0x20] sm:$0xff]
  %v222 = vld [vmem:[%s1 + $0x28] sm:$0xff]
  %v223 = vld [vmem:[%s1 + $0x30] sm:$0xff]
  %v224 = vld [vmem:[%s1 + $0x38] sm:$0xff]
  %v225 = vld [vmem:[%s1 + $0x40] sm:$0xff]
  %v226 = vld [vmem:[%s1 + $0x48] sm:$0xff]
  %v227 = vld [vmem:[%s1 + $0x50] sm:$0xff]
  %v228 = vld [vmem:[%s1 + $0x58] sm:$0xff]
  %v229 = vld [vmem:[%s1 + $0x60] sm:$0xff]
  %v230 = vld [vmem:[%s1 + $0x68] sm:$0xff]
  %v231 = vld [vmem:[%s1 + $0x70] sm:$0xff]
  %v232 = vld [vmem:[%s1 + $0x78] sm:$0xff]
  %v233 = vld [vmem:[%s1 + $0x80] sm:$0xff]
  %v234 = vld [vmem:[%s1 + $0x88] sm:$0xff]
  %v235 = vld [vmem:[%s1 + $0x90] sm:$0xff]
  %v236 = vld [vmem:[%s1 + $0x98] sm:$0xff]
  %v237 = vld [vmem:[%s1 + $0xa0] sm:$0xff]
  %v238 = vld [vmem:[%s1 + $0xa8] sm:$0xff]
  %v239 = vld [vmem:[%s1 + $0xb0] sm:$0xff]
  %v240 = vld [vmem:[%s1 + $0xb8] sm:$0xff]
  %v241 = vld [vmem:[%s1 + $0xc0] sm:$0xff]
  %v242 = vld [vmem:[%s1 + $0xc8] sm:$0xff]
  %v243 = vld [vmem:[%s1 + $0xd0] sm:$0xff]
  %v244 = vld [vmem:[%s1 + $0xd8] sm:$0xff]
  %v245 = vld [vmem:[%s1 + $0xe0] sm:$0xff]
  %v246 = vld [vmem:[%s1 + $0xe8] sm:$0xff]
  %v247 = vld [vmem:[%s1 + $0xf0] sm:$0xff]
  %v248 = vld [vmem:[%s1 + $0xf8] sm:$0xff]
  %v249 = vld [vmem:[%s1 + $0x100] sm:$0xff]
  %v250 = vld [vmem:[%s1 + $0x108] sm:$0xff]
  %v251 = vld [vmem:[%s1 + $0x110] sm:$0xff]
  %v252 = vld [vmem:[%s1 + $0x118] sm:$0xff]
  %v253 = vld [vmem:[%s1 + $0x120] sm:$0xff]
  %v254 = vld [vmem:[%s1 + $0x128] sm:$0xff]
  %v255 = vld [vmem:[%s1 + $0x130] sm:$0xff]
  %v256 = vld [vmem:[%s1 + $0x138] sm:$0xff]
  %v257 = vld [vmem:[%s1 + $0x140] sm:$0xff]
  %v258 = vld [vmem:[%s1 + $0x148] sm:$0xff]
  %v259 = vld [vmem:[%s1 + $0x150] sm:$0xff]
  %v260 = vld [vmem:[%s1 + $0x158] sm:$0xff]
  %v261 = vld [vmem:[%s1 + $0x160] sm:$0xff]
  %v262 = vld [vmem:[%s1 + $0x168] sm:$0xff]
  %v263 = vld [vmem:[%s1 + $0x170] sm:$0xff]
  %v264 = vld [vmem:[%s1 + $0x178] sm:$0xff]
  %v265 = vld [vmem:[%s1 + $0x180] sm:$0xff]
  %v266 = vld [vmem:[%s1 + $0x188] sm:$0xff]
  %v267 = vld [vmem:[%s1 + $0x190] sm:$0xff]
  %v268 = vld [vmem:[%s1 + $0x198] sm:$0xff]
  %v269 = vld [vmem:[%s1 + $0x1a0] sm:$0xff]
  %v270 = vld [vmem:[%s1 + $0x1a8] sm:$0xff]
  %v271 = vld [vmem:[%s1 + $0x1b0] sm:$0xff]
  %v272 = vld [vmem:[%s1 + $0x1b8] sm:$0xff]
  %v273 = vld [vmem:[%s1 + $0x1c0] sm:$0xff]
  %v274 = vld [vmem:[%s1 + $0x1c8] sm:$0xff]
  %v275 = vld [vmem:[%s1 + $0x1d0] sm:$0xff]
  %v276 = vld [vmem:[%s1 + $0x1d8] sm:$0xff]
  %v277 = vld [vmem:[%s1 + $0x1e0] sm:$0xff]
  %v278 = vld [vmem:[%s1 + $0x1e8] sm:$0xff]
  %v279 = vld [vmem:[%s1 + $0x1f0] sm:$0xff]
  %v280 = vld [vmem:[%s1 + $0x1f8] sm:$0xff]
  %v281 = vadd.f32 %v153, %v217
  %v282 = vadd.f32 %v154, %v218
  %v283 = vadd.f32 %v155, %v219
  %v284 = vadd.f32 %v156, %v220
  %v285 = vadd.f32 %v157, %v221
  %v286 = vadd.f32 %v158, %v222
  %v287 = vadd.f32 %v159, %v223
  %v288 = vadd.f32 %v160, %v224
  %v289 = vadd.f32 %v161, %v225
  %v290 = vadd.f32 %v162, %v226
  %v291 = vadd.f32 %v163, %v227
  %v292 = vadd.f32 %v164, %v228
  %v293 = vadd.f32 %v165, %v229
  %v294 = vadd.f32 %v166, %v230
  %v295 = vadd.f32 %v167, %v231
  %v296 = vadd.f32 %v168, %v232
  %v297 = vadd.f32 %v169, %v233
  %v298 = vadd.f32 %v170, %v234
  %v299 = vadd.f32 %v171, %v235
  %v300 = vadd.f32 %v172, %v236
  %v301 = vadd.f32 %v173, %v237
  %v302 = vadd.f32 %v174, %v238
  %v303 = vadd.f32 %v175, %v239
  %v304 = vadd.f32 %v176, %v240
  %v305 = vadd.f32 %v177, %v241
  %v306 = vadd.f32 %v178, %v242
  %v307 = vadd.f32 %v179, %v243
  %v308 = vadd.f32 %v180, %v244
  %v309 = vadd.f32 %v181, %v245
  %v310 = vadd.f32 %v182, %v246
  %v311 = vadd.f32 %v183, %v247
  %v312 = vadd.f32 %v184, %v248
  %v313 = vadd.f32 %v185, %v249
  %v314 = vadd.f32 %v186, %v250
  %v315 = vadd.f32 %v187, %v251
  %v316 = vadd.f32 %v188, %v252
  %v317 = vadd.f32 %v189, %v253
  %v318 = vadd.f32 %v190, %v254
  %v319 = vadd.f32 %v191, %v255
  %v320 = vadd.f32 %v192, %v256
  %v321 = vadd.f32 %v193, %v257
  %v322 = vadd.f32 %v194, %v258
  %v323 = vadd.f32 %v195, %v259
  %v324 = vadd.f32 %v196, %v260
  %v325 = vadd.f32 %v197, %v261
  %v326 = vadd.f32 %v198, %v262
  %v327 = vadd.f32 %v199, %v263
  %v328 = vadd.f32 %v200, %v264
  %v329 = vadd.f32 %v201, %v265
  %v330 = vadd.f32 %v202, %v266
  %v331 = vadd.f32 %v203, %v267
  %v332 = vadd.f32 %v204, %v268
  %v333 = vadd.f32 %v205, %v269
  %v334 = vadd.f32 %v206, %v270
  %v335 = vadd.f32 %v207, %v271
  %v336 = vadd.f32 %v208, %v272
  %v337 = vadd.f32 %v209, %v273
  %v338 = vadd.f32 %v210, %v274
  %v339 = vadd.f32 %v211, %v275
  %v340 = vadd.f32 %v212, %v276
  %v341 = vadd.f32 %v213, %v277
  %v342 = vadd.f32 %v214, %v278
  %v343 = vadd.f32 %v215, %v279
  %v344 = vadd.f32 %v216, %v280
  %v345 = vmax.f32 %v281, 0.0
  %v346 = vmax.f32 %v282, 0.0
  %v347 = vmax.f32 %v283, 0.0
  %v348 = vmax.f32 %v284, 0.0
  %v349 = vmax.f32 %v285, 0.0
  %v350 = vmax.f32 %v286, 0.0
  %v351 = vmax.f32 %v287, 0.0
  %v352 = vmax.f32 %v288, 0.0
  %v353 = vmax.f32 %v289, 0.0
  %v354 = vmax.f32 %v290, 0.0
  %v355 = vmax.f32 %v291, 0.0
  %v356 = vmax.f32 %v292, 0.0
  %v357 = vmax.f32 %v293, 0.0
  %v358 = vmax.f32 %v294, 0.0
  %v359 = vmax.f32 %v295, 0.0
  %v360 = vmax.f32 %v296, 0.0
  %v361 = vmax.f32 %v297, 0.0
  %v362 = vmax.f32 %v298, 0.0
  %v363 = vmax.f32 %v299, 0.0
  %v364 = vmax.f32 %v300, 0.0
  %v365 = vmax.f32 %v301, 0.0
  %v366 = vmax.f32 %v302, 0.0
  %v367 = vmax.f32 %v303, 0.0
  %v368 = vmax.f32 %v304, 0.0
  %v369 = vmax.f32 %v305, 0.0
  %v370 = vmax.f32 %v306, 0.0
  %v371 = vmax.f32 %v307, 0.0
  %v372 = vmax.f32 %v308, 0.0
  %v373 = vmax.f32 %v309, 0.0
  %v374 = vmax.f32 %v310, 0.0
  %v375 = vmax.f32 %v311, 0.0
  %v376 = vmax.f32 %v312, 0.0
  %v377 = vmax.f32 %v313, 0.0
  %v378 = vmax.f32 %v314, 0.0
  %v379 = vmax.f32 %v315, 0.0
  %v380 = vmax.f32 %v316, 0.0
  %v381 = vmax.f32 %v317, 0.0
  %v382 = vmax.f32 %v318, 0.0
  %v383 = vmax.f32 %v319, 0.0
  %v384 = vmax.f32 %v320, 0.0
  %v385 = vmax.f32 %v321, 0.0
  %v386 = vmax.f32 %v322, 0.0
  %v387 = vmax.f32 %v323, 0.0
  %v388 = vmax.f32 %v324, 0.0
  %v389 = vmax.f32 %v325, 0.0
  %v390 = vmax.f32 %v326, 0.0
  %v391 = vmax.f32 %v327, 0.0
  %v392 = vmax.f32 %v328, 0.0
  %v393 = vmax.f32 %v329, 0.0
  %v394 = vmax.f32 %v330, 0.0
  %v395 = vmax.f32 %v331, 0.0
  %v396 = vmax.f32 %v332, 0.0
  %v397 = vmax.f32 %v333, 0.0
  %v398 = vmax.f32 %v334, 0.0
  %v399 = vmax.f32 %v335, 0.0
  %v400 = vmax.f32 %v336, 0.0
  %v401 = vmax.f32 %v337, 0.0
  %v402 = vmax.f32 %v338, 0.0
  %v403 = vmax.f32 %v339, 0.0
  %v404 = vmax.f32 %v340, 0.0
  %v405 = vmax.f32 %v341, 0.0
  %v406 = vmax.f32 %v342, 0.0
  %v407 = vmax.f32 %v343, 0.0
  %v408 = vmax.f32 %v344, 0.0
  %409 = vst [vmem:[%s4] sm:$0xff] %v345
  %410 = vst [vmem:[%s4 + $0x8] sm:$0xff] %v346
  %411 = vst [vmem:[%s4 + $0x10] sm:$0xff] %v347
  %412 = vst [vmem:[%s4 + $0x18] sm:$0xff] %v348
  %413 = vst [vmem:[%s4 + $0x20] sm:$0xff] %v349
  %414 = vst [vmem:[%s4 + $0x28] sm:$0xff] %v350
  %415 = vst [vmem:[%s4 + $0x30] sm:$0xff] %v351
  %416 = vst [vmem:[%s4 + $0x38] sm:$0xff] %v352
  %417 = vst [vmem:[%s4 + $0x40] sm:$0xff] %v353
  %418 = vst [vmem:[%s4 + $0x48] sm:$0xff] %v354
  %419 = vst [vmem:[%s4 + $0x50] sm:$0xff] %v355
  %420 = vst [vmem:[%s4 + $0x58] sm:$0xff] %v356
  %421 = vst [vmem:[%s4 + $0x60] sm:$0xff] %v357
  %422 = vst [vmem:[%s4 + $0x68] sm:$0xff] %v358
  %423 = vst [vmem:[%s4 + $0x70] sm:$0xff] %v359
  %424 = vst [vmem:[%s4 + $0x78] sm:$0xff] %v360
  %425 = vst [vmem:[%s4 + $0x80] sm:$0xff] %v361
  %426 = vst [vmem:[%s4 + $0x88] sm:$0xff] %v362
  %427 = vst [vmem:[%s4 + $0x90] sm:$0xff] %v363
  %428 = vst [vmem:[%s4 + $0x98] sm:$0xff] %v364
  %429 = vst [vmem:[%s4 + $0xa0] sm:$0xff] %v365
  %430 = vst [vmem:[%s4 + $0xa8] sm:$0xff] %v366
  %431 = vst [vmem:[%s4 + $0xb0] sm:$0xff] %v367
  %432 = vst [vmem:[%s4 + $0xb8] sm:$0xff] %v368
  %433 = vst [vmem:[%s4 + $0xc0] sm:$0xff] %v369
  %434 = vst [vmem:[%s4 + $0xc8] sm:$0xff] %v370
  %435 = vst [vmem:[%s4 + $0xd0] sm:$0xff] %v371
  %436 = vst [vmem:[%s4 + $0xd8] sm:$0xff] %v372
  %437 = vst [vmem:[%s4 + $0xe0] sm:$0xff] %v373
  %438 = vst [vmem:[%s4 + $0xe8] sm:$0xff] %v374
  %439 = vst [vmem:[%s4 + $0xf0] sm:$0xff] %v375
  %440 = vst [vmem:[%s4 + $0xf8] sm:$0xff] %v376
  %441 = vst [vmem:[%s4 + $0x100] sm:$0xff] %v377
  %442 = vst [vmem:[%s4 + $0x108] sm:$0xff] %v378
  %443 = vst [vmem:[%s4 + $0x110] sm:$0xff] %v379
  %444 = vst [vmem:[%s4 + $0x118] sm:$0xff] %v380
  %445 = vst [vmem:[%s4 + $0x120] sm:$0xff] %v381
  %446 = vst [vmem:[%s4 + $0x128] sm:$0xff] %v382
  %447 = vst [vmem:[%s4 + $0x130] sm:$0xff] %v383
  %448 = vst [vmem:[%s4 + $0x138] sm:$0xff] %v384
  %449 = vst [vmem:[%s4 + $0x140] sm:$0xff] %v385
  %450 = vst [vmem:[%s4 + $0x148] sm:$0xff] %v386
  %451 = vst [vmem:[%s4 + $0x150] sm:$0xff] %v387
  %452 = vst [vmem:[%s4 + $0x158] sm:$0xff] %v388
  %453 = vst [vmem:[%s4 + $0x160] sm:$0xff] %v389
  %454 = vst [vmem:[%s4 + $0x168] sm:$0xff] %v390
  %455 = vst [vmem:[%s4 + $0x170] sm:$0xff] %v391
  %456 = vst [vmem:[%s4 + $0x178] sm:$0xff] %v392
  %457 = vst [vmem:[%s4 + $0x180] sm:$0xff] %v393
  %458 = vst [vmem:[%s4 + $0x188] sm:$0xff] %v394
  %459 = vst [vmem:[%s4 + $0x190] sm:$0xff] %v395
  %460 = vst [vmem:[%s4 + $0x198] sm:$0xff] %v396
  %461 = vst [vmem:[%s4 + $0x1a0] sm:$0xff] %v397
  %462 = vst [vmem:[%s4 + $0x1a8] sm:$0xff] %v398
  %463 = vst [vmem:[%s4 + $0x1b0] sm:$0xff] %v399
  %464 = vst [vmem:[%s4 + $0x1b8] sm:$0xff] %v400
  %465 = vst [vmem:[%s4 + $0x1c0] sm:$0xff] %v401
  %466 = vst [vmem:[%s4 + $0x1c8] sm:$0xff] %v402
  %467 = vst [vmem:[%s4 + $0x1d0] sm:$0xff] %v403
  %468 = vst [vmem:[%s4 + $0x1d8] sm:$0xff] %v404
  %469 = vst [vmem:[%s4 + $0x1e0] sm:$0xff] %v405
  %470 = vst [vmem:[%s4 + $0x1e8] sm:$0xff] %v406
  %471 = vst [vmem:[%s4 + $0x1f0] sm:$0xff] %v407
  %472 = vst [vmem:[%s4 + $0x1f8] sm:$0xff] %v408
  // Predicated region
  $region18: #{resblock_forward.3} parent=0 // pred_check
    _
  $region19: #{resblock_forward.3} parent=0 // pred_check_branch
    %474 = sbr.rel (0) target = $region21
  $region20: #{resblock_forward.3} parent=0 // pred_region
    _
  $region21: #{resblock_forward.3} parent=0 // pred_fallthru
    _
  // Predicated region
  $region22: #{resblock_forward.3} parent=0 // pred_check
    _
  $region23: #{resblock_forward.3} parent=0 // pred_check_branch
    %476 = sbr.rel (0) target = $region25
  $region24: #{resblock_forward.3} parent=0 // pred_region
    _
  $region25: #{resblock_forward.3} parent=0 // pred_fallthru
    _

// kernel: resblock_forward.2
$region0: #{resblock_forward.2}
  #allocation0 [shape = 'u32[]', space=smem, size = 0x4, offset = 0x4, fixed_abs, tag = 'smem constant byte address 0x4 - core index']
  #allocation1 [shape = 'u32[72,128]{1,0:T(1,128)}', space=vmem, size = 0x9000, scoped, tag = 'internal scratch']
  %s0 = inlined_call_operand.vmem [shape: bf16[2,18,18,128], index: 0, kind: input, shape index: {}]
  %s1 = inlined_call_operand.vmem [shape: bf16[3,384,128], index: 1, kind: input, shape index: {}]
  %s2 = inlined_call_operand.vmem [shape: f32[2,256,128], index: 2, kind: output, shape index: {0}]
  %s3 = inlined_call_operand.vmem [shape: f32[2,1,1,128], index: 3, kind: output, shape index: {1}]
  %s4 = inlined_call_operand.vmem [shape: f32[2,1,1,128], index: 4, kind: output, shape index: {2}]
  %5 = xla_tuple %s2, %s3, %s4
  %s6 = sld [smem:[#allocation0]]
  $region57: #{resblock_forward.2} parent=0
    _
  %s8 = ssub.s32 1, %s6
  %s9 = scalar_select 0, %s8, %s6
  loop: start=0, step=1, limit=4
  $region2: #{resblock_forward.2} parent=0 // loop_pre_header
    _
  $region3: #{resblock_forward.2} parent=0 // loop_header
    %s11 = sphi 0, %s15
    %p12 = scmp.ge.s32.totalorder %s11, 4
    %s18 = sphi 0, %s30
    %s19 = sphi 0, %s26
    %s20 = sphi 0, %s18
    %s21 = sphi 0, %s19
    %s22 = sphi 0, %s20
    %s23 = sphi 0, %s21
    %s33 = sphi 0, %s35
    %s36 = sphi 0, %s33
    %s37 = sphi 0, %s36
    %s53 = sphi 0, %s37
    %s57 = sphi 0, %s57
    %s59 = sphi 0, %s57
    %s60 = sphi 0, %s59
    %s74 = sphi 0, %s60
    %s82 = sphi 0, %s84
    %s85 = sphi 0, %s82
    %s86 = sphi 0, %s85
    %s102 = sphi 0, %s86
    %s110 = sphi 0, %s112
    %s113 = sphi 0, %s110
    %s114 = sphi 0, %s113
    %s130 = sphi 0, %s114
    %s138 = sphi 0, %s140
    %s141 = sphi 0, %s138
    %s142 = sphi 0, %s141
    %s158 = sphi 0, %s142
  $region4: #{resblock_forward.2} parent=0 // loop_header_branch
    %14 = sbr.rel (%p12) target = $region8
  $region5: #{resblock_forward.2} parent=0 // loop_body
    %s16 = ssub.s32 %s11, 1
    %s17 = ssub.s32 %s11, 2
    %s24 = sadd.s32 1, %s19
    %p25 = scmp.ge.s32.totalorder %s24, 1
    %s26 = scalar_select %p25, 0, %s24
    %s27 = sadd.s32 1, %s18
    %s28 = scalar_select %p25, %s27, %s18
    %p29 = scmp.ge.s32.totalorder %s28, 2
    %s30 = scalar_select %p29, 0, %s28
    %s31 = ssub.s32 %s18, %s30
    %p32 = scmp.eq.s32.totalorder %s31, 0
    %s34 = sadd.s32 %s33, 1
    %s35 = scalar_select %p32, %s33, %s34
    %p38 = pneg %p32
    %p39 = scmp.eq.s32.totalorder %s11, 1
    %p40 = por %p38, %p39
    %p41 = scmp.ne.s32.totalorder %s33, %s36
    %p42 = scmp.eq.s32.totalorder %s11, 0
    %p43 = por %p41, %p42
    %p44 = scmp.ne.s32.totalorder %s33, %s36
    %p45 = scmp.eq.s32.totalorder %s16, 1
    %p46 = por %p44, %p45
    %p47 = scmp.ne.s32.totalorder %s36, %s37
    %p48 = scmp.eq.s32.totalorder %s16, 0
    %p49 = por %p47, %p48
    %p50 = scmp.ne.s32.totalorder %s36, %s37
    %p51 = scmp.eq.s32.totalorder %s17, 1
    %p52 = por %p50, %p51
    %p54 = scmp.ne.s32.totalorder %s37, %s53
    %p55 = scmp.eq.s32.totalorder %s17, 0
    %p56 = por %p54, %p55
    %s58 = sadd.s32 %s57, 1
    %p61 = scmp.eq.s32.totalorder %s11, 1
    %p62 = scmp.ne.s32.totalorder %s57, %s59
    %p63 = scmp.eq.s32.totalorder %s11, 0
    %p64 = por %p62, %p63
    %p65 = scmp.ne.s32.totalorder %s57, %s59
    %p66 = scmp.eq.s32.totalorder %s16, 1
    %p67 = por %p65, %p66
    %p68 = scmp.ne.s32.totalorder %s59, %s60
    %p69 = scmp.eq.s32.totalorder %s16, 0
    %p70 = por %p68, %p69
    %p71 = scmp.ne.s32.totalorder %s59, %s60
    %p72 = scmp.eq.s32.totalorder %s17, 1
    %p73 = por %p71, %p72
    %p75 = scmp.ne.s32.totalorder %s60, %s74
    %p76 = scmp.eq.s32.totalorder %s17, 0
    %p77 = por %p75, %p76
    %s78 = ssub.s32 %s18, %s30
    %s79 = ssub.s32 %s19, %s26
    %s80 = sor.u32 %s78, %s79
    %p81 = scmp.eq.s32.totalorder %s80, 0
    %s83 = sadd.s32 %s82, 1
    %s84 = scalar_select %p81, %s82, %s83
    %p87 = pneg %p81
    %p88 = scmp.eq.s32.totalorder %s11, 1
    %p89 = por %p87, %p88
    %p90 = scmp.ne.s32.totalorder %s82, %s85
    %p91 = scmp.eq.s32.totalorder %s11, 0
    %p92 = por %p90, %p91
    %p93 = scmp.ne.s32.totalorder %s82, %s85
    %p94 = scmp.eq.s32.totalorder %s16, 1
    %p95 = por %p93, %p94
    %p96 = scmp.ne.s32.totalorder %s85, %s86
    %p97 = scmp.eq.s32.totalorder %s16, 0
    %p98 = por %p96, %p97
    %p99 = scmp.ne.s32.totalorder %s85, %s86
    %p100 = scmp.eq.s32.totalorder %s17, 1
    %p101 = por %p99, %p100
    %p103 = scmp.ne.s32.totalorder %s86, %s102
    %p104 = scmp.eq.s32.totalorder %s17, 0
    %p105 = por %p103, %p104
    %s106 = ssub.s32 %s18, %s30
    %s107 = ssub.s32 %s19, %s26
    %s108 = sor.u32 %s106, %s107
    %p109 = scmp.eq.s32.totalorder %s108, 0
    %s111 = sadd.s32 %s110, 1
    %s112 = scalar_select %p109, %s110, %s111
    %p115 = pneg %p109
    %p116 = scmp.eq.s32.totalorder %s11, 1
    %p117 = por %p115, %p116
    %p118 = scmp.ne.s32.totalorder %s110, %s113
    %p119 = scmp.eq.s32.totalorder %s11, 0
    %p120 = por %p118, %p119
    %p121 = scmp.ne.s32.totalorder %s110, %s113
    %p122 = scmp.eq.s32.totalorder %s16, 1
    %p123 = por %p121, %p122
    %p124 = scmp.ne.s32.totalorder %s113, %s114
    %p125 = scmp.eq.s32.totalorder %s16, 0
    %p126 = por %p124, %p125
    %p127 = scmp.ne.s32.totalorder %s113, %s114
    %p128 = scmp.eq.s32.totalorder %s17, 1
    %p129 = por %p127, %p128
    %p131 = scmp.ne.s32.totalorder %s114, %s130
    %p132 = scmp.eq.s32.totalorder %s17, 0
    %p133 = por %p131, %p132
    %s134 = ssub.s32 %s18, %s30
    %s135 = ssub.s32 %s19, %s26
    %s136 = sor.u32 %s134, %s135
    %p137 = scmp.eq.s32.totalorder %s136, 0
    %s139 = sadd.s32 %s138, 1
    %s140 = scalar_select %p137, %s138, %s139
    %p143 = pneg %p137
    %p144 = scmp.eq.s32.totalorder %s11, 1
    %p145 = por %p143, %p144
    %p146 = scmp.ne.s32.totalorder %s138, %s141
    %p147 = scmp.eq.s32.totalorder %s11, 0
    %p148 = por %p146, %p147
    %p149 = scmp.ne.s32.totalorder %s138, %s141
    %p150 = scmp.eq.s32.totalorder %s16, 1
    %p151 = por %p149, %p150
    %p152 = scmp.ne.s32.totalorder %s141, %s142
    %p153 = scmp.eq.s32.totalorder %s16, 0
    %p154 = por %p152, %p153
    %p155 = scmp.ne.s32.totalorder %s141, %s142
    %p156 = scmp.eq.s32.totalorder %s17, 1
    %p157 = por %p155, %p156
    %p159 = scmp.ne.s32.totalorder %s142, %s158
    %p160 = scmp.eq.s32.totalorder %s17, 0
    %p161 = por %p159, %p160
    %p162 = scmp.le.s32.totalorder 1, %s11
    %p163 = scmp.lt.s32.totalorder %s11, 3
    %p164 = pnand %p162, %p163
    %p165 = pneg %p164
    // Predicated region
    $region9: #{resblock_forward.2} parent=5 // pred_check
      _
    $region10: #{resblock_forward.2} parent=5 // pred_check_branch
      %167 = sbr.rel (%p164) target = $region12
    $region11: #{resblock_forward.2} parent=5 // pred_region
      %s168 = ssub.s32 %s11, 1
      // Predicated region
      $region13: #{resblock_forward.2} parent=11 // pred_check
        %p169 = pneg %p70
      $region14: #{resblock_forward.2} parent=11 // pred_check_branch
        %171 = sbr.rel (%p169) target = $region16
      $region15: #{resblock_forward.2} parent=11 // pred_region
        _
      $region16: #{resblock_forward.2} parent=11 // pred_fallthru
        _
    $region12: #{resblock_forward.2} parent=5 // pred_fallthru
      _
    %p172 = scmp.lt.s32.totalorder %s11, 2
    // Predicated region
    $region17: #{resblock_forward.2} parent=5 // pred_check
      %p173 = pneg %p172
    $region18: #{resblock_forward.2} parent=5 // pred_check_branch
      %175 = sbr.rel (%p173) target = $region20
    $region19: #{resblock_forward.2} parent=5 // pred_region
      // Predicated region
      $region21: #{resblock_forward.2} parent=19 // pred_check
        %p176 = pneg %p43
      $region22: #{resblock_forward.2} parent=19 // pred_check_branch
        %178 = sbr.rel (%p176) target = $region24
      $region23: #{resblock_forward.2} parent=19 // pred_region
        %p179 = scmp.lt.s32.totalorder %s18, 1
        %s180 = scalar_select %p179, %s18, 1
        %s181 = smul.addr %s180, 54
        %s182 = smul.addr %s181, 4
        %s183 = scalar_lea.vmem %s0, %s182
      $region24: #{resblock_forward.2} parent=19 // pred_fallthru
        _
    $region20: #{resblock_forward.2} parent=5 // pred_fallthru
      _
    %p184 = scmp.le.s32.totalorder 1, %s11
    %p185 = scmp.lt.s32.totalorder %s11, 3
    %p186 = pnand %p184, %p185
    %p187 = pneg %p186
    // Predicated region
    $region25: #{resblock_forward.2} parent=5 // pred_check
      _
    $region26: #{resblock_forward.2} parent=5 // pred_check_branch
      %189 = sbr.rel (%p186) target = $region28
    $region27: #{resblock_forward.2} parent=5 // pred_region
      %s190 = ssub.s32 %s11, 1
      %p191 = scmp.lt.s32.totalorder %s20, 1
      %s192 = scalar_select %p191, %s20, 1
      %s193 = smul.addr %s192, 54
      %s194 = smul.addr %s193, 4
      %s195 = scalar_lea.vmem %s0, %s194
      %p196 = pneg %p49
      %p197 = pneg %p46
      %p198 = pneg %p70
      %p199 = pneg %p67
      %p200 = pneg %p98
      %p201 = pneg %p95
      %s202 = smul.u32 32, %s21
      %p203 = scmp.lt.s32.totalorder %s20, 1
      %s204 = scalar_select %p203, %s20, 1
      %p205 = scmp.lt.s32.totalorder %s202, 31
      %s206 = scalar_select %p205, %s202, 31
      %s207 = smul.addr %s204, 32
      %s208 = sadd.s32 %s206, %s207
      %s209 = smul.addr %s208, 8
      %s210 = scalar_lea.vmem %s2, %s209
      %p211 = pneg %p126
      %p212 = pneg %p123
      %p213 = scmp.lt.s32.totalorder %s20, 1
      %s214 = scalar_select %p213, %s20, 1
      %p215 = scmp.lt.s32.totalorder %s21, 0
      %s216 = scalar_select %p215, %s21, 0
      %s217 = sadd.s32 %s216, %s214
      %s218 = scalar_lea.vmem %s3, %s217
      %p219 = pneg %p154
      %p220 = pneg %p151
      %p221 = scmp.lt.s32.totalorder %s20, 1
      %s222 = scalar_select %p221, %s20, 1
      %p223 = scmp.lt.s32.totalorder %s21, 0
      %s224 = scalar_select %p223, %s21, 0
      %s225 = sadd.s32 %s224, %s222
      %s226 = scalar_lea.vmem %s4, %s225
      %p227 = scmp.lt.s32.totalorder %s20, 1
      %s228 = scalar_select %p227, %s20, 1
      %s229 = smul.addr %s228, 54
      %s230 = smul.addr %s229, 4
      %s231 = scalar_lea.vmem %s0, %s230
      %s232 = smul.u32 32, %s21
      %p233 = scmp.lt.s32.totalorder %s20, 1
      %s234 = scalar_select %p233, %s20, 1
      %p235 = scmp.lt.s32.totalorder %s232, 31
      %s236 = scalar_select %p235, %s232, 31
      %s237 = smul.addr %s234, 32
      %s238 = sadd.s32 %s236, %s237
      %s239 = smul.addr %s238, 8
      %s240 = scalar_lea.vmem %s2, %s239
      %s241 = smul.u32 32, %s21
      %p242 = scmp.lt.s32.totalorder %s20, 1
      %s243 = scalar_select %p242, %s20, 1
      %p244 = scmp.lt.s32.totalorder %s21, 0
      %s245 = scalar_select %p244, %s21, 0
      %s246 = sadd.s32 %s245, %s243
      %s247 = scalar_lea.vmem %s3, %s246
      %p248 = scmp.lt.s32.totalorder %s20, 1
      %s249 = scalar_select %p248, %s20, 1
      %p250 = scmp.lt.s32.totalorder %s21, 0
      %s251 = scalar_select %p250, %s21, 0
      %s252 = sadd.s32 %s251, %s249
      %s253 = scalar_lea.vmem %s4, %s252
      %v254 = vld [vmem:[%s231] sm:$0xf]
      %v255 = vld [vmem:[%s231 + $0x4] sm:$0xf]
      %v256 = vld [vmem:[%s231 + $0xc] sm:$0xf]
      %v257 = vld [vmem:[%s231 + $0x10] sm:$0xf]
      %v258 = vld [vmem:[%s231 + $0x18] sm:$0xf]
      %v259 = vld [vmem:[%s231 + $0x1c] sm:$0xf]
      %v260 = vld [vmem:[%s231 + $0x24] sm:$0xf]
      %v261 = vld [vmem:[%s231 + $0x28] sm:$0xf]
      %v262 = vld [vmem:[%s231 + $0x30] sm:$0xf]
      %v263 = vld [vmem:[%s231 + $0x34] sm:$0xf]
      %v264 = vld [vmem:[%s231 + $0x3c] sm:$0xf]
      %v265 = vld [vmem:[%s231 + $0x40] sm:$0xf]
      %v266 = vld [vmem:[%s231 + $0x48] sm:$0xf]
      %v267 = vld [vmem:[%s231 + $0x4c] sm:$0xf]
      %v268 = vld [vmem:[%s231 + $0x54] sm:$0xf]
      %v269 = vld [vmem:[%s231 + $0x58] sm:$0xf]
      %v270 = vld [vmem:[%s231 + $0x60] sm:$0xf]
      %v271 = vld [vmem:[%s231 + $0x64] sm:$0xf]
      %v272 = vld [vmem:[%s231 + $0x6c] sm:$0xf]
      %v273 = vld [vmem:[%s231 + $0x70] sm:$0xf]
      %v274 = vld [vmem:[%s231 + $0x78] sm:$0xf]
      %v275 = vld [vmem:[%s231 + $0x7c] sm:$0xf]
      %v276 = vld [vmem:[%s231 + $0x84] sm:$0xf]
      %v277 = vld [vmem:[%s231 + $0x88] sm:$0xf]
      %v278 = vld [vmem:[%s231 + $0x90] sm:$0xf]
      %v279 = vld [vmem:[%s231 + $0x94] sm:$0xf]
      %v280 = vld [vmem:[%s231 + $0x9c] sm:$0xf]
      %v281 = vld [vmem:[%s231 + $0xa0] sm:$0xf]
      %v282 = vld [vmem:[%s231 + $0xa8] sm:$0xf]
      %v283 = vld [vmem:[%s231 + $0xac] sm:$0xf]
      %v284 = vld [vmem:[%s231 + $0xb4] sm:$0xf]
      %v285 = vld [vmem:[%s231 + $0xb8] sm:$0xf]
      %v286 = vld [vmem:[%s231 + $0xc0] sm:$0xf]
      %v287 = vld [vmem:[%s231 + $0xc4] sm:$0xf]
      %v288 = vld [vmem:[%s231 + $0xcc] sm:$0xf]
      %v289 = vld [vmem:[%s231 + $0xd0] sm:$0xf]
      %v290 = vld [vmem:[%s231 + $0x8] sm:$0x1]
      %v291 = vld [vmem:[%s231 + $0x14] sm:$0x1]
      %v292 = vld [vmem:[%s231 + $0x20] sm:$0x1]
      %v293 = vld [vmem:[%s231 + $0x2c] sm:$0x1]
      %v294 = vld [vmem:[%s231 + $0x38] sm:$0x1]
      %v295 = vld [vmem:[%s231 + $0x44] sm:$0x1]
      %v296 = vld [vmem:[%s231 + $0x50] sm:$0x1]
      %v297 = vld [vmem:[%s231 + $0x5c] sm:$0x1]
      %v298 = vld [vmem:[%s231 + $0x68] sm:$0x1]
      %v299 = vld [vmem:[%s231 + $0x74] sm:$0x1]
      %v300 = vld [vmem:[%s231 + $0x80] sm:$0x1]
      %v301 = vld [vmem:[%s231 + $0x8c] sm:$0x1]
      %v302 = vld [vmem:[%s231 + $0x98] sm:$0x1]
      %v303 = vld [vmem:[%s231 + $0xa4] sm:$0x1]
      %v304 = vld [vmem:[%s231 + $0xb0] sm:$0x1]
      %v305 = vld [vmem:[%s231 + $0xbc] sm:$0x1]
      %v306 = vld [vmem:[%s231 + $0xc8] sm:$0x1]
      %v307 = vld [vmem:[%s231 + $0xd4] sm:$0x1]
      %v308 = vld [vmem:[%s231] sm:$0xe]
      %v309 = vld [vmem:[%s231 + $0xc] sm:$0xe]
      %v310 = vld [vmem:[%s231 + $0x18] sm:$0xe]
      %v311 = vld [vmem:[%s231 + $0x24] sm:$0xe]
      %v312 = vld [vmem:[%s231 + $0x30] sm:$0xe]
      %v313 = vld [vmem:[%s231 + $0x3c] sm:$0xe]
      %v314 = vld [vmem:[%s231 + $0x48] sm:$0xe]
      %v315 = vld [vmem:[%s231 + $0x54] sm:$0xe]
      %v316 = vld [vmem:[%s231 + $0x60] sm:$0xe]
      %v317 = vld [vmem:[%s231 + $0x6c] sm:$0xe]
      %v318 = vld [vmem:[%s231 + $0x78] sm:$0xe]
      %v319 = vld [vmem:[%s231 + $0x84] sm:$0xe]
      %v320 = vld [vmem:[%s231 + $0x90] sm:$0xe]
      %v321 = vld [vmem:[%s231 + $0x9c] sm:$0xe]
      %v322 = vld [vmem:[%s231 + $0xa8] sm:$0xe]
      %v323 = vld [vmem:[%s231 + $0xb4] sm:$0xe]
      %v324 = vld [vmem:[%s231 + $0xc0] sm:$0xe]
      %v325 = vld [vmem:[%s231 + $0xcc] sm:$0xe]
      %v362 = vunpack.c.l.b16 %v254
      %v363 = vunpack.c.l.b16 %v255
      %v364 = vunpack.c.l.b16 %v256
      %v365 = vunpack.c.l.b16 %v257
      %v366 = vunpack.c.l.b16 %v258
      %v367 = vunpack.c.l.b16 %v259
      %v368 = vunpack.c.l.b16 %v260
      %v369 = vunpack.c.l.b16 %v261
      %v370 = vunpack.c.l.b16 %v262
      %v371 = vunpack.c.l.b16 %v263
      %v372 = vunpack.c.l.b16 %v264
      %v373 = vunpack.c.l.b16 %v265
      %v374 = vunpack.c.l.b16 %v266
      %v375 = vunpack.c.l.b16 %v267
      %v376 = vunpack.c.l.b16 %v268
      %v377 = vunpack.c.l.b16 %v269
      %v378 = vunpack.c.l.b16 %v270
      %v379 = vunpack.c.l.b16 %v271
      %v380 = vunpack.c.l.b16 %v272
      %v381 = vunpack.c.l.b16 %v273
      %v382 = vunpack.c.l.b16 %v274
      %v383 = vunpack.c.l.b16 %v275
      %v384 = vunpack.c.l.b16 %v276
      %v385 = vunpack.c.l.b16 %v277
      %v386 = vunpack.c.l.b16 %v278
      %v387 = vunpack.c.l.b16 %v279
      %v388 = vunpack.c.l.b16 %v280
      %v389 = vunpack.c.l.b16 %v281
      %v390 = vunpack.c.l.b16 %v282
      %v391 = vunpack.c.l.b16 %v283
      %v392 = vunpack.c.l.b16 %v284
      %v393 = vunpack.c.l.b16 %v285
      %v394 = vunpack.c.l.b16 %v286
      %v395 = vunpack.c.l.b16 %v287
      %v396 = vunpack.c.l.b16 %v288
      %v397 = vunpack.c.l.b16 %v289
      %v398 = vpack.c.b16 %v363, %v362
      %v399 = vpack.c.b16 %v365, %v364
      %v400 = vpack.c.b16 %v367, %v366
      %v401 = vpack.c.b16 %v369, %v368
      %v402 = vpack.c.b16 %v371, %v370
      %v403 = vpack.c.b16 %v373, %v372
      %v404 = vpack.c.b16 %v375, %v374
      %v405 = vpack.c.b16 %v377, %v376
      %v406 = vpack.c.b16 %v379, %v378
      %v407 = vpack.c.b16 %v381, %v380
      %v408 = vpack.c.b16 %v383, %v382
      %v409 = vpack.c.b16 %v385, %v384
      %v410 = vpack.c.b16 %v387, %v386
      %v411 = vpack.c.b16 %v389, %v388
      %v412 = vpack.c.b16 %v391, %v390
      %v413 = vpack.c.b16 %v393, %v392
      %v414 = vpack.c.b16 %v395, %v394
      %v415 = vpack.c.b16 %v397, %v396
      %v452 = vunpack.c.l.b16 %v290
      %v453 = vunpack.c.l.b16 %v291
      %v454 = vunpack.c.l.b16 %v292
      %v455 = vunpack.c.l.b16 %v293
      %v456 = vunpack.c.l.b16 %v294
      %v457 = vunpack.c.l.b16 %v295
      %v458 = vunpack.c.l.b16 %v296
      %v459 = vunpack.c.l.b16 %v297
      %v460 = vunpack.c.l.b16 %v298
      %v461 = vunpack.c.l.b16 %v299
      %v462 = vunpack.c.l.b16 %v300
      %v463 = vunpack.c.l.b16 %v301
      %v464 = vunpack.c.l.b16 %v302
      %v465 = vunpack.c.l.b16 %v303
      %v466 = vunpack.c.l.b16 %v304
      %v467 = vunpack.c.l.b16 %v305
      %v468 = vunpack.c.l.b16 %v306
      %v469 = vunpack.c.l.b16 %v307
      %v470 = vpack.c.b16 %v452, %v452
      %v471 = vpack.c.b16 %v453, %v453
      %v472 = vpack.c.b16 %v454, %v454
      %v473 = vpack.c.b16 %v455, %v455
      %v474 = vpack.c.b16 %v456, %v456
      %v475 = vpack.c.b16 %v457, %v457
      %v476 = vpack.c.b16 %v458, %v458
      %v477 = vpack.c.b16 %v459, %v459
      %v478 = vpack.c.b16 %v460, %v460
      %v479 = vpack.c.b16 %v461, %v461
      %v480 = vpack.c.b16 %v462, %v462
      %v481 = vpack.c.b16 %v463, %v463
      %v482 = vpack.c.b16 %v464, %v464
      %v483 = vpack.c.b16 %v465, %v465
      %v484 = vpack.c.b16 %v466, %v466
      %v485 = vpack.c.b16 %v467, %v467
      %v486 = vpack.c.b16 %v468, %v468
      %v487 = vpack.c.b16 %v469, %v469
      %vm488 = vsmask.f32 7424
      %v490 = vshrl.u32 %v398, 16
      %v492 = vshll.u32 %v398, 16
      %v494 = vrot.slane %v492, 1
      %v495 = vor.u32 %v490, %v494
      %v497 = vshll.u32 %v470, 16
      %v499 = vrot.slane %v497, 1
      %v500 = vsel %vm488, %v495, %v499
      %v502 = vshrl.u32 %v399, 16
      %v504 = vshll.u32 %v399, 16
      %v506 = vrot.slane %v504, 1
      %v507 = vor.u32 %v502, %v506
      %v509 = vshll.u32 %v471, 16
      %v511 = vrot.slane %v509, 1
      %v512 = vsel %vm488, %v507, %v511
      %v514 = vshrl.u32 %v400, 16
      %v516 = vshll.u32 %v400, 16
      %v518 = vrot.slane %v516, 1
      %v519 = vor.u32 %v514, %v518
      %v521 = vshll.u32 %v472, 16
      %v523 = vrot.slane %v521, 1
      %v524 = vsel %vm488, %v519, %v523
      %v526 = vshrl.u32 %v401, 16
      %v528 = vshll.u32 %v401, 16
      %v530 = vrot.slane %v528, 1
      %v531 = vor.u32 %v526, %v530
      %v533 = vshll.u32 %v473, 16
      %v535 = vrot.slane %v533, 1
      %v536 = vsel %vm488, %v531, %v535
      %v538 = vshrl.u32 %v402, 16
      %v540 = vshll.u32 %v402, 16
      %v542 = vrot.slane %v540, 1
      %v543 = vor.u32 %v538, %v542
      %v545 = vshll.u32 %v474, 16
      %v547 = vrot.slane %v545, 1
      %v548 = vsel %vm488, %v543, %v547
      %v550 = vshrl.u32 %v403, 16
      %v552 = vshll.u32 %v403, 16
      %v554 = vrot.slane %v552, 1
      %v555 = vor.u32 %v550, %v554
      %v557 = vshll.u32 %v475, 16
      %v559 = vrot.slane %v557, 1
      %v560 = vsel %vm488, %v555, %v559
      %v562 = vshrl.u32 %v404, 16
      %v564 = vshll.u32 %v404, 16
      %v566 = vrot.slane %v564, 1
      %v567 = vor.u32 %v562, %v566
      %v569 = vshll.u32 %v476, 16
      %v571 = vrot.slane %v569, 1
      %v572 = vsel %vm488, %v567, %v571
      %v574 = vshrl.u32 %v405, 16
      %v576 = vshll.u32 %v405, 16
      %v578 = vrot.slane %v576, 1
      %v579 = vor.u32 %v574, %v578
      %v581 = vshll.u32 %v477, 16
      %v583 = vrot.slane %v581, 1
      %v584 = vsel %vm488, %v579, %v583
      %v586 = vshrl.u32 %v406, 16
      %v588 = vshll.u32 %v406, 16
      %v590 = vrot.slane %v588, 1
      %v591 = vor.u32 %v586, %v590
      %v593 = vshll.u32 %v478, 16
      %v595 = vrot.slane %v593, 1
      %v596 = vsel %vm488, %v591, %v595
      %v598 = vshrl.u32 %v407, 16
      %v600 = vshll.u32 %v407, 16
      %v602 = vrot.slane %v600, 1
      %v603 = vor.u32 %v598, %v602
      %v605 = vshll.u32 %v479, 16
      %v607 = vrot.slane %v605, 1
      %v608 = vsel %vm488, %v603, %v607
      %v610 = vshrl.u32 %v408, 16
      %v612 = vshll.u32 %v408, 16
      %v614 = vrot.slane %v612, 1
      %v615 = vor.u32 %v610, %v614
      %v617 = vshll.u32 %v480, 16
      %v619 = vrot.slane %v617, 1
      %v620 = vsel %vm488, %v615, %v619
      %v622 = vshrl.u32 %v409, 16
      %v624 = vshll.u32 %v409, 16
      %v626 = vrot.slane %v624, 1
      %v627 = vor.u32 %v622, %v626
      %v629 = vshll.u32 %v481, 16
      %v631 = vrot.slane %v629, 1
      %v632 = vsel %vm488, %v627, %v631
      %v634 = vshrl.u32 %v410, 16
      %v636 = vshll.u32 %v410, 16
      %v638 = vrot.slane %v636, 1
      %v639 = vor.u32 %v634, %v638
      %v641 = vshll.u32 %v482, 16
      %v643 = vrot.slane %v641, 1
      %v644 = vsel %vm488, %v639, %v643
      %v646 = vshrl.u32 %v411, 16
      %v648 = vshll.u32 %v411, 16
      %v650 = vrot.slane %v648, 1
      %v651 = vor.u32 %v646, %v650
      %v653 = vshll.u32 %v483, 16
      %v655 = vrot.slane %v653, 1
      %v656 = vsel %vm488, %v651, %v655
      %v658 = vshrl.u32 %v412, 16
      %v660 = vshll.u32 %v412, 16
      %v662 = vrot.slane %v660, 1
      %v663 = vor.u32 %v658, %v662
      %v665 = vshll.u32 %v484, 16
      %v667 = vrot.slane %v665, 1
      %v668 = vsel %vm488, %v663, %v667
      %v670 = vshrl.u32 %v413, 16
      %v672 = vshll.u32 %v413, 16
      %v674 = vrot.slane %v672, 1
      %v675 = vor.u32 %v670, %v674
      %v677 = vshll.u32 %v485, 16
      %v679 = vrot.slane %v677, 1
      %v680 = vsel %vm488, %v675, %v679
      %v682 = vshrl.u32 %v414, 16
      %v684 = vshll.u32 %v414, 16
      %v686 = vrot.slane %v684, 1
      %v687 = vor.u32 %v682, %v686
      %v689 = vshll.u32 %v486, 16
      %v691 = vrot.slane %v689, 1
      %v692 = vsel %vm488, %v687, %v691
      %v694 = vshrl.u32 %v415, 16
      %v696 = vshll.u32 %v415, 16
      %v698 = vrot.slane %v696, 1
      %v699 = vor.u32 %v694, %v698
      %v701 = vshll.u32 %v487, 16
      %v703 = vrot.slane %v701, 1
      %v704 = vsel %vm488, %v699, %v703
      %v741 = vunpack.c.l.b16 %v308
      %v742 = vunpack.c.l.b16 %v309
      %v743 = vunpack.c.l.b16 %v310
      %v744 = vunpack.c.l.b16 %v311
      %v745 = vunpack.c.l.b16 %v312
      %v746 = vunpack.c.l.b16 %v313
      %v747 = vunpack.c.l.b16 %v314
      %v748 = vunpack.c.l.b16 %v315
      %v749 = vunpack.c.l.b16 %v316
      %v750 = vunpack.c.l.b16 %v317
      %v751 = vunpack.c.l.b16 %v318
      %v752 = vunpack.c.l.b16 %v319
      %v753 = vunpack.c.l.b16 %v320
      %v754 = vunpack.c.l.b16 %v321
      %v755 = vunpack.c.l.b16 %v322
      %v756 = vunpack.c.l.b16 %v323
      %v757 = vunpack.c.l.b16 %v324
      %v758 = vunpack.c.l.b16 %v325
      %v759 = vpack.c.b16 %v363, %v741
      %v760 = vpack.c.b16 %v365, %v742
      %v761 = vpack.c.b16 %v367, %v743
      %v762 = vpack.c.b16 %v369, %v744
      %v763 = vpack.c.b16 %v371, %v745
      %v764 = vpack.c.b16 %v373, %v746
      %v765 = vpack.c.b16 %v375, %v747
      %v766 = vpack.c.b16 %v377, %v748
      %v767 = vpack.c.b16 %v379, %v749
      %v768 = vpack.c.b16 %v381, %v750
      %v769 = vpack.c.b16 %v383, %v751
      %v770 = vpack.c.b16 %v385, %v752
      %v771 = vpack.c.b16 %v387, %v753
      %v772 = vpack.c.b16 %v389, %v754
      %v773 = vpack.c.b16 %v391, %v755
      %v774 = vpack.c.b16 %v393, %v756
      %v775 = vpack.c.b16 %v395, %v757
      %v776 = vpack.c.b16 %v397, %v758
      %vm777 = vcmask 1046528
      %v778 = vrot.slane %v759, 1
      %v779 = vrot.slane %v470, 1
      %v780 = vsel %vm777, %v778, %v779
      %v781 = vrot.slane %v760, 1
      %v782 = vrot.slane %v471, 1
      %v783 = vsel %vm777, %v781, %v782
      %v784 = vrot.slane %v761, 1
      %v785 = vrot.slane %v472, 1
      %v786 = vsel %vm777, %v784, %v785
      %v787 = vrot.slane %v762, 1
      %v788 = vrot.slane %v473, 1
      %v789 = vsel %vm777, %v787, %v788
      %v790 = vrot.slane %v763, 1
      %v791 = vrot.slane %v474, 1
      %v792 = vsel %vm777, %v790, %v791
      %v793 = vrot.slane %v764, 1
      %v794 = vrot.slane %v475, 1
      %v795 = vsel %vm777, %v793, %v794
      %v796 = vrot.slane %v765, 1
      %v797 = vrot.slane %v476, 1
      %v798 = vsel %vm777, %v796, %v797
      %v799 = vrot.slane %v766, 1
      %v800 = vrot.slane %v477, 1
      %v801 = vsel %vm777, %v799, %v800
      %v802 = vrot.slane %v767, 1
      %v803 = vrot.slane %v478, 1
      %v804 = vsel %vm777, %v802, %v803
      %v805 = vrot.slane %v768, 1
      %v806 = vrot.slane %v479, 1
      %v807 = vsel %vm777, %v805, %v806
      %v808 = vrot.slane %v769, 1
      %v809 = vrot.slane %v480, 1
      %v810 = vsel %vm777, %v808, %v809
      %v811 = vrot.slane %v770, 1
      %v812 = vrot.slane %v481, 1
      %v813 = vsel %vm777, %v811, %v812
      %v814 = vrot.slane %v771, 1
      %v815 = vrot.slane %v482, 1
      %v816 = vsel %vm777, %v814, %v815
      %v817 = vrot.slane %v772, 1
      %v818 = vrot.slane %v483, 1
      %v819 = vsel %vm777, %v817, %v818
      %v820 = vrot.slane %v773, 1
      %v821 = vrot.slane %v484, 1
      %v822 = vsel %vm777, %v820, %v821
      %v823 = vrot.slane %v774, 1
      %v824 = vrot.slane %v485, 1
      %v825 = vsel %vm777, %v823, %v824
      %v826 = vrot.slane %v775, 1
      %v827 = vrot.slane %v486, 1
      %v828 = vsel %vm777, %v826, %v827
      %v829 = vrot.slane %v776, 1
      %v830 = vrot.slane %v487, 1
      %v831 = vsel %vm777, %v829, %v830
      %v850 = vld [vmem:[%s1] sm:$0xf]
      %v851 = vld [vmem:[%s1 + $0x4] sm:$0xf]
      %v852 = vld [vmem:[%s1 + $0x8] sm:$0xf]
      %v853 = vld [vmem:[%s1 + $0xc] sm:$0xf]
      %v854 = vld [vmem:[%s1 + $0x10] sm:$0xf]
      %v855 = vld [vmem:[%s1 + $0x14] sm:$0xf]
      %v856 = vld [vmem:[%s1 + $0x18] sm:$0xf]
      %v857 = vld [vmem:[%s1 + $0x1c] sm:$0xf]
      %v858 = vld [vmem:[%s1 + $0x20] sm:$0xf]
      %v859 = vld [vmem:[%s1 + $0x24] sm:$0xf]
      %v860 = vld [vmem:[%s1 + $0x28] sm:$0xf]
      %v861 = vld [vmem:[%s1 + $0x2c] sm:$0xf]
      %v862 = vld [vmem:[%s1 + $0x30] sm:$0xf]
      %v863 = vld [vmem:[%s1 + $0x34] sm:$0xf]
      %v864 = vld [vmem:[%s1 + $0x38] sm:$0xf]
      %v865 = vld [vmem:[%s1 + $0x3c] sm:$0xf]
      %v866 = vld [vmem:[%s1 + $0x40] sm:$0xf]
      %v867 = vld [vmem:[%s1 + $0x44] sm:$0xf]
      %v868 = vld [vmem:[%s1 + $0x48] sm:$0xf]
      %v869 = vld [vmem:[%s1 + $0x4c] sm:$0xf]
      %v870 = vld [vmem:[%s1 + $0x50] sm:$0xf]
      %v871 = vld [vmem:[%s1 + $0x54] sm:$0xf]
      %v872 = vld [vmem:[%s1 + $0x58] sm:$0xf]
      %v873 = vld [vmem:[%s1 + $0x5c] sm:$0xf]
      %v874 = vld [vmem:[%s1 + $0x60] sm:$0xf]
      %v875 = vld [vmem:[%s1 + $0x64] sm:$0xf]
      %v876 = vld [vmem:[%s1 + $0x68] sm:$0xf]
      %v877 = vld [vmem:[%s1 + $0x6c] sm:$0xf]
      %v878 = vld [vmem:[%s1 + $0x70] sm:$0xf]
      %v879 = vld [vmem:[%s1 + $0x74] sm:$0xf]
      %v880 = vld [vmem:[%s1 + $0x78] sm:$0xf]
      %v881 = vld [vmem:[%s1 + $0x7c] sm:$0xf]
      %v882 = vld [vmem:[%s1 + $0x80] sm:$0xf]
      %v883 = vld [vmem:[%s1 + $0x84] sm:$0xf]
      %v884 = vld [vmem:[%s1 + $0x88] sm:$0xf]
      %v885 = vld [vmem:[%s1 + $0x8c] sm:$0xf]
      %v886 = vld [vmem:[%s1 + $0x90] sm:$0xf]
      %v887 = vld [vmem:[%s1 + $0x94] sm:$0xf]
      %v888 = vld [vmem:[%s1 + $0x98] sm:$0xf]
      %v889 = vld [vmem:[%s1 + $0x9c] sm:$0xf]
      %v890 = vld [vmem:[%s1 + $0xa0] sm:$0xf]
      %v891 = vld [vmem:[%s1 + $0xa4] sm:$0xf]
      %v892 = vld [vmem:[%s1 + $0xa8] sm:$0xf]
      %v893 = vld [vmem:[%s1 + $0xac] sm:$0xf]
      %v894 = vld [vmem:[%s1 + $0xb0] sm:$0xf]
      %v895 = vld [vmem:[%s1 + $0xb4] sm:$0xf]
      %v896 = vld [vmem:[%s1 + $0xb8] sm:$0xf]
      %v897 = vld [vmem:[%s1 + $0xbc] sm:$0xf]
      %v946 = vunpack.c.l.b16 %v850
      %v947 = vunpack.c.l.b16 %v851
      %v948 = vunpack.c.l.b16 %v852
      %v949 = vunpack.c.l.b16 %v853
      %v950 = vunpack.c.l.b16 %v854
      %v951 = vunpack.c.l.b16 %v855
      %v952 = vunpack.c.l.b16 %v856
      %v953 = vunpack.c.l.b16 %v857
      %v954 = vunpack.c.l.b16 %v858
      %v955 = vunpack.c.l.b16 %v859
      %v956 = vunpack.c.l.b16 %v860
      %v957 = vunpack.c.l.b16 %v861
      %v958 = vunpack.c.l.b16 %v862
      %v959 = vunpack.c.l.b16 %v863
      %v960 = vunpack.c.l.b16 %v864
      %v961 = vunpack.c.l.b16 %v865
      %v962 = vunpack.c.l.b16 %v866
      %v963 = vunpack.c.l.b16 %v867
      %v964 = vunpack.c.l.b16 %v868
      %v965 = vunpack.c.l.b16 %v869
      %v966 = vunpack.c.l.b16 %v870
      %v967 = vunpack.c.l.b16 %v871
      %v968 = vunpack.c.l.b16 %v872
      %v969 = vunpack.c.l.b16 %v873
      %v970 = vunpack.c.l.b16 %v874
      %v971 = vunpack.c.l.b16 %v875
      %v972 = vunpack.c.l.b16 %v876
      %v973 = vunpack.c.l.b16 %v877
      %v974 = vunpack.c.l.b16 %v878
      %v975 = vunpack.c.l.b16 %v879
      %v976 = vunpack.c.l.b16 %v880
      %v977 = vunpack.c.l.b16 %v881
      %v978 = vunpack.c.l.b16 %v882
      %v979 = vunpack.c.l.b16 %v883
      %v980 = vunpack.c.l.b16 %v884
      %v981 = vunpack.c.l.b16 %v885
      %v982 = vunpack.c.l.b16 %v886
      %v983 = vunpack.c.l.b16 %v887
      %v984 = vunpack.c.l.b16 %v888
      %v985 = vunpack.c.l.b16 %v889
      %v986 = vunpack.c.l.b16 %v890
      %v987 = vunpack.c.l.b16 %v891
      %v988 = vunpack.c.l.b16 %v892
      %v989 = vunpack.c.l.b16 %v893
      %v990 = vunpack.c.l.b16 %v894
      %v991 = vunpack.c.l.b16 %v895
      %v992 = vunpack.c.l.b16 %v896
      %v993 = vunpack.c.l.b16 %v897
      %v994 = vpack.c.b16 %v947, %v946
      %v995 = vpack.c.b16 %v949, %v948
      %v996 = vpack.c.b16 %v951, %v950
      %v997 = vpack.c.b16 %v953, %v952
      %v998 = vpack.c.b16 %v955, %v954
      %v999 = vpack.c.b16 %v957, %v956
      %v1000 = vpack.c.b16 %v959, %v958
      %v1001 = vpack.c.b16 %v961, %v960
      %v1002 = vpack.c.b16 %v963, %v962
      %v1003 = vpack.c.b16 %v965, %v964
      %v1004 = vpack.c.b16 %v967, %v966
      %v1005 = vpack.c.b16 %v969, %v968
      %v1006 = vpack.c.b16 %v971, %v970
      %v1007 = vpack.c.b16 %v973, %v972
      %v1008 = vpack.c.b16 %v975, %v974
      %v1009 = vpack.c.b16 %v977, %v976
      %v1010 = vpack.c.b16 %v979, %v978
      %v1011 = vpack.c.b16 %v981, %v980
      %v1012 = vpack.c.b16 %v983, %v982
      %v1013 = vpack.c.b16 %v985, %v984
      %v1014 = vpack.c.b16 %v987, %v986
      %v1015 = vpack.c.b16 %v989, %v988
      %v1016 = vpack.c.b16 %v991, %v990
      %v1017 = vpack.c.b16 %v993, %v992
      %1042 = vmatpush.bf16.msra.mxu0 %v1001
      %1043 = vmatpush.bf16.msra.mxu0 %v1000
      %1044 = vmatpush.bf16.msra.mxu0 %v999
      %1045 = vmatpush.bf16.msra.mxu0 %v998
      %1046 = vmatpush.bf16.msra.mxu0 %v997
      %1047 = vmatpush.bf16.msra.mxu0 %v996
      %1048 = vmatpush.bf16.msra.mxu0 %v995
      %1049 = vmatpush.bf16.msra.mxu0 %v994
      %1050 = vmatmul.bf16.gmra.mxu0 %v398
      %v1051 = vpop.f32.mrf.mxu0
      %v1052 = vadd.f32 0.0, %v1051
      %v1053 = vpop.f32.mrf.mxu0
      %v1054 = vadd.f32 0.0, %v1053
      %1055 = vmatmul.bf16.gmra.mxu0 %v399
      %v1056 = vpop.f32.mrf.mxu0
      %v1057 = vadd.f32 0.0, %v1056
      %v1058 = vpop.f32.mrf.mxu0
      %v1059 = vadd.f32 0.0, %v1058
      %1060 = vmatmul.bf16.gmra.mxu0 %v400
      %v1061 = vpop.f32.mrf.mxu0
      %v1062 = vadd.f32 0.0, %v1061
      %v1063 = vpop.f32.mrf.mxu0
      %v1064 = vadd.f32 0.0, %v1063
      %1065 = vmatmul.bf16.gmra.mxu0 %v401
      %v1066 = vpop.f32.mrf.mxu0
      %v1067 = vadd.f32 0.0, %v1066
      %v1068 = vpop.f32.mrf.mxu0
      %v1069 = vadd.f32 0.0, %v1068
      %1070 = vmatmul.bf16.gmra.mxu0 %v402
      %v1071 = vpop.f32.mrf.mxu0
      %v1072 = vadd.f32 0.0, %v1071
      %v1073 = vpop.f32.mrf.mxu0
      %v1074 = vadd.f32 0.0, %v1073
      %1075 = vmatmul.bf16.gmra.mxu0 %v403
      %v1076 = vpop.f32.mrf.mxu0
      %v1077 = vadd.f32 0.0, %v1076
      %v1078 = vpop.f32.mrf.mxu0
      %v1079 = vadd.f32 0.0, %v1078
      %1080 = vmatmul.bf16.gmra.mxu0 %v404
      %v1081 = vpop.f32.mrf.mxu0
      %v1082 = vadd.f32 0.0, %v1081
      %v1083 = vpop.f32.mrf.mxu0
      %v1084 = vadd.f32 0.0, %v1083
      %1085 = vmatmul.bf16.gmra.mxu0 %v405
      %v1086 = vpop.f32.mrf.mxu0
      %v1087 = vadd.f32 0.0, %v1086
      %v1088 = vpop.f32.mrf.mxu0
      %v1089 = vadd.f32 0.0, %v1088
      %1090 = vmatmul.bf16.gmra.mxu0 %v406
      %v1091 = vpop.f32.mrf.mxu0
      %v1092 = vadd.f32 0.0, %v1091
      %v1093 = vpop.f32.mrf.mxu0
      %v1094 = vadd.f32 0.0, %v1093
      %1095 = vmatmul.bf16.gmra.mxu0 %v407
      %v1096 = vpop.f32.mrf.mxu0
      %v1097 = vadd.f32 0.0, %v1096
      %v1098 = vpop.f32.mrf.mxu0
      %v1099 = vadd.f32 0.0, %v1098
      %1100 = vmatmul.bf16.gmra.mxu0 %v408
      %v1101 = vpop.f32.mrf.mxu0
      %v1102 = vadd.f32 0.0, %v1101
      %v1103 = vpop.f32.mrf.mxu0
      %v1104 = vadd.f32 0.0, %v1103
      %1105 = vmatmul.bf16.gmra.mxu0 %v409
      %v1106 = vpop.f32.mrf.mxu0
      %v1107 = vadd.f32 0.0, %v1106
      %v1108 = vpop.f32.mrf.mxu0
      %v1109 = vadd.f32 0.0, %v1108
      %1110 = vmatmul.bf16.gmra.mxu0 %v410
      %v1111 = vpop.f32.mrf.mxu0
      %v1112 = vadd.f32 0.0, %v1111
      %v1113 = vpop.f32.mrf.mxu0
      %v1114 = vadd.f32 0.0, %v1113
      %1115 = vmatmul.bf16.gmra.mxu0 %v411
      %v1116 = vpop.f32.mrf.mxu0
      %v1117 = vadd.f32 0.0, %v1116
      %v1118 = vpop.f32.mrf.mxu0
      %v1119 = vadd.f32 0.0, %v1118
      %1120 = vmatmul.bf16.gmra.mxu0 %v412
      %v1121 = vpop.f32.mrf.mxu0
      %v1122 = vadd.f32 0.0, %v1121
      %v1123 = vpop.f32.mrf.mxu0
      %v1124 = vadd.f32 0.0, %v1123
      %1125 = vmatmul.bf16.gmra.mxu0 %v413
      %v1126 = vpop.f32.mrf.mxu0
      %v1127 = vadd.f32 0.0, %v1126
      %v1128 = vpop.f32.mrf.mxu0
      %v1129 = vadd.f32 0.0, %v1128
      %1130 = vdwg.mxu0
      %1131 = vmatpush.bf16.msra.mxu0 %v1009
      %1132 = vmatpush.bf16.msra.mxu0 %v1008
      %1133 = vmatpush.bf16.msra.mxu0 %v1007
      %1134 = vmatpush.bf16.msra.mxu0 %v1006
      %1135 = vmatpush.bf16.msra.mxu0 %v1005
      %1136 = vmatpush.bf16.msra.mxu0 %v1004
      %1137 = vmatpush.bf16.msra.mxu0 %v1003
      %1138 = vmatpush.bf16.msra.mxu0 %v1002
      %1139 = vmatmul.bf16.gmra.mxu0 %v500
      %v1140 = vpop.f32.mrf.mxu0
      %v1141 = vadd.f32 %v1052, %v1140
      %v1142 = vpop.f32.mrf.mxu0
      %v1143 = vadd.f32 %v1054, %v1142
      %1144 = vmatmul.bf16.gmra.mxu0 %v512
      %v1145 = vpop.f32.mrf.mxu0
      %v1146 = vadd.f32 %v1057, %v1145
      %v1147 = vpop.f32.mrf.mxu0
      %v1148 = vadd.f32 %v1059, %v1147
      %1149 = vmatmul.bf16.gmra.mxu0 %v524
      %v1150 = vpop.f32.mrf.mxu0
      %v1151 = vadd.f32 %v1062, %v1150
      %v1152 = vpop.f32.mrf.mxu0
      %v1153 = vadd.f32 %v1064, %v1152
      %1154 = vmatmul.bf16.gmra.mxu0 %v536
      %v1155 = vpop.f32.mrf.mxu0
      %v1156 = vadd.f32 %v1067, %v1155
      %v1157 = vpop.f32.mrf.mxu0
      %v1158 = vadd.f32 %v1069, %v1157
      %1159 = vmatmul.bf16.gmra.mxu0 %v548
      %v1160 = vpop.f32.mrf.mxu0
      %v1161 = vadd.f32 %v1072, %v1160
      %v1162 = vpop.f32.mrf.mxu0
      %v1163 = vadd.f32 %v1074, %v1162
      %1164 = vmatmul.bf16.gmra.mxu0 %v560
      %v1165 = vpop.f32.mrf.mxu0
      %v1166 = vadd.f32 %v1077, %v1165
      %v1167 = vpop.f32.mrf.mxu0
      %v1168 = vadd.f32 %v1079, %v1167
      %1169 = vmatmul.bf16.gmra.mxu0 %v572
      %v1170 = vpop.f32.mrf.mxu0
      %v1171 = vadd.f32 %v1082, %v1170
      %v1172 = vpop.f32.mrf.mxu0
      %v1173 = vadd.f32 %v1084, %v1172
      %1174 = vmatmul.bf16.gmra.mxu0 %v584
      %v1175 = vpop.f32.mrf.mxu0
      %v1176 = vadd.f32 %v1087, %v1175
      %v1177 = vpop.f32.mrf.mxu0
      %v1178 = vadd.f32 %v1089, %v1177
      %1179 = vmatmul.bf16.gmra.mxu0 %v596
      %v1180 = vpop.f32.mrf.mxu0
      %v1181 = vadd.f32 %v1092, %v1180
      %v1182 = vpop.f32.mrf.mxu0
      %v1183 = vadd.f32 %v1094, %v1182
      %1184 = vmatmul.bf16.gmra.mxu0 %v608
      %v1185 = vpop.f32.mrf.mxu0
      %v1186 = vadd.f32 %v1097, %v1185
      %v1187 = vpop.f32.mrf.mxu0
      %v1188 = vadd.f32 %v1099, %v1187
      %1189 = vmatmul.bf16.gmra.mxu0 %v620
      %v1190 = vpop.f32.mrf.mxu0
      %v1191 = vadd.f32 %v1102, %v1190
      %v1192 = vpop.f32.mrf.mxu0
      %v1193 = vadd.f32 %v1104, %v1192
      %1194 = vmatmul.bf16.gmra.mxu0 %v632
      %v1195 = vpop.f32.mrf.mxu0
      %v1196 = vadd.f32 %v1107, %v1195
      %v1197 = vpop.f32.mrf.mxu0
      %v1198 = vadd.f32 %v1109, %v1197
      %1199 = vmatmul.bf16.gmra.mxu0 %v644
      %v1200 = vpop.f32.mrf.mxu0
      %v1201 = vadd.f32 %v1112, %v1200
      %v1202 = vpop.f32.mrf.mxu0
      %v1203 = vadd.f32 %v1114, %v1202
      %1204 = vmatmul.bf16.gmra.mxu0 %v656
      %v1205 = vpop.f32.mrf.mxu0
      %v1206 = vadd.f32 %v1117, %v1205
      %v1207 = vpop.f32.mrf.mxu0
      %v1208 = vadd.f32 %v1119, %v1207
      %1209 = vmatmul.bf16.gmra.mxu0 %v668
      %v1210 = vpop.f32.mrf.mxu0
      %v1211 = vadd.f32 %v1122, %v1210
      %v1212 = vpop.f32.mrf.mxu0
      %v1213 = vadd.f32 %v1124, %v1212
      %1214 = vmatmul.bf16.gmra.mxu0 %v680
      %v1215 = vpop.f32.mrf.mxu0
      %v1216 = vadd.f32 %v1127, %v1215
      %v1217 = vpop.f32.mrf.mxu0
      %v1218 = vadd.f32 %v1129, %v1217
      %1219 = vdwg.mxu0
      %1220 = vmatpush.bf16.msra.mxu0 %v1017
      %1221 = vmatpush.bf16.msra.mxu0 %v1016
      %1222 = vmatpush.bf16.msra.mxu0 %v1015
      %1223 = vmatpush.bf16.msra.mxu0 %v1014
      %1224 = vmatpush.bf16.msra.mxu0 %v1013
      %1225 = vmatpush.bf16.msra.mxu0 %v1012
      %1226 = vmatpush.bf16.msra.mxu0 %v1011
      %1227 = vmatpush.bf16.msra.mxu0 %v1010
      %1228 = vmatmul.bf16.gmra.mxu0 %v780
      %v1229 = vpop.f32.mrf.mxu0
      %v1230 = vadd.f32 %v1141, %v1229
      %v1231 = vpop.f32.mrf.mxu0
      %v1232 = vadd.f32 %v1143, %v1231
      %1233 = vmatmul.bf16.gmra.mxu0 %v783
      %v1234 = vpop.f32.mrf.mxu0
      %v1235 = vadd.f32 %v1146, %v1234
      %v1236 = vpop.f32.mrf.mxu0
      %v1237 = vadd.f32 %v1148, %v1236
      %1238 = vmatmul.bf16.gmra.mxu0 %v786
      %v1239 = vpop.f32.mrf.mxu0
      %v1240 = vadd.f32 %v1151, %v1239
      %v1241 = vpop.f32.mrf.mxu0
      %v1242 = vadd.f32 %v1153, %v1241
      %1243 = vmatmul.bf16.gmra.mxu0 %v789
      %v1244 = vpop.f32.mrf.mxu0
      %v1245 = vadd.f32 %v1156, %v1244
      %v1246 = vpop.f32.mrf.mxu0
      %v1247 = vadd.f32 %v1158, %v1246
      %1248 = vmatmul.bf16.gmra.mxu0 %v792
      %v1249 = vpop.f32.mrf.mxu0
      %v1250 = vadd.f32 %v1161, %v1249
      %v1251 = vpop.f32.mrf.mxu0
      %v1252 = vadd.f32 %v1163, %v1251
      %1253 = vmatmul.bf16.gmra.mxu0 %v795
      %v1254 = vpop.f32.mrf.mxu0
      %v1255 = vadd.f32 %v1166, %v1254
      %v1256 = vpop.f32.mrf.mxu0
      %v1257 = vadd.f32 %v1168, %v1256
      %1258 = vmatmul.bf16.gmra.mxu0 %v798
      %v1259 = vpop.f32.mrf.mxu0
      %v1260 = vadd.f32 %v1171, %v1259
      %v1261 = vpop.f32.mrf.mxu0
      %v1262 = vadd.f32 %v1173, %v1261
      %1263 = vmatmul.bf16.gmra.mxu0 %v801
      %v1264 = vpop.f32.mrf.mxu0
      %v1265 = vadd.f32 %v1176, %v1264
      %v1266 = vpop.f32.mrf.mxu0
      %v1267 = vadd.f32 %v1178, %v1266
      %1268 = vmatmul.bf16.gmra.mxu0 %v804
      %v1269 = vpop.f32.mrf.mxu0
      %v1270 = vadd.f32 %v1181, %v1269
      %v1271 = vpop.f32.mrf.mxu0
      %v1272 = vadd.f32 %v1183, %v1271
      %1273 = vmatmul.bf16.gmra.mxu0 %v807
      %v1274 = vpop.f32.mrf.mxu0
      %v1275 = vadd.f32 %v1186, %v1274
      %v1276 = vpop.f32.mrf.mxu0
      %v1277 = vadd.f32 %v1188, %v1276
      %1278 = vmatmul.bf16.gmra.mxu0 %v810
      %v1279 = vpop.f32.mrf.mxu0
      %v1280 = vadd.f32 %v1191, %v1279
      %v1281 = vpop.f32.mrf.mxu0
      %v1282 = vadd.f32 %v1193, %v1281
      %1283 = vmatmul.bf16.gmra.mxu0 %v813
      %v1284 = vpop.f32.mrf.mxu0
      %v1285 = vadd.f32 %v1196, %v1284
      %v1286 = vpop.f32.mrf.mxu0
      %v1287 = vadd.f32 %v1198, %v1286
      %1288 = vmatmul.bf16.gmra.mxu0 %v816
      %v1289 = vpop.f32.mrf.mxu0
      %v1290 = vadd.f32 %v1201, %v1289
      %v1291 = vpop.f32.mrf.mxu0
      %v1292 = vadd.f32 %v1203, %v1291
      %1293 = vmatmul.bf16.gmra.mxu0 %v819
      %v1294 = vpop.f32.mrf.mxu0
      %v1295 = vadd.f32 %v1206, %v1294
      %v1296 = vpop.f32.mrf.mxu0
      %v1297 = vadd.f32 %v1208, %v1296
      %1298 = vmatmul.bf16.gmra.mxu0 %v822
      %v1299 = vpop.f32.mrf.mxu0
      %v1300 = vadd.f32 %v1211, %v1299
      %v1301 = vpop.f32.mrf.mxu0
      %v1302 = vadd.f32 %v1213, %v1301
      %1303 = vmatmul.bf16.gmra.mxu0 %v825
      %v1304 = vpop.f32.mrf.mxu0
      %v1305 = vadd.f32 %v1216, %v1304
      %v1306 = vpop.f32.mrf.mxu0
      %v1307 = vadd.f32 %v1218, %v1306
      %1308 = vdwg.mxu0
      %1309 = vst [vmem:[%s240] sm:$0xff] %v1230
      %1310 = vst [vmem:[%s240 + $0x8] sm:$0xff] %v1232
      %1311 = vst [vmem:[%s240 + $0x10] sm:$0xff] %v1235
      %1312 = vst [vmem:[%s240 + $0x18] sm:$0xff] %v1237
      %1313 = vst [vmem:[%s240 + $0x20] sm:$0xff] %v1240
      %1314 = vst [vmem:[%s240 + $0x28] sm:$0xff] %v1242
      %1315 = vst [vmem:[%s240 + $0x30] sm:$0xff] %v1245
      %1316 = vst [vmem:[%s240 + $0x38] sm:$0xff] %v1247
      %1317 = vst [vmem:[%s240 + $0x40] sm:$0xff] %v1250
      %1318 = vst [vmem:[%s240 + $0x48] sm:$0xff] %v1252
      %1319 = vst [vmem:[%s240 + $0x50] sm:$0xff] %v1255
      %1320 = vst [vmem:[%s240 + $0x58] sm:$0xff] %v1257
      %1321 = vst [vmem:[%s240 + $0x60] sm:$0xff] %v1260
      %1322 = vst [vmem:[%s240 + $0x68] sm:$0xff] %v1262
      %1323 = vst [vmem:[%s240 + $0x70] sm:$0xff] %v1265
      %1324 = vst [vmem:[%s240 + $0x78] sm:$0xff] %v1267
      %1325 = vst [vmem:[%s240 + $0x80] sm:$0xff] %v1270
      %1326 = vst [vmem:[%s240 + $0x88] sm:$0xff] %v1272
      %1327 = vst [vmem:[%s240 + $0x90] sm:$0xff] %v1275
      %1328 = vst [vmem:[%s240 + $0x98] sm:$0xff] %v1277
      %1329 = vst [vmem:[%s240 + $0xa0] sm:$0xff] %v1280
      %1330 = vst [vmem:[%s240 + $0xa8] sm:$0xff] %v1282
      %1331 = vst [vmem:[%s240 + $0xb0] sm:$0xff] %v1285
      %1332 = vst [vmem:[%s240 + $0xb8] sm:$0xff] %v1287
      %1333 = vst [vmem:[%s240 + $0xc0] sm:$0xff] %v1290
      %1334 = vst [vmem:[%s240 + $0xc8] sm:$0xff] %v1292
      %1335 = vst [vmem:[%s240 + $0xd0] sm:$0xff] %v1295
      %1336 = vst [vmem:[%s240 + $0xd8] sm:$0xff] %v1297
      %1337 = vst [vmem:[%s240 + $0xe0] sm:$0xff] %v1300
      %1338 = vst [vmem:[%s240 + $0xe8] sm:$0xff] %v1302
      %1339 = vst [vmem:[%s240 + $0xf0] sm:$0xff] %v1305
      %1340 = vst [vmem:[%s240 + $0xf8] sm:$0xff] %v1307
      %v1341 = vld [vmem:[%s240] sm:$0xff]
      %v1342 = vld [vmem:[%s240 + $0x8] sm:$0xff]
      %v1343 = vld [vmem:[%s240 + $0x10] sm:$0xff]
      %v1344 = vld [vmem:[%s240 + $0x18] sm:$0xff]
      %v1345 = vld [vmem:[%s240 + $0x20] sm:$0xff]
      %v1346 = vld [vmem:[%s240 + $0x28] sm:$0xff]
      %v1347 = vld [vmem:[%s240 + $0x30] sm:$0xff]
      %v1348 = vld [vmem:[%s240 + $0x38] sm:$0xff]
      %v1349 = vld [vmem:[%s240 + $0x40] sm:$0xff]
      %v1350 = vld [vmem:[%s240 + $0x48] sm:$0xff]
      %v1351 = vld [vmem:[%s240 + $0x50] sm:$0xff]
      %v1352 = vld [vmem:[%s240 + $0x58] sm:$0xff]
      %v1353 = vld [vmem:[%s240 + $0x60] sm:$0xff]
      %v1354 = vld [vmem:[%s240 + $0x68] sm:$0xff]
      %v1355 = vld [vmem:[%s240 + $0x70] sm:$0xff]
      %v1356 = vld [vmem:[%s240 + $0x78] sm:$0xff]
      %v1357 = vld [vmem:[%s240 + $0x80] sm:$0xff]
      %v1358 = vld [vmem:[%s240 + $0x88] sm:$0xff]
      %v1359 = vld [vmem:[%s240 + $0x90] sm:$0xff]
      %v1360 = vld [vmem:[%s240 + $0x98] sm:$0xff]
      %v1361 = vld [vmem:[%s240 + $0xa0] sm:$0xff]
      %v1362 = vld [vmem:[%s240 + $0xa8] sm:$0xff]
      %v1363 = vld [vmem:[%s240 + $0xb0] sm:$0xff]
      %v1364 = vld [vmem:[%s240 + $0xb8] sm:$0xff]
      %v1365 = vld [vmem:[%s240 + $0xc0] sm:$0xff]
      %v1366 = vld [vmem:[%s240 + $0xc8] sm:$0xff]
      %v1367 = vld [vmem:[%s240 + $0xd0] sm:$0xff]
      %v1368 = vld [vmem:[%s240 + $0xd8] sm:$0xff]
      %v1369 = vld [vmem:[%s240 + $0xe0] sm:$0xff]
      %v1370 = vld [vmem:[%s240 + $0xe8] sm:$0xff]
      %v1371 = vld [vmem:[%s240 + $0xf0] sm:$0xff]
      %v1372 = vld [vmem:[%s240 + $0xf8] sm:$0xff]
      %s1373 = scalar_lea.vmem %s1, 192
      %v1374 = vld [vmem:[%s1373] sm:$0xf]
      %v1375 = vld [vmem:[%s1373 + $0x4] sm:$0xf]
      %v1376 = vld [vmem:[%s1373 + $0x8] sm:$0xf]
      %v1377 = vld [vmem:[%s1373 + $0xc] sm:$0xf]
      %v1378 = vld [vmem:[%s1373 + $0x10] sm:$0xf]
      %v1379 = vld [vmem:[%s1373 + $0x14] sm:$0xf]
      %v1380 = vld [vmem:[%s1373 + $0x18] sm:$0xf]
      %v1381 = vld [vmem:[%s1373 + $0x1c] sm:$0xf]
      %v1382 = vld [vmem:[%s1373 + $0x20] sm:$0xf]
      %v1383 = vld [vmem:[%s1373 + $0x24] sm:$0xf]
      %v1384 = vld [vmem:[%s1373 + $0x28] sm:$0xf]
      %v1385 = vld [vmem:[%s1373 + $0x2c] sm:$0xf]
      %v1386 = vld [vmem:[%s1373 + $0x30] sm:$0xf]
      %v1387 = vld [vmem:[%s1373 + $0x34] sm:$0xf]
      %v1388 = vld [vmem:[%s1373 + $0x38] sm:$0xf]
      %v1389 = vld [vmem:[%s1373 + $0x3c] sm:$0xf]
      %v1390 = vld [vmem:[%s1373 + $0x40] sm:$0xf]
      %v1391 = vld [vmem:[%s1373 + $0x44] sm:$0xf]
      %v1392 = vld [vmem:[%s1373 + $0x48] sm:$0xf]
      %v1393 = vld [vmem:[%s1373 + $0x4c] sm:$0xf]
      %v1394 = vld [vmem:[%s1373 + $0x50] sm:$0xf]
      %v1395 = vld [vmem:[%s1373 + $0x54] sm:$0xf]
      %v1396 = vld [vmem:[%s1373 + $0x58] sm:$0xf]
      %v1397 = vld [vmem:[%s1373 + $0x5c] sm:$0xf]
      %v1398 = vld [vmem:[%s1373 + $0x60] sm:$0xf]
      %v1399 = vld [vmem:[%s1373 + $0x64] sm:$0xf]
      %v1400 = vld [vmem:[%s1373 + $0x68] sm:$0xf]
      %v1401 = vld [vmem:[%s1373 + $0x6c] sm:$0xf]
      %v1402 = vld [vmem:[%s1373 + $0x70] sm:$0xf]
      %v1403 = vld [vmem:[%s1373 + $0x74] sm:$0xf]
      %v1404 = vld [vmem:[%s1373 + $0x78] sm:$0xf]
      %v1405 = vld [vmem:[%s1373 + $0x7c] sm:$0xf]
      %v1406 = vld [vmem:[%s1373 + $0x80] sm:$0xf]
      %v1407 = vld [vmem:[%s1373 + $0x84] sm:$0xf]
      %v1408 = vld [vmem:[%s1373 + $0x88] sm:$0xf]
      %v1409 = vld [vmem:[%s1373 + $0x8c] sm:$0xf]
      %v1410 = vld [vmem:[%s1373 + $0x90] sm:$0xf]
      %v1411 = vld [vmem:[%s1373 + $0x94] sm:$0xf]
      %v1412 = vld [vmem:[%s1373 + $0x98] sm:$0xf]
      %v1413 = vld [vmem:[%s1373 + $0x9c] sm:$0xf]
      %v1414 = vld [vmem:[%s1373 + $0xa0] sm:$0xf]
      %v1415 = vld [vmem:[%s1373 + $0xa4] sm:$0xf]
      %v1416 = vld [vmem:[%s1373 + $0xa8] sm:$0xf]
      %v1417 = vld [vmem:[%s1373 + $0xac] sm:$0xf]
      %v1418 = vld [vmem:[%s1373 + $0xb0] sm:$0xf]
      %v1419 = vld [vmem:[%s1373 + $0xb4] sm:$0xf]
      %v1420 = vld [vmem:[%s1373 + $0xb8] sm:$0xf]
      %v1421 = vld [vmem:[%s1373 + $0xbc] sm:$0xf]
      %v1470 = vunpack.c.l.b16 %v1374
      %v1471 = vunpack.c.l.b16 %v1375
      %v1472 = vunpack.c.l.b16 %v1376
      %v1473 = vunpack.c.l.b16 %v1377
      %v1474 = vunpack.c.l.b16 %v1378
      %v1475 = vunpack.c.l.b16 %v1379
      %v1476 = vunpack.c.l.b16 %v1380
      %v1477 = vunpack.c.l.b16 %v1381
      %v1478 = vunpack.c.l.b16 %v1382
      %v1479 = vunpack.c.l.b16 %v1383
      %v1480 = vunpack.c.l.b16 %v1384
      %v1481 = vunpack.c.l.b16 %v1385
      %v1482 = vunpack.c.l.b16 %v1386
      %v1483 = vunpack.c.l.b16 %v1387
      %v1484 = vunpack.c.l.b16 %v1388
      %v1485 = vunpack.c.l.b16 %v1389
      %v1486 = vunpack.c.l.b16 %v1390
      %v1487 = vunpack.c.l.b16 %v1391
      %v1488 = vunpack.c.l.b16 %v1392
      %v1489 = vunpack.c.l.b16 %v1393
      %v1490 = vunpack.c.l.b16 %v1394
      %v1491 = vunpack.c.l.b16 %v1395
      %v1492 = vunpack.c.l.b16 %v1396
      %v1493 = vunpack.c.l.b16 %v1397
      %v1494 = vunpack.c.l.b16 %v1398
      %v1495 = vunpack.c.l.b16 %v1399
      %v1496 = vunpack.c.l.b16 %v1400
      %v1497 = vunpack.c.l.b16 %v1401
      %v1498 = vunpack.c.l.b16 %v1402
      %v1499 = vunpack.c.l.b16 %v1403
      %v1500 = vunpack.c.l.b16 %v1404
      %v1501 = vunpack.c.l.b16 %v1405
      %v1502 = vunpack.c.l.b16 %v1406
      %v1503 = vunpack.c.l.b16 %v1407
      %v1504 = vunpack.c.l.b16 %v1408
      %v1505 = vunpack.c.l.b16 %v1409
      %v1506 = vunpack.c.l.b16 %v1410
      %v1507 = vunpack.c.l.b16 %v1411
      %v1508 = vunpack.c.l.b16 %v1412
      %v1509 = vunpack.c.l.b16 %v1413
      %v1510 = vunpack.c.l.b16 %v1414
      %v1511 = vunpack.c.l.b16 %v1415
      %v1512 = vunpack.c.l.b16 %v1416
      %v1513 = vunpack.c.l.b16 %v1417
      %v1514 = vunpack.c.l.b16 %v1418
      %v1515 = vunpack.c.l.b16 %v1419
      %v1516 = vunpack.c.l.b16 %v1420
      %v1517 = vunpack.c.l.b16 %v1421
      %v1518 = vpack.c.b16 %v1471, %v1470
      %v1519 = vpack.c.b16 %v1473, %v1472
      %v1520 = vpack.c.b16 %v1475, %v1474
      %v1521 = vpack.c.b16 %v1477, %v1476
      %v1522 = vpack.c.b16 %v1479, %v1478
      %v1523 = vpack.c.b16 %v1481, %v1480
      %v1524 = vpack.c.b16 %v1483, %v1482
      %v1525 = vpack.c.b16 %v1485, %v1484
      %v1526 = vpack.c.b16 %v1487, %v1486
      %v1527 = vpack.c.b16 %v1489, %v1488
      %v1528 = vpack.c.b16 %v1491, %v1490
      %v1529 = vpack.c.b16 %v1493, %v1492
      %v1530 = vpack.c.b16 %v1495, %v1494
      %v1531 = vpack.c.b16 %v1497, %v1496
      %v1532 = vpack.c.b16 %v1499, %v1498
      %v1533 = vpack.c.b16 %v1501, %v1500
      %v1534 = vpack.c.b16 %v1503, %v1502
      %v1535 = vpack.c.b16 %v1505, %v1504
      %v1536 = vpack.c.b16 %v1507, %v1506
      %v1537 = vpack.c.b16 %v1509, %v1508
      %v1538 = vpack.c.b16 %v1511, %v1510
      %v1539 = vpack.c.b16 %v1513, %v1512
      %v1540 = vpack.c.b16 %v1515, %v1514
      %v1541 = vpack.c.b16 %v1517, %v1516
      %1566 = vmatpush.bf16.msra.mxu0 %v1525
      %1567 = vmatpush.bf16.msra.mxu0 %v1524
      %1568 = vmatpush.bf16.msra.mxu0 %v1523
      %1569 = vmatpush.bf16.msra.mxu0 %v1522
      %1570 = vmatpush.bf16.msra.mxu0 %v1521
      %1571 = vmatpush.bf16.msra.mxu0 %v1520
      %1572 = vmatpush.bf16.msra.mxu0 %v1519
      %1573 = vmatpush.bf16.msra.mxu0 %v1518
      %1574 = vmatmul.bf16.gmra.mxu0 %v399
      %v1575 = vpop.f32.mrf.mxu0
      %v1576 = vadd.f32 0.0, %v1575
      %v1577 = vpop.f32.mrf.mxu0
      %v1578 = vadd.f32 0.0, %v1577
      %1579 = vmatmul.bf16.gmra.mxu0 %v400
      %v1580 = vpop.f32.mrf.mxu0
      %v1581 = vadd.f32 0.0, %v1580
      %v1582 = vpop.f32.mrf.mxu0
      %v1583 = vadd.f32 0.0, %v1582
      %1584 = vmatmul.bf16.gmra.mxu0 %v401
      %v1585 = vpop.f32.mrf.mxu0
      %v1586 = vadd.f32 0.0, %v1585
      %v1587 = vpop.f32.mrf.mxu0
      %v1588 = vadd.f32 0.0, %v1587
      %1589 = vmatmul.bf16.gmra.mxu0 %v402
      %v1590 = vpop.f32.mrf.mxu0
      %v1591 = vadd.f32 0.0, %v1590
      %v1592 = vpop.f32.mrf.mxu0
      %v1593 = vadd.f32 0.0, %v1592
      %1594 = vmatmul.bf16.gmra.mxu0 %v403
      %v1595 = vpop.f32.mrf.mxu0
      %v1596 = vadd.f32 0.0, %v1595
      %v1597 = vpop.f32.mrf.mxu0
      %v1598 = vadd.f32 0.0, %v1597
      %1599 = vmatmul.bf16.gmra.mxu0 %v404
      %v1600 = vpop.f32.mrf.mxu0
      %v1601 = vadd.f32 0.0, %v1600
      %v1602 = vpop.f32.mrf.mxu0
      %v1603 = vadd.f32 0.0, %v1602
      %1604 = vmatmul.bf16.gmra.mxu0 %v405
      %v1605 = vpop.f32.mrf.mxu0
      %v1606 = vadd.f32 0.0, %v1605
      %v1607 = vpop.f32.mrf.mxu0
      %v1608 = vadd.f32 0.0, %v1607
      %1609 = vmatmul.bf16.gmra.mxu0 %v406
      %v1610 = vpop.f32.mrf.mxu0
      %v1611 = vadd.f32 0.0, %v1610
      %v1612 = vpop.f32.mrf.mxu0
      %v1613 = vadd.f32 0.0, %v1612
      %1614 = vmatmul.bf16.gmra.mxu0 %v407
      %v1615 = vpop.f32.mrf.mxu0
      %v1616 = vadd.f32 0.0, %v1615
      %v1617 = vpop.f32.mrf.mxu0
      %v1618 = vadd.f32 0.0, %v1617
      %1619 = vmatmul.bf16.gmra.mxu0 %v408
      %v1620 = vpop.f32.mrf.mxu0
      %v1621 = vadd.f32 0.0, %v1620
      %v1622 = vpop.f32.mrf.mxu0
      %v1623 = vadd.f32 0.0, %v1622
      %1624 = vmatmul.bf16.gmra.mxu0 %v409
      %v1625 = vpop.f32.mrf.mxu0
      %v1626 = vadd.f32 0.0, %v1625
      %v1627 = vpop.f32.mrf.mxu0
      %v1628 = vadd.f32 0.0, %v1627
      %1629 = vmatmul.bf16.gmra.mxu0 %v410
      %v1630 = vpop.f32.mrf.mxu0
      %v1631 = vadd.f32 0.0, %v1630
      %v1632 = vpop.f32.mrf.mxu0
      %v1633 = vadd.f32 0.0, %v1632
      %1634 = vmatmul.bf16.gmra.mxu0 %v411
      %v1635 = vpop.f32.mrf.mxu0
      %v1636 = vadd.f32 0.0, %v1635
      %v1637 = vpop.f32.mrf.mxu0
      %v1638 = vadd.f32 0.0, %v1637
      %1639 = vmatmul.bf16.gmra.mxu0 %v412
      %v1640 = vpop.f32.mrf.mxu0
      %v1641 = vadd.f32 0.0, %v1640
      %v1642 = vpop.f32.mrf.mxu0
      %v1643 = vadd.f32 0.0, %v1642
      %1644 = vmatmul.bf16.gmra.mxu0 %v413
      %v1645 = vpop.f32.mrf.mxu0
      %v1646 = vadd.f32 0.0, %v1645
      %v1647 = vpop.f32.mrf.mxu0
      %v1648 = vadd.f32 0.0, %v1647
      %1649 = vmatmul.bf16.gmra.mxu0 %v414
      %v1650 = vpop.f32.mrf.mxu0
      %v1651 = vadd.f32 0.0, %v1650
      %v1652 = vpop.f32.mrf.mxu0
      %v1653 = vadd.f32 0.0, %v1652
      %1654 = vdwg.mxu0
      %1655 = vmatpush.bf16.msra.mxu0 %v1533
      %1656 = vmatpush.bf16.msra.mxu0 %v1532
      %1657 = vmatpush.bf16.msra.mxu0 %v1531
      %1658 = vmatpush.bf16.msra.mxu0 %v1530
      %1659 = vmatpush.bf16.msra.mxu0 %v1529
      %1660 = vmatpush.bf16.msra.mxu0 %v1528
      %1661 = vmatpush.bf16.msra.mxu0 %v1527
      %1662 = vmatpush.bf16.msra.mxu0 %v1526
      %1663 = vmatmul.bf16.gmra.mxu0 %v512
      %v1664 = vpop.f32.mrf.mxu0
      %v1665 = vadd.f32 %v1576, %v1664
      %v1666 = vpop.f32.mrf.mxu0
      %v1667 = vadd.f32 %v1578, %v1666
      %1668 = vmatmul.bf16.gmra.mxu0 %v524
      %v1669 = vpop.f32.mrf.mxu0
      %v1670 = vadd.f32 %v1581, %v1669
      %v1671 = vpop.f32.mrf.mxu0
      %v1672 = vadd.f32 %v1583, %v1671
      %1673 = vmatmul.bf16.gmra.mxu0 %v536
      %v1674 = vpop.f32.mrf.mxu0
      %v1675 = vadd.f32 %v1586, %v1674
      %v1676 = vpop.f32.mrf.mxu0
      %v1677 = vadd.f32 %v1588, %v1676
      %1678 = vmatmul.bf16.gmra.mxu0 %v548
      %v1679 = vpop.f32.mrf.mxu0
      %v1680 = vadd.f32 %v1591, %v1679
      %v1681 = vpop.f32.mrf.mxu0
      %v1682 = vadd.f32 %v1593, %v1681
      %1683 = vmatmul.bf16.gmra.mxu0 %v560
      %v1684 = vpop.f32.mrf.mxu0
      %v1685 = vadd.f32 %v1596, %v1684
      %v1686 = vpop.f32.mrf.mxu0
      %v1687 = vadd.f32 %v1598, %v1686
      %1688 = vmatmul.bf16.gmra.mxu0 %v572
      %v1689 = vpop.f32.mrf.mxu0
      %v1690 = vadd.f32 %v1601, %v1689
      %v1691 = vpop.f32.mrf.mxu0
      %v1692 = vadd.f32 %v1603, %v1691
      %1693 = vmatmul.bf16.gmra.mxu0 %v584
      %v1694 = vpop.f32.mrf.mxu0
      %v1695 = vadd.f32 %v1606, %v1694
      %v1696 = vpop.f32.mrf.mxu0
      %v1697 = vadd.f32 %v1608, %v1696
      %1698 = vmatmul.bf16.gmra.mxu0 %v596
      %v1699 = vpop.f32.mrf.mxu0
      %v1700 = vadd.f32 %v1611, %v1699
      %v1701 = vpop.f32.mrf.mxu0
      %v1702 = vadd.f32 %v1613, %v1701
      %1703 = vmatmul.bf16.gmra.mxu0 %v608
      %v1704 = vpop.f32.mrf.mxu0
      %v1705 = vadd.f32 %v1616, %v1704
      %v1706 = vpop.f32.mrf.mxu0
      %v1707 = vadd.f32 %v1618, %v1706
      %1708 = vmatmul.bf16.gmra.mxu0 %v620
      %v1709 = vpop.f32.mrf.mxu0
      %v1710 = vadd.f32 %v1621, %v1709
      %v1711 = vpop.f32.mrf.mxu0
      %v1712 = vadd.f32 %v1623, %v1711
      %1713 = vmatmul.bf16.gmra.mxu0 %v632
      %v1714 = vpop.f32.mrf.mxu0
      %v1715 = vadd.f32 %v1626, %v1714
      %v1716 = vpop.f32.mrf.mxu0
      %v1717 = vadd.f32 %v1628, %v1716
      %1718 = vmatmul.bf16.gmra.mxu0 %v644
      %v1719 = vpop.f32.mrf.mxu0
      %v1720 = vadd.f32 %v1631, %v1719
      %v1721 = vpop.f32.mrf.mxu0
      %v1722 = vadd.f32 %v1633, %v1721
      %1723 = vmatmul.bf16.gmra.mxu0 %v656
      %v1724 = vpop.f32.mrf.mxu0
      %v1725 = vadd.f32 %v1636, %v1724
      %v1726 = vpop.f32.mrf.mxu0
      %v1727 = vadd.f32 %v1638, %v1726
      %1728 = vmatmul.bf16.gmra.mxu0 %v668
      %v1729 = vpop.f32.mrf.mxu0
      %v1730 = vadd.f32 %v1641, %v1729
      %v1731 = vpop.f32.mrf.mxu0
      %v1732 = vadd.f32 %v1643, %v1731
      %1733 = vmatmul.bf16.gmra.mxu0 %v680
      %v1734 = vpop.f32.mrf.mxu0
      %v1735 = vadd.f32 %v1646, %v1734
      %v1736 = vpop.f32.mrf.mxu0
      %v1737 = vadd.f32 %v1648, %v1736
      %1738 = vmatmul.bf16.gmra.mxu0 %v692
      %v1739 = vpop.f32.mrf.mxu0
      %v1740 = vadd.f32 %v1651, %v1739
      %v1741 = vpop.f32.mrf.mxu0
      %v1742 = vadd.f32 %v1653, %v1741
      %1743 = vdwg.mxu0
      %1744 = vmatpush.bf16.msra.mxu0 %v1541
      %1745 = vmatpush.bf16.msra.mxu0 %v1540
      %1746 = vmatpush.bf16.msra.mxu0 %v1539
      %1747 = vmatpush.bf16.msra.mxu0 %v1538
      %1748 = vmatpush.bf16.msra.mxu0 %v1537
      %1749 = vmatpush.bf16.msra.mxu0 %v1536
      %1750 = vmatpush.bf16.msra.mxu0 %v1535
      %1751 = vmatpush.bf16.msra.mxu0 %v1534
      %1752 = vmatmul.bf16.gmra.mxu0 %v783
      %v1753 = vpop.f32.mrf.mxu0
      %v1754 = vadd.f32 %v1665, %v1753
      %v1755 = vpop.f32.mrf.mxu0
      %v1756 = vadd.f32 %v1667, %v1755
      %1757 = vmatmul.bf16.gmra.mxu0 %v786
      %v1758 = vpop.f32.mrf.mxu0
      %v1759 = vadd.f32 %v1670, %v1758
      %v1760 = vpop.f32.mrf.mxu0
      %v1761 = vadd.f32 %v1672, %v1760
      %1762 = vmatmul.bf16.gmra.mxu0 %v789
      %v1763 = vpop.f32.mrf.mxu0
      %v1764 = vadd.f32 %v1675, %v1763
      %v1765 = vpop.f32.mrf.mxu0
      %v1766 = vadd.f32 %v1677, %v1765
      %1767 = vmatmul.bf16.gmra.mxu0 %v792
      %v1768 = vpop.f32.mrf.mxu0
      %v1769 = vadd.f32 %v1680, %v1768
      %v1770 = vpop.f32.mrf.mxu0
      %v1771 = vadd.f32 %v1682, %v1770
      %1772 = vmatmul.bf16.gmra.mxu0 %v795
      %v1773 = vpop.f32.mrf.mxu0
      %v1774 = vadd.f32 %v1685, %v1773
      %v1775 = vpop.f32.mrf.mxu0
      %v1776 = vadd.f32 %v1687, %v1775
      %1777 = vmatmul.bf16.gmra.mxu0 %v798
      %v1778 = vpop.f32.mrf.mxu0
      %v1779 = vadd.f32 %v1690, %v1778
      %v1780 = vpop.f32.mrf.mxu0
      %v1781 = vadd.f32 %v1692, %v1780
      %1782 = vmatmul.bf16.gmra.mxu0 %v801
      %v1783 = vpop.f32.mrf.mxu0
      %v1784 = vadd.f32 %v1695, %v1783
      %v1785 = vpop.f32.mrf.mxu0
      %v1786 = vadd.f32 %v1697, %v1785
      %1787 = vmatmul.bf16.gmra.mxu0 %v804
      %v1788 = vpop.f32.mrf.mxu0
      %v1789 = vadd.f32 %v1700, %v1788
      %v1790 = vpop.f32.mrf.mxu0
      %v1791 = vadd.f32 %v1702, %v1790
      %1792 = vmatmul.bf16.gmra.mxu0 %v807
      %v1793 = vpop.f32.mrf.mxu0
      %v1794 = vadd.f32 %v1705, %v1793
      %v1795 = vpop.f32.mrf.mxu0
      %v1796 = vadd.f32 %v1707, %v1795
      %1797 = vmatmul.bf16.gmra.mxu0 %v810
      %v1798 = vpop.f32.mrf.mxu0
      %v1799 = vadd.f32 %v1710, %v1798
      %v1800 = vpop.f32.mrf.mxu0
      %v1801 = vadd.f32 %v1712, %v1800
      %1802 = vmatmul.bf16.gmra.mxu0 %v813
      %v1803 = vpop.f32.mrf.mxu0
      %v1804 = vadd.f32 %v1715, %v1803
      %v1805 = vpop.f32.mrf.mxu0
      %v1806 = vadd.f32 %v1717, %v1805
      %1807 = vmatmul.bf16.gmra.mxu0 %v816
      %v1808 = vpop.f32.mrf.mxu0
      %v1809 = vadd.f32 %v1720, %v1808
      %v1810 = vpop.f32.mrf.mxu0
      %v1811 = vadd.f32 %v1722, %v1810
      %1812 = vmatmul.bf16.gmra.mxu0 %v819
      %v1813 = vpop.f32.mrf.mxu0
      %v1814 = vadd.f32 %v1725, %v1813
      %v1815 = vpop.f32.mrf.mxu0
      %v1816 = vadd.f32 %v1727, %v1815
      %1817 = vmatmul.bf16.gmra.mxu0 %v822
      %v1818 = vpop.f32.mrf.mxu0
      %v1819 = vadd.f32 %v1730, %v1818
      %v1820 = vpop.f32.mrf.mxu0
      %v1821 = vadd.f32 %v1732, %v1820
      %1822 = vmatmul.bf16.gmra.mxu0 %v825
      %v1823 = vpop.f32.mrf.mxu0
      %v1824 = vadd.f32 %v1735, %v1823
      %v1825 = vpop.f32.mrf.mxu0
      %v1826 = vadd.f32 %v1737, %v1825
      %1827 = vmatmul.bf16.gmra.mxu0 %v828
      %v1828 = vpop.f32.mrf.mxu0
      %v1829 = vadd.f32 %v1740, %v1828
      %v1830 = vpop.f32.mrf.mxu0
      %v1831 = vadd.f32 %v1742, %v1830
      %1832 = vdwg.mxu0
      %v1833 = vadd.f32 %v1341, %v1754
      %v1834 = vadd.f32 %v1342, %v1756
      %v1835 = vadd.f32 %v1343, %v1759
      %v1836 = vadd.f32 %v1344, %v1761
      %v1837 = vadd.f32 %v1345, %v1764
      %v1838 = vadd.f32 %v1346, %v1766
      %v1839 = vadd.f32 %v1347, %v1769
      %v1840 = vadd.f32 %v1348, %v1771
      %v1841 = vadd.f32 %v1349, %v1774
      %v1842 = vadd.f32 %v1350, %v1776
      %v1843 = vadd.f32 %v1351, %v1779
      %v1844 = vadd.f32 %v1352, %v1781
      %v1845 = vadd.f32 %v1353, %v1784
      %v1846 = vadd.f32 %v1354, %v1786
      %v1847 = vadd.f32 %v1355, %v1789
      %v1848 = vadd.f32 %v1356, %v1791
      %v1849 = vadd.f32 %v1357, %v1794
      %v1850 = vadd.f32 %v1358, %v1796
      %v1851 = vadd.f32 %v1359, %v1799
      %v1852 = vadd.f32 %v1360, %v1801
      %v1853 = vadd.f32 %v1361, %v1804
      %v1854 = vadd.f32 %v1362, %v1806
      %v1855 = vadd.f32 %v1363, %v1809
      %v1856 = vadd.f32 %v1364, %v1811
      %v1857 = vadd.f32 %v1365, %v1814
      %v1858 = vadd.f32 %v1366, %v1816
      %v1859 = vadd.f32 %v1367, %v1819
      %v1860 = vadd.f32 %v1368, %v1821
      %v1861 = vadd.f32 %v1369, %v1824
      %v1862 = vadd.f32 %v1370, %v1826
      %v1863 = vadd.f32 %v1371, %v1829
      %v1864 = vadd.f32 %v1372, %v1831
      %1865 = vst [vmem:[%s240] sm:$0xff] %v1833
      %1866 = vst [vmem:[%s240 + $0x8] sm:$0xff] %v1834
      %1867 = vst [vmem:[%s240 + $0x10] sm:$0xff] %v1835
      %1868 = vst [vmem:[%s240 + $0x18] sm:$0xff] %v1836
      %1869 = vst [vmem:[%s240 + $0x20] sm:$0xff] %v1837
      %1870 = vst [vmem:[%s240 + $0x28] sm:$0xff] %v1838
      %1871 = vst [vmem:[%s240 + $0x30] sm:$0xff] %v1839
      %1872 = vst [vmem:[%s240 + $0x38] sm:$0xff] %v1840
      %1873 = vst [vmem:[%s240 + $0x40] sm:$0xff] %v1841
      %1874 = vst [vmem:[%s240 + $0x48] sm:$0xff] %v1842
      %1875 = vst [vmem:[%s240 + $0x50] sm:$0xff] %v1843
      %1876 = vst [vmem:[%s240 + $0x58] sm:$0xff] %v1844
      %1877 = vst [vmem:[%s240 + $0x60] sm:$0xff] %v1845
      %1878 = vst [vmem:[%s240 + $0x68] sm:$0xff] %v1846
      %1879 = vst [vmem:[%s240 + $0x70] sm:$0xff] %v1847
      %1880 = vst [vmem:[%s240 + $0x78] sm:$0xff] %v1848
      %1881 = vst [vmem:[%s240 + $0x80] sm:$0xff] %v1849
      %1882 = vst [vmem:[%s240 + $0x88] sm:$0xff] %v1850
      %1883 = vst [vmem:[%s240 + $0x90] sm:$0xff] %v1851
      %1884 = vst [vmem:[%s240 + $0x98] sm:$0xff] %v1852
      %1885 = vst [vmem:[%s240 + $0xa0] sm:$0xff] %v1853
      %1886 = vst [vmem:[%s240 + $0xa8] sm:$0xff] %v1854
      %1887 = vst [vmem:[%s240 + $0xb0] sm:$0xff] %v1855
      %1888 = vst [vmem:[%s240 + $0xb8] sm:$0xff] %v1856
      %1889 = vst [vmem:[%s240 + $0xc0] sm:$0xff] %v1857
      %1890 = vst [vmem:[%s240 + $0xc8] sm:$0xff] %v1858
      %1891 = vst [vmem:[%s240 + $0xd0] sm:$0xff] %v1859
      %1892 = vst [vmem:[%s240 + $0xd8] sm:$0xff] %v1860
      %1893 = vst [vmem:[%s240 + $0xe0] sm:$0xff] %v1861
      %1894 = vst [vmem:[%s240 + $0xe8] sm:$0xff] %v1862
      %1895 = vst [vmem:[%s240 + $0xf0] sm:$0xff] %v1863
      %1896 = vst [vmem:[%s240 + $0xf8] sm:$0xff] %v1864
      %v1897 = vld [vmem:[%s240] sm:$0xff]
      %v1898 = vld [vmem:[%s240 + $0x8] sm:$0xff]
      %v1899 = vld [vmem:[%s240 + $0x10] sm:$0xff]
      %v1900 = vld [vmem:[%s240 + $0x18] sm:$0xff]
      %v1901 = vld [vmem:[%s240 + $0x20] sm:$0xff]
      %v1902 = vld [vmem:[%s240 + $0x28] sm:$0xff]
      %v1903 = vld [vmem:[%s240 + $0x30] sm:$0xff]
      %v1904 = vld [vmem:[%s240 + $0x38] sm:$0xff]
      %v1905 = vld [vmem:[%s240 + $0x40] sm:$0xff]
      %v1906 = vld [vmem:[%s240 + $0x48] sm:$0xff]
      %v1907 = vld [vmem:[%s240 + $0x50] sm:$0xff]
      %v1908 = vld [vmem:[%s240 + $0x58] sm:$0xff]
      %v1909 = vld [vmem:[%s240 + $0x60] sm:$0xff]
      %v1910 = vld [vmem:[%s240 + $0x68] sm:$0xff]
      %v1911 = vld [vmem:[%s240 + $0x70] sm:$0xff]
      %v1912 = vld [vmem:[%s240 + $0x78] sm:$0xff]
      %v1913 = vld [vmem:[%s240 + $0x80] sm:$0xff]
      %v1914 = vld [vmem:[%s240 + $0x88] sm:$0xff]
      %v1915 = vld [vmem:[%s240 + $0x90] sm:$0xff]
      %v1916 = vld [vmem:[%s240 + $0x98] sm:$0xff]
      %v1917 = vld [vmem:[%s240 + $0xa0] sm:$0xff]
      %v1918 = vld [vmem:[%s240 + $0xa8] sm:$0xff]
      %v1919 = vld [vmem:[%s240 + $0xb0] sm:$0xff]
      %v1920 = vld [vmem:[%s240 + $0xb8] sm:$0xff]
      %v1921 = vld [vmem:[%s240 + $0xc0] sm:$0xff]
      %v1922 = vld [vmem:[%s240 + $0xc8] sm:$0xff]
      %v1923 = vld [vmem:[%s240 + $0xd0] sm:$0xff]
      %v1924 = vld [vmem:[%s240 + $0xd8] sm:$0xff]
      %v1925 = vld [vmem:[%s240 + $0xe0] sm:$0xff]
      %v1926 = vld [vmem:[%s240 + $0xe8] sm:$0xff]
      %v1927 = vld [vmem:[%s240 + $0xf0] sm:$0xff]
      %v1928 = vld [vmem:[%s240 + $0xf8] sm:$0xff]
      %s1929 = scalar_lea.vmem %s1, 384
      %v1930 = vld [vmem:[%s1929] sm:$0xf]
      %v1931 = vld [vmem:[%s1929 + $0x4] sm:$0xf]
      %v1932 = vld [vmem:[%s1929 + $0x8] sm:$0xf]
      %v1933 = vld [vmem:[%s1929 + $0xc] sm:$0xf]
      %v1934 = vld [vmem:[%s1929 + $0x10] sm:$0xf]
      %v1935 = vld [vmem:[%s1929 + $0x14] sm:$0xf]
      %v1936 = vld [vmem:[%s1929 + $0x18] sm:$0xf]
      %v1937 = vld [vmem:[%s1929 + $0x1c] sm:$0xf]
      %v1938 = vld [vmem:[%s1929 + $0x20] sm:$0xf]
      %v1939 = vld [vmem:[%s1929 + $0x24] sm:$0xf]
      %v1940 = vld [vmem:[%s1929 + $0x28] sm:$0xf]
      %v1941 = vld [vmem:[%s1929 + $0x2c] sm:$0xf]
      %v1942 = vld [vmem:[%s1929 + $0x30] sm:$0xf]
      %v1943 = vld [vmem:[%s1929 + $0x34] sm:$0xf]
      %v1944 = vld [vmem:[%s1929 + $0x38] sm:$0xf]
      %v1945 = vld [vmem:[%s1929 + $0x3c] sm:$0xf]
      %v1946 = vld [vmem:[%s1929 + $0x40] sm:$0xf]
      %v1947 = vld [vmem:[%s1929 + $0x44] sm:$0xf]
      %v1948 = vld [vmem:[%s1929 + $0x48] sm:$0xf]
      %v1949 = vld [vmem:[%s1929 + $0x4c] sm:$0xf]
      %v1950 = vld [vmem:[%s1929 + $0x50] sm:$0xf]
      %v1951 = vld [vmem:[%s1929 + $0x54] sm:$0xf]
      %v1952 = vld [vmem:[%s1929 + $0x58] sm:$0xf]
      %v1953 = vld [vmem:[%s1929 + $0x5c] sm:$0xf]
      %v1954 = vld [vmem:[%s1929 + $0x60] sm:$0xf]
      %v1955 = vld [vmem:[%s1929 + $0x64] sm:$0xf]
      %v1956 = vld [vmem:[%s1929 + $0x68] sm:$0xf]
      %v1957 = vld [vmem:[%s1929 + $0x6c] sm:$0xf]
      %v1958 = vld [vmem:[%s1929 + $0x70] sm:$0xf]
      %v1959 = vld [vmem:[%s1929 + $0x74] sm:$0xf]
      %v1960 = vld [vmem:[%s1929 + $0x78] sm:$0xf]
      %v1961 = vld [vmem:[%s1929 + $0x7c] sm:$0xf]
      %v1962 = vld [vmem:[%s1929 + $0x80] sm:$0xf]
      %v1963 = vld [vmem:[%s1929 + $0x84] sm:$0xf]
      %v1964 = vld [vmem:[%s1929 + $0x88] sm:$0xf]
      %v1965 = vld [vmem:[%s1929 + $0x8c] sm:$0xf]
      %v1966 = vld [vmem:[%s1929 + $0x90] sm:$0xf]
      %v1967 = vld [vmem:[%s1929 + $0x94] sm:$0xf]
      %v1968 = vld [vmem:[%s1929 + $0x98] sm:$0xf]
      %v1969 = vld [vmem:[%s1929 + $0x9c] sm:$0xf]
      %v1970 = vld [vmem:[%s1929 + $0xa0] sm:$0xf]
      %v1971 = vld [vmem:[%s1929 + $0xa4] sm:$0xf]
      %v1972 = vld [vmem:[%s1929 + $0xa8] sm:$0xf]
      %v1973 = vld [vmem:[%s1929 + $0xac] sm:$0xf]
      %v1974 = vld [vmem:[%s1929 + $0xb0] sm:$0xf]
      %v1975 = vld [vmem:[%s1929 + $0xb4] sm:$0xf]
      %v1976 = vld [vmem:[%s1929 + $0xb8] sm:$0xf]
      %v1977 = vld [vmem:[%s1929 + $0xbc] sm:$0xf]
      %v2026 = vunpack.c.l.b16 %v1930
      %v2027 = vunpack.c.l.b16 %v1931
      %v2028 = vunpack.c.l.b16 %v1932
      %v2029 = vunpack.c.l.b16 %v1933
      %v2030 = vunpack.c.l.b16 %v1934
      %v2031 = vunpack.c.l.b16 %v1935
      %v2032 = vunpack.c.l.b16 %v1936
      %v2033 = vunpack.c.l.b16 %v1937
      %v2034 = vunpack.c.l.b16 %v1938
      %v2035 = vunpack.c.l.b16 %v1939
      %v2036 = vunpack.c.l.b16 %v1940
      %v2037 = vunpack.c.l.b16 %v1941
      %v2038 = vunpack.c.l.b16 %v1942
      %v2039 = vunpack.c.l.b16 %v1943
      %v2040 = vunpack.c.l.b16 %v1944
      %v2041 = vunpack.c.l.b16 %v1945
      %v2042 = vunpack.c.l.b16 %v1946
      %v2043 = vunpack.c.l.b16 %v1947
      %v2044 = vunpack.c.l.b16 %v1948
      %v2045 = vunpack.c.l.b16 %v1949
      %v2046 = vunpack.c.l.b16 %v1950
      %v2047 = vunpack.c.l.b16 %v1951
      %v2048 = vunpack.c.l.b16 %v1952
      %v2049 = vunpack.c.l.b16 %v1953
      %v2050 = vunpack.c.l.b16 %v1954
      %v2051 = vunpack.c.l.b16 %v1955
      %v2052 = vunpack.c.l.b16 %v1956
      %v2053 = vunpack.c.l.b16 %v1957
      %v2054 = vunpack.c.l.b16 %v1958
      %v2055 = vunpack.c.l.b16 %v1959
      %v2056 = vunpack.c.l.b16 %v1960
      %v2057 = vunpack.c.l.b16 %v1961
      %v2058 = vunpack.c.l.b16 %v1962
      %v2059 = vunpack.c.l.b16 %v1963
      %v2060 = vunpack.c.l.b16 %v1964
      %v2061 = vunpack.c.l.b16 %v1965
      %v2062 = vunpack.c.l.b16 %v1966
      %v2063 = vunpack.c.l.b16 %v1967
      %v2064 = vunpack.c.l.b16 %v1968
      %v2065 = vunpack.c.l.b16 %v1969
      %v2066 = vunpack.c.l.b16 %v1970
      %v2067 = vunpack.c.l.b16 %v1971
      %v2068 = vunpack.c.l.b16 %v1972
      %v2069 = vunpack.c.l.b16 %v1973
      %v2070 = vunpack.c.l.b16 %v1974
      %v2071 = vunpack.c.l.b16 %v1975
      %v2072 = vunpack.c.l.b16 %v1976
      %v2073 = vunpack.c.l.b16 %v1977
      %v2074 = vpack.c.b16 %v2027, %v2026
      %v2075 = vpack.c.b16 %v2029, %v2028
      %v2076 = vpack.c.b16 %v2031, %v2030
      %v2077 = vpack.c.b16 %v2033, %v2032
      %v2078 = vpack.c.b16 %v2035, %v2034
      %v2079 = vpack.c.b16 %v2037, %v2036
      %v2080 = vpack.c.b16 %v2039, %v2038
      %v2081 = vpack.c.b16 %v2041, %v2040
      %v2082 = vpack.c.b16 %v2043, %v2042
      %v2083 = vpack.c.b16 %v2045, %v2044
      %v2084 = vpack.c.b16 %v2047, %v2046
      %v2085 = vpack.c.b16 %v2049, %v2048
      %v2086 = vpack.c.b16 %v2051, %v2050
      %v2087 = vpack.c.b16 %v2053, %v2052
      %v2088 = vpack.c.b16 %v2055, %v2054
      %v2089 = vpack.c.b16 %v2057, %v2056
      %v2090 = vpack.c.b16 %v2059, %v2058
      %v2091 = vpack.c.b16 %v2061, %v2060
      %v2092 = vpack.c.b16 %v2063, %v2062
      %v2093 = vpack.c.b16 %v2065, %v2064
      %v2094 = vpack.c.b16 %v2067, %v2066
      %v2095 = vpack.c.b16 %v2069, %v2068
      %v2096 = vpack.c.b16 %v2071, %v2070
      %v2097 = vpack.c.b16 %v2073, %v2072
      %2122 = vmatpush.bf16.msra.mxu0 %v2081
      %2123 = vmatpush.bf16.msra.mxu0 %v2080
      %2124 = vmatpush.bf16.msra.mxu0 %v2079
      %2125 = vmatpush.bf16.msra.mxu0 %v2078
      %2126 = vmatpush.bf16.msra.mxu0 %v2077
      %2127 = vmatpush.bf16.msra.mxu0 %v2076
      %2128 = vmatpush.bf16.msra.mxu0 %v2075
      %2129 = vmatpush.bf16.msra.mxu0 %v2074
      %2130 = vmatmul.bf16.gmra.mxu0 %v400
      %v2131 = vpop.f32.mrf.mxu0
      %v2132 = vadd.f32 0.0, %v2131
      %v2133 = vpop.f32.mrf.mxu0
      %v2134 = vadd.f32 0.0, %v2133
      %2135 = vmatmul.bf16.gmra.mxu0 %v401
      %v2136 = vpop.f32.mrf.mxu0
      %v2137 = vadd.f32 0.0, %v2136
      %v2138 = vpop.f32.mrf.mxu0
      %v2139 = vadd.f32 0.0, %v2138
      %2140 = vmatmul.bf16.gmra.mxu0 %v402
      %v2141 = vpop.f32.mrf.mxu0
      %v2142 = vadd.f32 0.0, %v2141
      %v2143 = vpop.f32.mrf.mxu0
      %v2144 = vadd.f32 0.0, %v2143
      %2145 = vmatmul.bf16.gmra.mxu0 %v403
      %v2146 = vpop.f32.mrf.mxu0
      %v2147 = vadd.f32 0.0, %v2146
      %v2148 = vpop.f32.mrf.mxu0
      %v2149 = vadd.f32 0.0, %v2148
      %2150 = vmatmul.bf16.gmra.mxu0 %v404
      %v2151 = vpop.f32.mrf.mxu0
      %v2152 = vadd.f32 0.0, %v2151
      %v2153 = vpop.f32.mrf.mxu0
      %v2154 = vadd.f32 0.0, %v2153
      %2155 = vmatmul.bf16.gmra.mxu0 %v405
      %v2156 = vpop.f32.mrf.mxu0
      %v2157 = vadd.f32 0.0, %v2156
      %v2158 = vpop.f32.mrf.mxu0
      %v2159 = vadd.f32 0.0, %v2158
      %2160 = vmatmul.bf16.gmra.mxu0 %v406
      %v2161 = vpop.f32.mrf.mxu0
      %v2162 = vadd.f32 0.0, %v2161
      %v2163 = vpop.f32.mrf.mxu0
      %v2164 = vadd.f32 0.0, %v2163
      %2165 = vmatmul.bf16.gmra.mxu0 %v407
      %v2166 = vpop.f32.mrf.mxu0
      %v2167 = vadd.f32 0.0, %v2166
      %v2168 = vpop.f32.mrf.mxu0
      %v2169 = vadd.f32 0.0, %v2168
      %2170 = vmatmul.bf16.gmra.mxu0 %v408
      %v2171 = vpop.f32.mrf.mxu0
      %v2172 = vadd.f32 0.0, %v2171
      %v2173 = vpop.f32.mrf.mxu0
      %v2174 = vadd.f32 0.0, %v2173
      %2175 = vmatmul.bf16.gmra.mxu0 %v409
      %v2176 = vpop.f32.mrf.mxu0
      %v2177 = vadd.f32 0.0, %v2176
      %v2178 = vpop.f32.mrf.mxu0
      %v2179 = vadd.f32 0.0, %v2178
      %2180 = vmatmul.bf16.gmra.mxu0 %v410
      %v2181 = vpop.f32.mrf.mxu0
      %v2182 = vadd.f32 0.0, %v2181
      %v2183 = vpop.f32.mrf.mxu0
      %v2184 = vadd.f32 0.0, %v2183
      %2185 = vmatmul.bf16.gmra.mxu0 %v411
      %v2186 = vpop.f32.mrf.mxu0
      %v2187 = vadd.f32 0.0, %v2186
      %v2188 = vpop.f32.mrf.mxu0
      %v2189 = vadd.f32 0.0, %v2188
      %2190 = vmatmul.bf16.gmra.mxu0 %v412
      %v2191 = vpop.f32.mrf.mxu0
      %v2192 = vadd.f32 0.0, %v2191
      %v2193 = vpop.f32.mrf.mxu0
      %v2194 = vadd.f32 0.0, %v2193
      %2195 = vmatmul.bf16.gmra.mxu0 %v413
      %v2196 = vpop.f32.mrf.mxu0
      %v2197 = vadd.f32 0.0, %v2196
      %v2198 = vpop.f32.mrf.mxu0
      %v2199 = vadd.f32 0.0, %v2198
      %2200 = vmatmul.bf16.gmra.mxu0 %v414
      %v2201 = vpop.f32.mrf.mxu0
      %v2202 = vadd.f32 0.0, %v2201
      %v2203 = vpop.f32.mrf.mxu0
      %v2204 = vadd.f32 0.0, %v2203
      %2205 = vmatmul.bf16.gmra.mxu0 %v415
      %v2206 = vpop.f32.mrf.mxu0
      %v2207 = vadd.f32 0.0, %v2206
      %v2208 = vpop.f32.mrf.mxu0
      %v2209 = vadd.f32 0.0, %v2208
      %2210 = vdwg.mxu0
      %2211 = vmatpush.bf16.msra.mxu0 %v2089
      %2212 = vmatpush.bf16.msra.mxu0 %v2088
      %2213 = vmatpush.bf16.msra.mxu0 %v2087
      %2214 = vmatpush.bf16.msra.mxu0 %v2086
      %2215 = vmatpush.bf16.msra.mxu0 %v2085
      %2216 = vmatpush.bf16.msra.mxu0 %v2084
      %2217 = vmatpush.bf16.msra.mxu0 %v2083
      %2218 = vmatpush.bf16.msra.mxu0 %v2082
      %2219 = vmatmul.bf16.gmra.mxu0 %v524
      %v2220 = vpop.f32.mrf.mxu0
      %v2221 = vadd.f32 %v2132, %v2220
      %v2222 = vpop.f32.mrf.mxu0
      %v2223 = vadd.f32 %v2134, %v2222
      %2224 = vmatmul.bf16.gmra.mxu0 %v536
      %v2225 = vpop.f32.mrf.mxu0
      %v2226 = vadd.f32 %v2137, %v2225
      %v2227 = vpop.f32.mrf.mxu0
      %v2228 = vadd.f32 %v2139, %v2227
      %2229 = vmatmul.bf16.gmra.mxu0 %v548
      %v2230 = vpop.f32.mrf.mxu0
      %v2231 = vadd.f32 %v2142, %v2230
      %v2232 = vpop.f32.mrf.mxu0
      %v2233 = vadd.f32 %v2144, %v2232
      %2234 = vmatmul.bf16.gmra.mxu0 %v560
      %v2235 = vpop.f32.mrf.mxu0
      %v2236 = vadd.f32 %v2147, %v2235
      %v2237 = vpop.f32.mrf.mxu0
      %v2238 = vadd.f32 %v2149, %v2237
      %2239 = vmatmul.bf16.gmra.mxu0 %v572
      %v2240 = vpop.f32.mrf.mxu0
      %v2241 = vadd.f32 %v2152, %v2240
      %v2242 = vpop.f32.mrf.mxu0
      %v2243 = vadd.f32 %v2154, %v2242
      %2244 = vmatmul.bf16.gmra.mxu0 %v584
      %v2245 = vpop.f32.mrf.mxu0
      %v2246 = vadd.f32 %v2157, %v2245
      %v2247 = vpop.f32.mrf.mxu0
      %v2248 = vadd.f32 %v2159, %v2247
      %2249 = vmatmul.bf16.gmra.mxu0 %v596
      %v2250 = vpop.f32.mrf.mxu0
      %v2251 = vadd.f32 %v2162, %v2250
      %v2252 = vpop.f32.mrf.mxu0
      %v2253 = vadd.f32 %v2164, %v2252
      %2254 = vmatmul.bf16.gmra.mxu0 %v608
      %v2255 = vpop.f32.mrf.mxu0
      %v2256 = vadd.f32 %v2167, %v2255
      %v2257 = vpop.f32.mrf.mxu0
      %v2258 = vadd.f32 %v2169, %v2257
      %2259 = vmatmul.bf16.gmra.mxu0 %v620
      %v2260 = vpop.f32.mrf.mxu0
      %v2261 = vadd.f32 %v2172, %v2260
      %v2262 = vpop.f32.mrf.mxu0
      %v2263 = vadd.f32 %v2174, %v2262
      %2264 = vmatmul.bf16.gmra.mxu0 %v632
      %v2265 = vpop.f32.mrf.mxu0
      %v2266 = vadd.f32 %v2177, %v2265
      %v2267 = vpop.f32.mrf.mxu0
      %v2268 = vadd.f32 %v2179, %v2267
      %2269 = vmatmul.bf16.gmra.mxu0 %v644
      %v2270 = vpop.f32.mrf.mxu0
      %v2271 = vadd.f32 %v2182, %v2270
      %v2272 = vpop.f32.mrf.mxu0
      %v2273 = vadd.f32 %v2184, %v2272
      %2274 = vmatmul.bf16.gmra.mxu0 %v656
      %v2275 = vpop.f32.mrf.mxu0
      %v2276 = vadd.f32 %v2187, %v2275
      %v2277 = vpop.f32.mrf.mxu0
      %v2278 = vadd.f32 %v2189, %v2277
      %2279 = vmatmul.bf16.gmra.mxu0 %v668
      %v2280 = vpop.f32.mrf.mxu0
      %v2281 = vadd.f32 %v2192, %v2280
      %v2282 = vpop.f32.mrf.mxu0
      %v2283 = vadd.f32 %v2194, %v2282
      %2284 = vmatmul.bf16.gmra.mxu0 %v680
      %v2285 = vpop.f32.mrf.mxu0
      %v2286 = vadd.f32 %v2197, %v2285
      %v2287 = vpop.f32.mrf.mxu0
      %v2288 = vadd.f32 %v2199, %v2287
      %2289 = vmatmul.bf16.gmra.mxu0 %v692
      %v2290 = vpop.f32.mrf.mxu0
      %v2291 = vadd.f32 %v2202, %v2290
      %v2292 = vpop.f32.mrf.mxu0
      %v2293 = vadd.f32 %v2204, %v2292
      %2294 = vmatmul.bf16.gmra.mxu0 %v704
      %v2295 = vpop.f32.mrf.mxu0
      %v2296 = vadd.f32 %v2207, %v2295
      %v2297 = vpop.f32.mrf.mxu0
      %v2298 = vadd.f32 %v2209, %v2297
      %2299 = vdwg.mxu0
      %2300 = vmatpush.bf16.msra.mxu0 %v2097
      %2301 = vmatpush.bf16.msra.mxu0 %v2096
      %2302 = vmatpush.bf16.msra.mxu0 %v2095
      %2303 = vmatpush.bf16.msra.mxu0 %v2094
      %2304 = vmatpush.bf16.msra.mxu0 %v2093
      %2305 = vmatpush.bf16.msra.mxu0 %v2092
      %2306 = vmatpush.bf16.msra.mxu0 %v2091
      %2307 = vmatpush.bf16.msra.mxu0 %v2090
      %2308 = vmatmul.bf16.gmra.mxu0 %v786
      %v2309 = vpop.f32.mrf.mxu0
      %v2310 = vadd.f32 %v2221, %v2309
      %v2311 = vpop.f32.mrf.mxu0
      %v2312 = vadd.f32 %v2223, %v2311
      %2313 = vmatmul.bf16.gmra.mxu0 %v789
      %v2314 = vpop.f32.mrf.mxu0
      %v2315 = vadd.f32 %v2226, %v2314
      %v2316 = vpop.f32.mrf.mxu0
      %v2317 = vadd.f32 %v2228, %v2316
      %2318 = vmatmul.bf16.gmra.mxu0 %v792
      %v2319 = vpop.f32.mrf.mxu0
      %v2320 = vadd.f32 %v2231, %v2319
      %v2321 = vpop.f32.mrf.mxu0
      %v2322 = vadd.f32 %v2233, %v2321
      %2323 = vmatmul.bf16.gmra.mxu0 %v795
      %v2324 = vpop.f32.mrf.mxu0
      %v2325 = vadd.f32 %v2236, %v2324
      %v2326 = vpop.f32.mrf.mxu0
      %v2327 = vadd.f32 %v2238, %v2326
      %2328 = vmatmul.bf16.gmra.mxu0 %v798
      %v2329 = vpop.f32.mrf.mxu0
      %v2330 = vadd.f32 %v2241, %v2329
      %v2331 = vpop.f32.mrf.mxu0
      %v2332 = vadd.f32 %v2243, %v2331
      %2333 = vmatmul.bf16.gmra.mxu0 %v801
      %v2334 = vpop.f32.mrf.mxu0
      %v2335 = vadd.f32 %v2246, %v2334
      %v2336 = vpop.f32.mrf.mxu0
      %v2337 = vadd.f32 %v2248, %v2336
      %2338 = vmatmul.bf16.gmra.mxu0 %v804
      %v2339 = vpop.f32.mrf.mxu0
      %v2340 = vadd.f32 %v2251, %v2339
      %v2341 = vpop.f32.mrf.mxu0
      %v2342 = vadd.f32 %v2253, %v2341
      %2343 = vmatmul.bf16.gmra.mxu0 %v807
      %v2344 = vpop.f32.mrf.mxu0
      %v2345 = vadd.f32 %v2256, %v2344
      %v2346 = vpop.f32.mrf.mxu0
      %v2347 = vadd.f32 %v2258, %v2346
      %2348 = vmatmul.bf16.gmra.mxu0 %v810
      %v2349 = vpop.f32.mrf.mxu0
      %v2350 = vadd.f32 %v2261, %v2349
      %v2351 = vpop.f32.mrf.mxu0
      %v2352 = vadd.f32 %v2263, %v2351
      %2353 = vmatmul.bf16.gmra.mxu0 %v813
      %v2354 = vpop.f32.mrf.mxu0
      %v2355 = vadd.f32 %v2266, %v2354
      %v2356 = vpop.f32.mrf.mxu0
      %v2357 = vadd.f32 %v2268, %v2356
      %2358 = vmatmul.bf16.gmra.mxu0 %v816
      %v2359 = vpop.f32.mrf.mxu0
      %v2360 = vadd.f32 %v2271, %v2359
      %v2361 = vpop.f32.mrf.mxu0
      %v2362 = vadd.f32 %v2273, %v2361
      %2363 = vmatmul.bf16.gmra.mxu0 %v819
      %v2364 = vpop.f32.mrf.mxu0
      %v2365 = vadd.f32 %v2276, %v2364
      %v2366 = vpop.f32.mrf.mxu0
      %v2367 = vadd.f32 %v2278, %v2366
      %2368 = vmatmul.bf16.gmra.mxu0 %v822
      %v2369 = vpop.f32.mrf.mxu0
      %v2370 = vadd.f32 %v2281, %v2369
      %v2371 = vpop.f32.mrf.mxu0
      %v2372 = vadd.f32 %v2283, %v2371
      %2373 = vmatmul.bf16.gmra.mxu0 %v825
      %v2374 = vpop.f32.mrf.mxu0
      %v2375 = vadd.f32 %v2286, %v2374
      %v2376 = vpop.f32.mrf.mxu0
      %v2377 = vadd.f32 %v2288, %v2376
      %2378 = vmatmul.bf16.gmra.mxu0 %v828
      %v2379 = vpop.f32.mrf.mxu0
      %v2380 = vadd.f32 %v2291, %v2379
      %v2381 = vpop.f32.mrf.mxu0
      %v2382 = vadd.f32 %v2293, %v2381
      %2383 = vmatmul.bf16.gmra.mxu0 %v831
      %v2384 = vpop.f32.mrf.mxu0
      %v2385 = vadd.f32 %v2296, %v2384
      %v2386 = vpop.f32.mrf.mxu0
      %v2387 = vadd.f32 %v2298, %v2386
      %2388 = vdwg.mxu0
      %v2389 = vadd.f32 %v1897, %v2310
      %v2390 = vadd.f32 %v1898, %v2312
      %v2391 = vadd.f32 %v1899, %v2315
      %v2392 = vadd.f32 %v1900, %v2317
      %v2393 = vadd.f32 %v1901, %v2320
      %v2394 = vadd.f32 %v1902, %v2322
      %v2395 = vadd.f32 %v1903, %v2325
      %v2396 = vadd.f32 %v1904, %v2327
      %v2397 = vadd.f32 %v1905, %v2330
      %v2398 = vadd.f32 %v1906, %v2332
      %v2399 = vadd.f32 %v1907, %v2335
      %v2400 = vadd.f32 %v1908, %v2337
      %v2401 = vadd.f32 %v1909, %v2340
      %v2402 = vadd.f32 %v1910, %v2342
      %v2403 = vadd.f32 %v1911, %v2345
      %v2404 = vadd.f32 %v1912, %v2347
      %v2405 = vadd.f32 %v1913, %v2350
      %v2406 = vadd.f32 %v1914, %v2352
      %v2407 = vadd.f32 %v1915, %v2355
      %v2408 = vadd.f32 %v1916, %v2357
      %v2409 = vadd.f32 %v1917, %v2360
      %v2410 = vadd.f32 %v1918, %v2362
      %v2411 = vadd.f32 %v1919, %v2365
      %v2412 = vadd.f32 %v1920, %v2367
      %v2413 = vadd.f32 %v1921, %v2370
      %v2414 = vadd.f32 %v1922, %v2372
      %v2415 = vadd.f32 %v1923, %v2375
      %v2416 = vadd.f32 %v1924, %v2377
      %v2417 = vadd.f32 %v1925, %v2380
      %v2418 = vadd.f32 %v1926, %v2382
      %v2419 = vadd.f32 %v1927, %v2385
      %v2420 = vadd.f32 %v1928, %v2387
      %2421 = vst [vmem:[%s240] sm:$0xff] %v2389
      %2422 = vst [vmem:[%s240 + $0x8] sm:$0xff] %v2390
      %2423 = vst [vmem:[%s240 + $0x10] sm:$0xff] %v2391
      %2424 = vst [vmem:[%s240 + $0x18] sm:$0xff] %v2392
      %2425 = vst [vmem:[%s240 + $0x20] sm:$0xff] %v2393
      %2426 = vst [vmem:[%s240 + $0x28] sm:$0xff] %v2394
      %2427 = vst [vmem:[%s240 + $0x30] sm:$0xff] %v2395
      %2428 = vst [vmem:[%s240 + $0x38] sm:$0xff] %v2396
      %2429 = vst [vmem:[%s240 + $0x40] sm:$0xff] %v2397
      %2430 = vst [vmem:[%s240 + $0x48] sm:$0xff] %v2398
      %2431 = vst [vmem:[%s240 + $0x50] sm:$0xff] %v2399
      %2432 = vst [vmem:[%s240 + $0x58] sm:$0xff] %v2400
      %2433 = vst [vmem:[%s240 + $0x60] sm:$0xff] %v2401
      %2434 = vst [vmem:[%s240 + $0x68] sm:$0xff] %v2402
      %2435 = vst [vmem:[%s240 + $0x70] sm:$0xff] %v2403
      %2436 = vst [vmem:[%s240 + $0x78] sm:$0xff] %v2404
      %2437 = vst [vmem:[%s240 + $0x80] sm:$0xff] %v2405
      %2438 = vst [vmem:[%s240 + $0x88] sm:$0xff] %v2406
      %2439 = vst [vmem:[%s240 + $0x90] sm:$0xff] %v2407
      %2440 = vst [vmem:[%s240 + $0x98] sm:$0xff] %v2408
      %2441 = vst [vmem:[%s240 + $0xa0] sm:$0xff] %v2409
      %2442 = vst [vmem:[%s240 + $0xa8] sm:$0xff] %v2410
      %2443 = vst [vmem:[%s240 + $0xb0] sm:$0xff] %v2411
      %2444 = vst [vmem:[%s240 + $0xb8] sm:$0xff] %v2412
      %2445 = vst [vmem:[%s240 + $0xc0] sm:$0xff] %v2413
      %2446 = vst [vmem:[%s240 + $0xc8] sm:$0xff] %v2414
      %2447 = vst [vmem:[%s240 + $0xd0] sm:$0xff] %v2415
      %2448 = vst [vmem:[%s240 + $0xd8] sm:$0xff] %v2416
      %2449 = vst [vmem:[%s240 + $0xe0] sm:$0xff] %v2417
      %2450 = vst [vmem:[%s240 + $0xe8] sm:$0xff] %v2418
      %2451 = vst [vmem:[%s240 + $0xf0] sm:$0xff] %v2419
      %2452 = vst [vmem:[%s240 + $0xf8] sm:$0xff] %v2420
      %v2453 = vld [vmem:[%s240] sm:$0xff]
      %v2454 = vld [vmem:[%s240 + $0x8] sm:$0xff]
      %v2455 = vld [vmem:[%s240 + $0x10] sm:$0xff]
      %v2456 = vld [vmem:[%s240 + $0x18] sm:$0xff]
      %v2457 = vld [vmem:[%s240 + $0x20] sm:$0xff]
      %v2458 = vld [vmem:[%s240 + $0x28] sm:$0xff]
      %v2459 = vld [vmem:[%s240 + $0x30] sm:$0xff]
      %v2460 = vld [vmem:[%s240 + $0x38] sm:$0xff]
      %v2461 = vld [vmem:[%s240 + $0x40] sm:$0xff]
      %v2462 = vld [vmem:[%s240 + $0x48] sm:$0xff]
      %v2463 = vld [vmem:[%s240 + $0x50] sm:$0xff]
      %v2464 = vld [vmem:[%s240 + $0x58] sm:$0xff]
      %v2465 = vld [vmem:[%s240 + $0x60] sm:$0xff]
      %v2466 = vld [vmem:[%s240 + $0x68] sm:$0xff]
      %v2467 = vld [vmem:[%s240 + $0x70] sm:$0xff]
      %v2468 = vld [vmem:[%s240 + $0x78] sm:$0xff]
      %v2469 = vld [vmem:[%s240 + $0x80] sm:$0xff]
      %v2470 = vld [vmem:[%s240 + $0x88] sm:$0xff]
      %v2471 = vld [vmem:[%s240 + $0x90] sm:$0xff]
      %v2472 = vld [vmem:[%s240 + $0x98] sm:$0xff]
      %v2473 = vld [vmem:[%s240 + $0xa0] sm:$0xff]
      %v2474 = vld [vmem:[%s240 + $0xa8] sm:$0xff]
      %v2475 = vld [vmem:[%s240 + $0xb0] sm:$0xff]
      %v2476 = vld [vmem:[%s240 + $0xb8] sm:$0xff]
      %v2477 = vld [vmem:[%s240 + $0xc0] sm:$0xff]
      %v2478 = vld [vmem:[%s240 + $0xc8] sm:$0xff]
      %v2479 = vld [vmem:[%s240 + $0xd0] sm:$0xff]
      %v2480 = vld [vmem:[%s240 + $0xd8] sm:$0xff]
      %v2481 = vld [vmem:[%s240 + $0xe0] sm:$0xff]
      %v2482 = vld [vmem:[%s240 + $0xe8] sm:$0xff]
      %v2483 = vld [vmem:[%s240 + $0xf0] sm:$0xff]
      %v2484 = vld [vmem:[%s240 + $0xf8] sm:$0xff]
      %v2485 = vadd.f32 %v2453, %v2454
      %v2486 = vadd.f32 %v2485, %v2455
      %v2487 = vadd.f32 %v2486, %v2456
      %v2488 = vadd.f32 %v2487, %v2457
      %v2489 = vadd.f32 %v2488, %v2458
      %v2490 = vadd.f32 %v2489, %v2459
      %v2491 = vadd.f32 %v2490, %v2460
      %v2492 = vadd.f32 %v2491, %v2461
      %v2493 = vadd.f32 %v2492, %v2462
      %v2494 = vadd.f32 %v2493, %v2463
      %v2495 = vadd.f32 %v2494, %v2464
      %v2496 = vadd.f32 %v2495, %v2465
      %v2497 = vadd.f32 %v2496, %v2466
      %v2498 = vadd.f32 %v2497, %v2467
      %v2499 = vadd.f32 %v2498, %v2468
      %v2500 = vadd.f32 %v2499, %v2469
      %v2501 = vadd.f32 %v2500, %v2470
      %v2502 = vadd.f32 %v2501, %v2471
      %v2503 = vadd.f32 %v2502, %v2472
      %v2504 = vadd.f32 %v2503, %v2473
      %v2505 = vadd.f32 %v2504, %v2474
      %v2506 = vadd.f32 %v2505, %v2475
      %v2507 = vadd.f32 %v2506, %v2476
      %v2508 = vadd.f32 %v2507, %v2477
      %v2509 = vadd.f32 %v2508, %v2478
      %v2510 = vadd.f32 %v2509, %v2479
      %v2511 = vadd.f32 %v2510, %v2480
      %v2512 = vadd.f32 %v2511, %v2481
      %v2513 = vadd.f32 %v2512, %v2482
      %v2514 = vadd.f32 %v2513, %v2483
      %v2515 = vadd.f32 %v2514, %v2484
      %v2516 = vrot.slane %v2515, 4
      %v2517 = vadd.f32 %v2515, %v2516
      %v2518 = vrot.slane %v2517, 2
      %v2519 = vadd.f32 %v2517, %v2518
      %v2520 = vrot.slane %v2519, 1
      %v2521 = vadd.f32 %v2519, %v2520
      %v2522 = vmul.f32 %v2521, 0.00390625
      %v2523 = vsub.f32 %v2453, %v2522
      %v2524 = vsub.f32 %v2454, %v2522
      %v2525 = vsub.f32 %v2455, %v2522
      %v2526 = vsub.f32 %v2456, %v2522
      %v2527 = vsub.f32 %v2457, %v2522
      %v2528 = vsub.f32 %v2458, %v2522
      %v2529 = vsub.f32 %v2459, %v2522
      %v2530 = vsub.f32 %v2460, %v2522
      %v2531 = vsub.f32 %v2461, %v2522
      %v2532 = vsub.f32 %v2462, %v2522
      %v2533 = vsub.f32 %v2463, %v2522
      %v2534 = vsub.f32 %v2464, %v2522
      %v2535 = vsub.f32 %v2465, %v2522
      %v2536 = vsub.f32 %v2466, %v2522
      %v2537 = vsub.f32 %v2467, %v2522
      %v2538 = vsub.f32 %v2468, %v2522
      %v2539 = vsub.f32 %v2469, %v2522
      %v2540 = vsub.f32 %v2470, %v2522
      %v2541 = vsub.f32 %v2471, %v2522
      %v2542 = vsub.f32 %v2472, %v2522
      %v2543 = vsub.f32 %v2473, %v2522
      %v2544 = vsub.f32 %v2474, %v2522
      %v2545 = vsub.f32 %v2475, %v2522
      %v2546 = vsub.f32 %v2476, %v2522
      %v2547 = vsub.f32 %v2477, %v2522
      %v2548 = vsub.f32 %v2478, %v2522
      %v2549 = vsub.f32 %v2479, %v2522
      %v2550 = vsub.f32 %v2480, %v2522
      %v2551 = vsub.f32 %v2481, %v2522
      %v2552 = vsub.f32 %v2482, %v2522
      %v2553 = vsub.f32 %v2483, %v2522
      %v2554 = vsub.f32 %v2484, %v2522
      %2555 = vst [vmem:[%s247] sm:$0x1] %v2521
      %v2556 = vmul.f32 %v2523, %v2523
      %v2557 = vmul.f32 %v2524, %v2524
      %v2558 = vmul.f32 %v2525, %v2525
      %v2559 = vmul.f32 %v2526, %v2526
      %v2560 = vmul.f32 %v2527, %v2527
      %v2561 = vmul.f32 %v2528, %v2528
      %v2562 = vmul.f32 %v2529, %v2529
      %v2563 = vmul.f32 %v2530, %v2530
      %v2564 = vmul.f32 %v2531, %v2531
      %v2565 = vmul.f32 %v2532, %v2532
      %v2566 = vmul.f32 %v2533, %v2533
      %v2567 = vmul.f32 %v2534, %v2534
      %v2568 = vmul.f32 %v2535, %v2535
      %v2569 = vmul.f32 %v2536, %v2536
      %v2570 = vmul.f32 %v2537, %v2537
      %v2571 = vmul.f32 %v2538, %v2538
      %v2572 = vmul.f32 %v2539, %v2539
      %v2573 = vmul.f32 %v2540, %v2540
      %v2574 = vmul.f32 %v2541, %v2541
      %v2575 = vmul.f32 %v2542, %v2542
      %v2576 = vmul.f32 %v2543, %v2543
      %v2577 = vmul.f32 %v2544, %v2544
      %v2578 = vmul.f32 %v2545, %v2545
      %v2579 = vmul.f32 %v2546, %v2546
      %v2580 = vmul.f32 %v2547, %v2547
      %v2581 = vmul.f32 %v2548, %v2548
      %v2582 = vmul.f32 %v2549, %v2549
      %v2583 = vmul.f32 %v2550, %v2550
      %v2584 = vmul.f32 %v2551, %v2551
      %v2585 = vmul.f32 %v2552, %v2552
      %v2586 = vmul.f32 %v2553, %v2553
      %v2587 = vmul.f32 %v2554, %v2554
      %v2588 = vadd.f32 %v2556, %v2557
      %v2589 = vadd.f32 %v2588, %v2558
      %v2590 = vadd.f32 %v2589, %v2559
      %v2591 = vadd.f32 %v2590, %v2560
      %v2592 = vadd.f32 %v2591, %v2561
      %v2593 = vadd.f32 %v2592, %v2562
      %v2594 = vadd.f32 %v2593, %v2563
      %v2595 = vadd.f32 %v2594, %v2564
      %v2596 = vadd.f32 %v2595, %v2565
      %v2597 = vadd.f32 %v2596, %v2566
      %v2598 = vadd.f32 %v2597, %v2567
      %v2599 = vadd.f32 %v2598, %v2568
      %v2600 = vadd.f32 %v2599, %v2569
      %v2601 = vadd.f32 %v2600, %v2570
      %v2602 = vadd.f32 %v2601, %v2571
      %v2603 = vadd.f32 %v2602, %v2572
      %v2604 = vadd.f32 %v2603, %v2573
      %v2605 = vadd.f32 %v2604, %v2574
      %v2606 = vadd.f32 %v2605, %v2575
      %v2607 = vadd.f32 %v2606, %v2576
      %v2608 = vadd.f32 %v2607, %v2577
      %v2609 = vadd.f32 %v2608, %v2578
      %v2610 = vadd.f32 %v2609, %v2579
      %v2611 = vadd.f32 %v2610, %v2580
      %v2612 = vadd.f32 %v2611, %v2581
      %v2613 = vadd.f32 %v2612, %v2582
      %v2614 = vadd.f32 %v2613, %v2583
      %v2615 = vadd.f32 %v2614, %v2584
      %v2616 = vadd.f32 %v2615, %v2585
      %v2617 = vadd.f32 %v2616, %v2586
      %v2618 = vadd.f32 %v2617, %v2587
      %v2619 = vrot.slane %v2618, 4
      %v2620 = vadd.f32 %v2618, %v2619
      %v2621 = vrot.slane %v2620, 2
      %v2622 = vadd.f32 %v2620, %v2621
      %v2623 = vrot.slane %v2622, 1
      %v2624 = vadd.f32 %v2622, %v2623
      %2625 = vst [vmem:[%s253] sm:$0x1] %v2624
      %s2626 = smul.u32 32, %s21
      %p2627 = scmp.lt.s32.totalorder %s20, 1
      %s2628 = scalar_select %p2627, %s20, 1
      %p2629 = scmp.lt.s32.totalorder %s2626, 31
      %s2630 = scalar_select %p2629, %s2626, 31
      %s2631 = smul.addr %s2628, 32
      %s2632 = sadd.s32 %s2630, %s2631
      %s2633 = smul.addr %s2632, 8
      %s2634 = scalar_lea.vmem %s2, %s2633
      %p2635 = scmp.lt.s32.totalorder %s20, 1
      %s2636 = scalar_select %p2635, %s20, 1
      %p2637 = scmp.lt.s32.totalorder %s21, 0
      %s2638 = scalar_select %p2637, %s21, 0
      %s2639 = sadd.s32 %s2638, %s2636
      %s2640 = scalar_lea.vmem %s3, %s2639
      %p2641 = scmp.lt.s32.totalorder %s20, 1
      %s2642 = scalar_select %p2641, %s20, 1
      %p2643 = scmp.lt.s32.totalorder %s21, 0
      %s2644 = scalar_select %p2643, %s21, 0
      %s2645 = sadd.s32 %s2644, %s2642
      %s2646 = scalar_lea.vmem %s4, %s2645
      // Predicated region
      $region29: #{resblock_forward.2} parent=27 // pred_check
        %p2647 = pneg %p95
      $region30: #{resblock_forward.2} parent=27 // pred_check_branch
        %2649 = sbr.rel (%p2647) target = $region32
      $region31: #{resblock_forward.2} parent=27 // pred_region
        %s2650 = smul.u32 32, %s21
      $region32: #{resblock_forward.2} parent=27 // pred_fallthru
        _
      // Predicated region
      $region33: #{resblock_forward.2} parent=27 // pred_check
        %p2651 = pneg %p123
      $region34: #{resblock_forward.2} parent=27 // pred_check_branch
        %2653 = sbr.rel (%p2651) target = $region36
      $region35: #{resblock_forward.2} parent=27 // pred_region
        _
      $region36: #{resblock_forward.2} parent=27 // pred_fallthru
        _
      // Predicated region
      $region37: #{resblock_forward.2} parent=27 // pred_check
        %p2654 = pneg %p151
      $region38: #{resblock_forward.2} parent=27 // pred_check_branch
        %2656 = sbr.rel (%p2654) target = $region40
      $region39: #{resblock_forward.2} parent=27 // pred_region
        _
      $region40: #{resblock_forward.2} parent=27 // pred_fallthru
        _
    $region28: #{resblock_forward.2} parent=5 // pred_fallthru
      _
    %p2657 = scmp.le.s32.totalorder 2, %s11
    // Predicated region
    $region41: #{resblock_forward.2} parent=5 // pred_check
      %p2658 = pneg %p2657
    $region42: #{resblock_forward.2} parent=5 // pred_check_branch
      %2660 = sbr.rel (%p2658) target = $region44
    $region43: #{resblock_forward.2} parent=5 // pred_region
      %s2661 = ssub.s32 %s11, 2
      // Predicated region
      $region45: #{resblock_forward.2} parent=43 // pred_check
        %p2662 = pneg %p101
      $region46: #{resblock_forward.2} parent=43 // pred_check_branch
        %2664 = sbr.rel (%p2662) target = $region48
      $region47: #{resblock_forward.2} parent=43 // pred_region
        %s2665 = smul.u32 32, %s23
        %p2666 = scmp.lt.s32.totalorder %s22, 1
        %s2667 = scalar_select %p2666, %s22, 1
        %p2668 = scmp.lt.s32.totalorder %s2665, 31
        %s2669 = scalar_select %p2668, %s2665, 31
        %s2670 = smul.addr %s2667, 32
        %s2671 = sadd.s32 %s2669, %s2670
        %s2672 = smul.addr %s2671, 8
        %s2673 = scalar_lea.vmem %s2, %s2672
      $region48: #{resblock_forward.2} parent=43 // pred_fallthru
        _
      // Predicated region
      $region49: #{resblock_forward.2} parent=43 // pred_check
        %p2674 = pneg %p129
      $region50: #{resblock_forward.2} parent=43 // pred_check_branch
        %2676 = sbr.rel (%p2674) target = $region52
      $region51: #{resblock_forward.2} parent=43 // pred_region
        %p2677 = scmp.lt.s32.totalorder %s22, 1
        %s2678 = scalar_select %p2677, %s22, 1
        %p2679 = scmp.lt.s32.totalorder %s23, 0
        %s2680 = scalar_select %p2679, %s23, 0
        %s2681 = sadd.s32 %s2680, %s2678
        %s2682 = scalar_lea.vmem %s3, %s2681
      $region52: #{resblock_forward.2} parent=43 // pred_fallthru
        _
      // Predicated region
      $region53: #{resblock_forward.2} parent=43 // pred_check
        %p2683 = pneg %p157
      $region54: #{resblock_forward.2} parent=43 // pred_check_branch
        %2685 = sbr.rel (%p2683) target = $region56
      $region55: #{resblock_forward.2} parent=43 // pred_region
        %p2686 = scmp.lt.s32.totalorder %s22, 1
        %s2687 = scalar_select %p2686, %s22, 1
        %p2688 = scmp.lt.s32.totalorder %s23, 0
        %s2689 = scalar_select %p2688, %s23, 0
        %s2690 = sadd.s32 %s2689, %s2687
        %s2691 = scalar_lea.vmem %s4, %s2690
      $region56: #{resblock_forward.2} parent=43 // pred_fallthru
        _
    $region44: #{resblock_forward.2} parent=5 // pred_fallthru
      _
  $region6: #{resblock_forward.2} parent=0 // loop_footer
    %s15 = sadd.s32 1, %s11
  $region7: #{resblock_forward.2} parent=0 // loop_footer_branch
    %10 = sbr.rel target = $region3
  $region8: #{resblock_forward.2} parent=0 // loop_exit
    _

</llo_original>
